<compile_context>
chip_gen: v7x
topology: tpu7x:2x2x1
jax: 0.10.0
libtpu: 0.0.40
codegen_flags: <defaults>
</compile_context>

<pallas_src>
import math
from functools import partial

import jax
import jax.numpy as jnp
from jax.experimental import pallas as pl
from jax.experimental.pallas import tpu as pltpu

EPS = 1e-6


# ----------------------------- in-kernel building blocks -----------------------------

def _layernorm(x):
    # torch.std is unbiased (ddof=1); alpha=1 / bias=0 constants dropped.
    mean = jnp.mean(x, axis=-1, keepdims=True)
    diff = x - mean
    var = jnp.sum(diff * diff, axis=-1, keepdims=True) / (x.shape[-1] - 1)
    return diff / (jnp.sqrt(var) + EPS)


def _mha_core(q, k, v, wo, bo, attn_ref, *, H, d_k):
    """q, k, v: (S, H*d_k). No mask (per-batch grid).  Head outputs are written
    into a lane-contiguous (S, D) scratch slab, then ONE full-K GEMM against wo
    (same concat order as the PyTorch reference)."""
    # TODO(synk): at real d_k (>=64) / long S, switch to a head-major batched
    # dot_general + flash-style online softmax over key tiles; static per-head
    # slices are kept here because d_k=8 << 128 lanes and they lower robustly.
    inv_sqrt_dk = 1.0 / math.sqrt(d_k)
    for h in range(H):
        sl = slice(h * d_k, (h + 1) * d_k)
        s = jnp.einsum("nd,md->nm", q[:, sl], k[:, sl],
                       preferred_element_type=jnp.float32) * inv_sqrt_dk
        s = s - jnp.max(s, axis=-1, keepdims=True)        # stable softmax (== torch)
        p = jnp.exp(s)
        p = p / jnp.sum(p, axis=-1, keepdims=True)
        attn_ref[:, sl] = jnp.dot(p, v[:, sl], preferred_element_type=jnp.float32)
    return jnp.dot(attn_ref[...], wo, preferred_element_type=jnp.float32) + bo


def _self_attn(x, wqkv, bqkv, wo, bo, attn_ref, *, H, d_k, D):
    # Fused QKV projection: one (S, D) @ (D, 3D) matmul.
    qkv = jnp.dot(x, wqkv, preferred_element_type=jnp.float32) + bqkv
    return _mha_core(qkv[:, :D], qkv[:, D:2 * D], qkv[:, 2 * D:],
                     wo, bo, attn_ref, H=H, d_k=d_k)


def _cross_attn(xq, xkv, wq, bq, wkv, bkv, wo, bo, attn_ref, *, H, d_k, D):
    q = jnp.dot(xq, wq, preferred_element_type=jnp.float32) + bq
    kv = jnp.dot(xkv, wkv, preferred_element_type=jnp.float32) + bkv
    return _mha_core(q, kv[:, :D], kv[:, D:], wo, bo, attn_ref, H=H, d_k=d_k)


def _ffn(x, w1, b1, w2, b2):
    h = jnp.dot(x, w1, preferred_element_type=jnp.float32) + b1
    h = jnp.maximum(h, 0.0)                                          # relu
    return jnp.dot(h, w2, preferred_element_type=jnp.float32) + b2


# ----------------------------- the fused kernel -----------------------------

def _gridformer_kernel(x_ref, pe_ref, w_emb_ref, b_emb_ref,
                       e_wqkv, e_bqkv, e_wo, e_bo, e_w1, e_b1, e_w2, e_b2,
                       d_wqkv, d_bqkv, d_wos, d_bos,
                       d_wq, d_bq, d_wkv, d_bkv, d_woc, d_boc,
                       d_w1, d_b1, d_w2, d_b2,
                       w_proj, b_proj,
                       out_ref,
                       mem_ref, xs_ref, attn_ref,
                       *, H, D, scale):
    d_k = D // H
    l = pl.program_id(1)
    n_dec = pl.num_programs(1)

    @pl.when(l == 0)
    def _():
        # fused src|tgt embedding (+ positional encoding); scale == sqrt(d_model)
        emb = jnp.dot(x_ref[...], w_emb_ref[...],
                      preferred_element_type=jnp.float32) + b_emb_ref[...]   # (S, 2D)
        pe = pe_ref[...]
        src = emb[:, :D] * scale + pe
        tgt = emb[:, D:] * scale + pe

        # ---- Encoder: reference Encoder.forward returns inside its loop -> layer 0 only.
        x = src
        z = _layernorm(x)
        x = x + _self_attn(z, e_wqkv[...], e_bqkv[...], e_wo[...], e_bo[...],
                           attn_ref, H=H, d_k=d_k, D=D)
        z = _layernorm(x)
        x = x + _ffn(z, e_w1[...], e_b1[...], e_w2[...], e_b2[...])
        mem_ref[...] = _layernorm(x)          # encoder memory, resident across layers
        xs_ref[...] = tgt                     # decoder residual stream init

    # ---- Decoder layer `l` (weights streamed along the layer grid axis).
    x = xs_ref[...]
    memory = mem_ref[...]
    z = _layernorm(x)
    x = x + _self_attn(z, d_wqkv[...], d_bqkv[...], d_wos[...], d_bos[...],
                       attn_ref, H=H, d_k=d_k, D=D)
    z = _layernorm(x)
    x = x + _cross_attn(z, memory, d_wq[...], d_bq[...], d_wkv[...], d_bkv[...],
                        d_woc[...], d_boc[...], attn_ref, H=H, d_k=d_k, D=D)
    z = _layernorm(x)
    x = x + _ffn(z, d_w1[...], d_b1[...], d_w2[...], d_b2[...])
    xs_ref[...] = x

    @pl.when(l == n_dec - 1)
    def _():
        # final decoder norm + lane-dense padded projection [obs | reward | done | 0...]
        y = _layernorm(xs_ref[...])
        out_ref[...] = jnp.dot(y, w_proj[...],
                               preferred_element_type=jnp.float32) + b_proj[...]


# ----------------------------- wrapper -----------------------------

def gridformer_forward(params, obs, action, n_heads):
    B, S, obs_dim = obs.shape
    act_dim = action.shape[-1]
    in_dim = obs_dim + act_dim
    D = params["src_embed"]["w"].shape[1]
    d_ff = params["decoder_layers"][0]["ffn"]["w1"].shape[1]
    n_dec = len(params["decoder_layers"])
    out_width = obs_dim + 2
    out_pad = 128                        # lane-dense output (unmasked vst), sliced below
    scale = math.sqrt(D)
    f32 = jnp.float32

    x_in = jnp.concatenate([obs, action], axis=-1)          # (B, S, in_dim)
    pe = params["pe"][:S]                                   # (S, D), passed once

    w_emb = jnp.concatenate([params["src_embed"]["w"], params["tgt_embed"]["w"]], axis=1)
    b_emb = jnp.concatenate([params["src_embed"]["b"], params["tgt_embed"]["b"]], axis=1)

    enc0 = params["encoder_layers"][0]   # only layer 0 ever runs (reference bug)
    e_sa, e_ff = enc0["self_attn"], enc0["ffn"]
    e_wqkv = jnp.concatenate([e_sa["wq"], e_sa["wk"], e_sa["wv"]], axis=1)
    e_bqkv = jnp.concatenate([e_sa["bq"], e_sa["bk"], e_sa["bv"]], axis=1)

    def stack(fn):
        return jnp.stack([fn(lp) for lp in params["decoder_layers"]], axis=0)

    d_wqkv = stack(lambda lp: jnp.concatenate(
        [lp["self_attn"]["wq"], lp["self_attn"]["wk"], lp["self_attn"]["wv"]], axis=1))
    d_bqkv = stack(lambda lp: jnp.concatenate(
        [lp["self_attn"]["bq"], lp["self_attn"]["bk"], lp["self_attn"]["bv"]], axis=1))
    d_wos = stack(lambda lp: lp["self_attn"]["wo"])
    d_bos = stack(lambda lp: lp["self_attn"]["bo"])
    d_wq = stack(lambda lp: lp["cross_attn"]["wq"])
    d_bq = stack(lambda lp: lp["cross_attn"]["bq"])
    d_wkv = stack(lambda lp: jnp.concatenate(
        [lp["cross_attn"]["wk"], lp["cross_attn"]["wv"]], axis=1))
    d_bkv = stack(lambda lp: jnp.concatenate(
        [lp["cross_attn"]["bk"], lp["cross_attn"]["bv"]], axis=1))
    d_woc = stack(lambda lp: lp["cross_attn"]["wo"])
    d_boc = stack(lambda lp: lp["cross_attn"]["bo"])
    d_w1 = stack(lambda lp: lp["ffn"]["w1"])
    d_b1 = stack(lambda lp: lp["ffn"]["b1"])
    d_w2 = stack(lambda lp: lp["ffn"]["w2"])
    d_b2 = stack(lambda lp: lp["ffn"]["b2"])

    w_proj = jnp.concatenate(
        [params["proj"]["w_obs"], params["proj"]["w_r"], params["proj"]["w_d"],
         jnp.zeros((D, out_pad - out_width), f32)], axis=1)
    b_proj = jnp.concatenate(
        [params["proj"]["b_obs"], params["proj"]["b_r"], params["proj"]["b_d"],
         jnp.zeros((1, out_pad - out_width), f32)], axis=1)

    inputs = [x_in, pe, w_emb, b_emb,
              e_wqkv, e_bqkv, e_sa["wo"], e_sa["bo"],
              e_ff["w1"], e_ff["b1"], e_ff["w2"], e_ff["b2"],
              d_wqkv, d_bqkv, d_wos, d_bos,
              d_wq, d_bq, d_wkv, d_bkv, d_woc, d_boc,
              d_w1, d_b1, d_w2, d_b2,
              w_proj, b_proj]

    # --- BlockSpecs: batch-sliced input, shared weights, per-layer streamed weights ---
    def shared(a):
        return pl.BlockSpec(a.shape, lambda b, l, _nd=a.ndim: (0,) * _nd)

    def per_layer(a):   # stacked (n_dec, ...) decoder weights, streamed along `l`
        return pl.BlockSpec((None,) + a.shape[1:],
                            lambda b, l, _nd=a.ndim: (l,) + (0,) * (_nd - 1))

    in_specs = [pl.BlockSpec((None, S, in_dim), lambda b, l: (b, 0, 0))]   # x_in
    in_specs += [shared(a) for a in inputs[1:12]]
    in_specs += [per_layer(a) for a in inputs[12:26]]
    in_specs += [shared(a) for a in inputs[26:]]
    out_specs = pl.BlockSpec((None, S, out_pad), lambda b, l: (b, 0, 0))

    grid_spec = pltpu.PrefetchScalarGridSpec(
        num_scalar_prefetch=0,
        grid=(B, n_dec),
        in_specs=in_specs,
        out_specs=out_specs,
        scratch_shapes=[pltpu.VMEM((S, D), f32),     # encoder memory
                        pltpu.VMEM((S, D), f32),     # decoder residual stream
                        pltpu.VMEM((S, D), f32)])    # per-head attention slab

    # Advisory cost estimate for XLA scheduling around the fused call.
    attn_core = 4 * S * S * D + 2 * S * D * D
    flops_b = 2 * S * in_dim * 2 * D
    flops_b += 2 * S * D * 3 * D + attn_core + 4 * S * D * d_ff             # encoder
    flops_b += n_dec * (2 * S * D * 3 * D + attn_core                       # dec self
                        + 2 * S * D * D + 2 * S * D * 2 * D + attn_core     # dec cross
                        + 4 * S * D * d_ff)                                 # dec ffn
    flops_b += 2 * S * D * out_pad
    flops = B * flops_b
    transc = B * ((1 + 2 * n_dec) * n_heads * S * S + (5 + 3 * n_dec) * S)
    bytes_acc = (sum(int(a.size) * 4 for a in inputs)
                 + (B - 1) * sum(int(a.size) * 4 for a in inputs[12:26])    # layers re-streamed per batch
                 + B * S * out_pad * 4)

    # VMEM budget derived from actual per-step residency (x2 double-buffering +
    # headroom), capped at 64 MiB so the same budget compiles on v7x.
    resident_elems = (S * in_dim
                      + sum(int(a.size) for a in inputs[1:12])
                      + sum(int(a.size) // n_dec for a in inputs[12:26])
                      + sum(int(a.size) for a in inputs[26:])
                      + S * out_pad + 3 * S * D)
    vmem_limit = int(min(64 * 2 ** 20, max(4 * 4 * resident_elems, 16 * 2 ** 20)))

    out = pl.pallas_call(
        partial(_gridformer_kernel, H=n_heads, D=D, scale=scale),
        out_shape=jax.ShapeDtypeStruct((B, S, out_pad), f32),
        grid_spec=grid_spec,
        cost_estimate=pl.CostEstimate(flops=int(flops), transcendentals=int(transc),
                                      bytes_accessed=int(bytes_acc)),
        compiler_params=pltpu.CompilerParams(
            dimension_semantics=("parallel", "arbitrary"),
            vmem_limit_bytes=vmem_limit),
    )(*inputs)

    next_obs = out[..., :obs_dim]
    reward = out[..., obs_dim]
    done = jax.nn.sigmoid(out[..., obs_dim + 1])
    return next_obs, reward, done


# ----------------------------- deterministic init -----------------------------

def _xavier(key, shape):
    fan_in, fan_out = shape
    a = math.sqrt(6.0 / (fan_in + fan_out))
    return jax.random.uniform(key, shape, jnp.float32, -a, a)


def _linear(key, d_in, d_out):
    return {"w": _xavier(key, (d_in, d_out)),
            "b": jnp.zeros((1, d_out), jnp.float32)}


def _attn_params(key, d_model):
    ks = jax.random.split(key, 4)
    return {"wq": _xavier(ks[0], (d_model, d_model)),
            "wk": _xavier(ks[1], (d_model, d_model)),
            "wv": _xavier(ks[2], (d_model, d_model)),
            "wo": _xavier(ks[3], (d_model, d_model)),
            "bq": jnp.zeros((1, d_model), jnp.float32),
            "bk": jnp.zeros((1, d_model), jnp.float32),
            "bv": jnp.zeros((1, d_model), jnp.float32),
            "bo": jnp.zeros((1, d_model), jnp.float32)}


def _ffn_params(key, d_model, d_ff):
    k1, k2 = jax.random.split(key)
    return {"w1": _xavier(k1, (d_model, d_ff)),
            "b1": jnp.zeros((1, d_ff), jnp.float32),
            "w2": _xavier(k2, (d_ff, d_model)),
            "b2": jnp.zeros((1, d_model), jnp.float32)}


def make_positional_encoding(seq_len, d_model):
    position = jnp.arange(seq_len, dtype=jnp.float32)[:, None]
    div_term = jnp.exp(jnp.arange(0, d_model, 2, dtype=jnp.float32)
                       * (-math.log(10000.0) / d_model))
    pe = jnp.zeros((seq_len, d_model), jnp.float32)
    pe = pe.at[:, 0::2].set(jnp.sin(position * div_term))
    pe = pe.at[:, 1::2].set(jnp.cos(position * div_term))
    return pe


def init_params(key, obs_dim, action_dim, seq_len, d_model, n_layers, d_ff):
    in_dim = obs_dim + action_dim
    keys = jax.random.split(key, 6 + 2 * n_layers)
    se = _linear(keys[0], in_dim, d_model)
    te = _linear(keys[1], in_dim, d_model)

    enc_layers = []
    for li in range(n_layers):
        ka, kf = jax.random.split(keys[2 + li])
        enc_layers.append({"self_attn": _attn_params(ka, d_model),
                           "ffn": _ffn_params(kf, d_model, d_ff)})

    dec_layers = []
    for li in range(n_layers):
        ka, kc, kf = jax.random.split(keys[2 + n_layers + li], 3)
        dec_layers.append({"self_attn": _attn_params(ka, d_model),
                           "cross_attn": _attn_params(kc, d_model),
                           "ffn": _ffn_params(kf, d_model, d_ff)})

    kpo, kpr, kpd = jax.random.split(keys[2 + 2 * n_layers], 3)
    proj = {"w_obs": _xavier(kpo, (d_model, obs_dim)),
            "b_obs": jnp.zeros((1, obs_dim), jnp.float32),
            "w_r": _xavier(kpr, (d_model, 1)),
            "b_r": jnp.zeros((1, 1), jnp.float32),
            "w_d": _xavier(kpd, (d_model, 1)),
            "b_d": jnp.zeros((1, 1), jnp.float32)}

    return {"src_embed": se, "tgt_embed": te,
            "pe": make_positional_encoding(seq_len, d_model),
            "encoder_layers": enc_layers, "decoder_layers": dec_layers,
            "proj": proj}


# ----------------------------- main -----------------------------

if __name__ == "__main__":
    OBS_DIM, ACT_DIM = 6, 2
    SEQ_LEN = 8
    D_MODEL = 32
    N_LAYERS = 2
    N_HEADS = 4
    D_FF = 64
    BATCH = 2

    key = jax.random.PRNGKey(0)
    kp, ko, ka = jax.random.split(key, 3)
    params = init_params(kp, OBS_DIM, ACT_DIM, SEQ_LEN, D_MODEL, N_LAYERS, D_FF)

    obs = jax.random.normal(ko, (BATCH, SEQ_LEN, OBS_DIM), jnp.float32)
    action = jax.random.normal(ka, (BATCH, SEQ_LEN, ACT_DIM), jnp.float32)

    fwd = jax.jit(gridformer_forward, static_argnames=("n_heads",))
    next_obs, reward, done = fwd(params, obs, action, n_heads=N_HEADS)
    jax.block_until_ready((next_obs, reward, done))

    assert next_obs.shape == (BATCH, SEQ_LEN, OBS_DIM)
    assert reward.shape == (BATCH, SEQ_LEN)
    assert done.shape == (BATCH, SEQ_LEN)
    assert bool(jnp.all(jnp.isfinite(next_obs)))
    assert bool(jnp.all((done >= 0.0) & (done <= 1.0)))
    print("KERNEL_OK")
</pallas_src>

<mosaic_0001>
module attributes {stable_mosaic.version = 11 : i64} {
  func.func @_gridformer_kernel(%arg0: i32, %arg1: i32, %arg2: memref<1x8x8xf32, #tpu.memory_space<vmem>>, %arg3: memref<8x32xf32, #tpu.memory_space<vmem>>, %arg4: memref<8x64xf32, #tpu.memory_space<vmem>>, %arg5: memref<1x64xf32, #tpu.memory_space<vmem>>, %arg6: memref<32x96xf32, #tpu.memory_space<vmem>>, %arg7: memref<1x96xf32, #tpu.memory_space<vmem>>, %arg8: memref<32x32xf32, #tpu.memory_space<vmem>>, %arg9: memref<1x32xf32, #tpu.memory_space<vmem>>, %arg10: memref<32x64xf32, #tpu.memory_space<vmem>>, %arg11: memref<1x64xf32, #tpu.memory_space<vmem>>, %arg12: memref<64x32xf32, #tpu.memory_space<vmem>>, %arg13: memref<1x32xf32, #tpu.memory_space<vmem>>, %arg14: memref<1x32x96xf32, #tpu.memory_space<vmem>>, %arg15: memref<1x1x96xf32, #tpu.memory_space<vmem>>, %arg16: memref<1x32x32xf32, #tpu.memory_space<vmem>>, %arg17: memref<1x1x32xf32, #tpu.memory_space<vmem>>, %arg18: memref<1x32x32xf32, #tpu.memory_space<vmem>>, %arg19: memref<1x1x32xf32, #tpu.memory_space<vmem>>, %arg20: memref<1x32x64xf32, #tpu.memory_space<vmem>>, %arg21: memref<1x1x64xf32, #tpu.memory_space<vmem>>, %arg22: memref<1x32x32xf32, #tpu.memory_space<vmem>>, %arg23: memref<1x1x32xf32, #tpu.memory_space<vmem>>, %arg24: memref<1x32x64xf32, #tpu.memory_space<vmem>>, %arg25: memref<1x1x64xf32, #tpu.memory_space<vmem>>, %arg26: memref<1x64x32xf32, #tpu.memory_space<vmem>>, %arg27: memref<1x1x32xf32, #tpu.memory_space<vmem>>, %arg28: memref<32x128xf32, #tpu.memory_space<vmem>>, %arg29: memref<1x128xf32, #tpu.memory_space<vmem>>, %arg30: memref<1x8x128xf32, #tpu.memory_space<vmem>>, %arg31: memref<8x32xf32, #tpu.memory_space<vmem>>, %arg32: memref<8x32xf32, #tpu.memory_space<vmem>>, %arg33: memref<8x32xf32, #tpu.memory_space<vmem>>) attributes {dimension_semantics = [#tpu.dimension_semantics<parallel>, #tpu.dimension_semantics<arbitrary>], iteration_bounds = array<i64: 2, 2>, scalar_prefetch = 0 : i64, scratch_operands = 3 : i64, tpu.core_type = #tpu.core_type<tc>, window_params = [{transform_indices = @transform_0, window_bounds = array<i64: 1, 8, 8>}, {pipeline_mode = #tpu.pipeline_mode<synchronous>, transform_indices = @transform_1, window_bounds = array<i64: 8, 32>}, {pipeline_mode = #tpu.pipeline_mode<synchronous>, transform_indices = @transform_2, window_bounds = array<i64: 8, 64>}, {pipeline_mode = #tpu.pipeline_mode<synchronous>, transform_indices = @transform_3, window_bounds = array<i64: 1, 64>}, {pipeline_mode = #tpu.pipeline_mode<synchronous>, transform_indices = @transform_4, window_bounds = array<i64: 32, 96>}, {pipeline_mode = #tpu.pipeline_mode<synchronous>, transform_indices = @transform_5, window_bounds = array<i64: 1, 96>}, {pipeline_mode = #tpu.pipeline_mode<synchronous>, transform_indices = @transform_6, window_bounds = array<i64: 32, 32>}, {pipeline_mode = #tpu.pipeline_mode<synchronous>, transform_indices = @transform_7, window_bounds = array<i64: 1, 32>}, {pipeline_mode = #tpu.pipeline_mode<synchronous>, transform_indices = @transform_8, window_bounds = array<i64: 32, 64>}, {pipeline_mode = #tpu.pipeline_mode<synchronous>, transform_indices = @transform_9, window_bounds = array<i64: 1, 64>}, {pipeline_mode = #tpu.pipeline_mode<synchronous>, transform_indices = @transform_10, window_bounds = array<i64: 64, 32>}, {pipeline_mode = #tpu.pipeline_mode<synchronous>, transform_indices = @transform_11, window_bounds = array<i64: 1, 32>}, {transform_indices = @transform_12, window_bounds = array<i64: 1, 32, 96>}, {transform_indices = @transform_13, window_bounds = array<i64: 1, 1, 96>}, {transform_indices = @transform_14, window_bounds = array<i64: 1, 32, 32>}, {transform_indices = @transform_15, window_bounds = array<i64: 1, 1, 32>}, {transform_indices = @transform_16, window_bounds = array<i64: 1, 32, 32>}, {transform_indices = @transform_17, window_bounds = array<i64: 1, 1, 32>}, {transform_indices = @transform_18, window_bounds = array<i64: 1, 32, 64>}, {transform_indices = @transform_19, window_bounds = array<i64: 1, 1, 64>}, {transform_indices = @transform_20, window_bounds = array<i64: 1, 32, 32>}, {transform_indices = @transform_21, window_bounds = array<i64: 1, 1, 32>}, {transform_indices = @transform_22, window_bounds = array<i64: 1, 32, 64>}, {transform_indices = @transform_23, window_bounds = array<i64: 1, 1, 64>}, {transform_indices = @transform_24, window_bounds = array<i64: 1, 64, 32>}, {transform_indices = @transform_25, window_bounds = array<i64: 1, 1, 32>}, {pipeline_mode = #tpu.pipeline_mode<synchronous>, transform_indices = @transform_26, window_bounds = array<i64: 32, 128>}, {pipeline_mode = #tpu.pipeline_mode<synchronous>, transform_indices = @transform_27, window_bounds = array<i64: 1, 128>}, {transform_indices = @transform_28, window_bounds = array<i64: 1, 8, 128>}]} {
    %c0_i32 = arith.constant 0 : i32
    %0 = arith.cmpi eq, %arg1, %c0_i32 : i32
    %1 = arith.extui %0 : i1 to i32
    %c0_i32_0 = arith.constant 0 : i32
    %2 = arith.cmpi ne, %1, %c0_i32_0 : i32
    scf.if %2 {
      %c0_128 = arith.constant 0 : index
      %c0_129 = arith.constant 0 : index
      %c0_130 = arith.constant 0 : index
      %254 = vector.load %arg2[%c0_128, %c0_129, %c0_130] : memref<1x8x8xf32, #tpu.memory_space<vmem>>, vector<1x8x8xf32>
      %255 = vector.shape_cast %254 : vector<1x8x8xf32> to vector<8x8xf32>
      %c0_131 = arith.constant 0 : index
      %c0_132 = arith.constant 0 : index
      %256 = vector.load %arg4[%c0_131, %c0_132] : memref<8x64xf32, #tpu.memory_space<vmem>>, vector<8x64xf32>
      %cst_133 = arith.constant dense<0.000000e+00> : vector<8x64xf32>
      %257 = tpu.matmul %255, %256, %cst_133 {dimension_numbers = #tpu.dot_dimension_numbers<[1], [0], [0], [1], [0, 0, 1, 1], [], []>} : vector<8x8xf32>, vector<8x64xf32>, vector<8x64xf32> -> vector<8x64xf32>
      %c0_134 = arith.constant 0 : index
      %c0_135 = arith.constant 0 : index
      %258 = vector.load %arg5[%c0_134, %c0_135] : memref<1x64xf32, #tpu.memory_space<vmem>>, vector<1x64xf32>
      %259 = vector.broadcast %258 : vector<1x64xf32> to vector<8x64xf32>
      %260 = arith.addf %257, %259 : vector<8x64xf32>
      %c0_136 = arith.constant 0 : index
      %c0_137 = arith.constant 0 : index
      %261 = vector.load %arg3[%c0_136, %c0_137] : memref<8x32xf32, #tpu.memory_space<vmem>>, vector<8x32xf32>
      %262 = vector.extract_strided_slice %260 {offsets = [0, 0], sizes = [8, 32], strides = [1, 1]} : vector<8x64xf32> to vector<8x32xf32>
      %cst_138 = arith.constant 5.65685415 : f32
      %263 = vector.broadcast %cst_138 : f32 to vector<8x32xf32>
      %264 = arith.mulf %262, %263 : vector<8x32xf32>
      %265 = arith.addf %264, %261 : vector<8x32xf32>
      %266 = vector.extract_strided_slice %260 {offsets = [0, 32], sizes = [8, 32], strides = [1, 1]} : vector<8x64xf32> to vector<8x32xf32>
      %cst_139 = arith.constant 5.65685415 : f32
      %267 = vector.broadcast %cst_139 : f32 to vector<8x32xf32>
      %268 = arith.mulf %266, %267 : vector<8x32xf32>
      %269 = arith.addf %268, %261 : vector<8x32xf32>
      %cst_140 = arith.constant dense<0.000000e+00> : vector<8xf32>
      %270 = vector.multi_reduction <add>, %265, %cst_140 [1] : vector<8x32xf32> to vector<8xf32>
      %271 = vector.shape_cast %270 : vector<8xf32> to vector<8x1xf32>
      %cst_141 = arith.constant 3.200000e+01 : f32
      %272 = vector.broadcast %cst_141 : f32 to vector<8x1xf32>
      %273 = arith.divf %271, %272 : vector<8x1xf32>
      %274 = vector.broadcast %273 : vector<8x1xf32> to vector<8x32xf32>
      %275 = arith.subf %265, %274 : vector<8x32xf32>
      %276 = arith.mulf %275, %275 : vector<8x32xf32>
      %cst_142 = arith.constant dense<0.000000e+00> : vector<8xf32>
      %277 = vector.multi_reduction <add>, %276, %cst_142 [1] : vector<8x32xf32> to vector<8xf32>
      %278 = vector.shape_cast %277 : vector<8xf32> to vector<8x1xf32>
      %cst_143 = arith.constant 3.100000e+01 : f32
      %279 = vector.broadcast %cst_143 : f32 to vector<8x1xf32>
      %280 = arith.divf %278, %279 : vector<8x1xf32>
      %281 = math.sqrt %280 : vector<8x1xf32>
      %cst_144 = arith.constant 9.99999997E-7 : f32
      %282 = vector.broadcast %cst_144 : f32 to vector<8x1xf32>
      %283 = arith.addf %281, %282 : vector<8x1xf32>
      %284 = vector.broadcast %283 : vector<8x1xf32> to vector<8x32xf32>
      %285 = arith.divf %275, %284 : vector<8x32xf32>
      %c0_145 = arith.constant 0 : index
      %c0_146 = arith.constant 0 : index
      %286 = vector.load %arg6[%c0_145, %c0_146] : memref<32x96xf32, #tpu.memory_space<vmem>>, vector<32x96xf32>
      %c0_147 = arith.constant 0 : index
      %c0_148 = arith.constant 0 : index
      %287 = vector.load %arg7[%c0_147, %c0_148] : memref<1x96xf32, #tpu.memory_space<vmem>>, vector<1x96xf32>
      %c0_149 = arith.constant 0 : index
      %c0_150 = arith.constant 0 : index
      %288 = vector.load %arg8[%c0_149, %c0_150] : memref<32x32xf32, #tpu.memory_space<vmem>>, vector<32x32xf32>
      %c0_151 = arith.constant 0 : index
      %c0_152 = arith.constant 0 : index
      %289 = vector.load %arg9[%c0_151, %c0_152] : memref<1x32xf32, #tpu.memory_space<vmem>>, vector<1x32xf32>
      %cst_153 = arith.constant dense<0.000000e+00> : vector<8x96xf32>
      %290 = tpu.matmul %285, %286, %cst_153 {dimension_numbers = #tpu.dot_dimension_numbers<[1], [0], [0], [1], [0, 0, 1, 1], [], []>} : vector<8x32xf32>, vector<32x96xf32>, vector<8x96xf32> -> vector<8x96xf32>
      %291 = vector.broadcast %287 : vector<1x96xf32> to vector<8x96xf32>
      %292 = arith.addf %290, %291 : vector<8x96xf32>
      %293 = vector.extract_strided_slice %292 {offsets = [0, 0], sizes = [8, 32], strides = [1, 1]} : vector<8x96xf32> to vector<8x32xf32>
      %294 = vector.extract_strided_slice %292 {offsets = [0, 32], sizes = [8, 32], strides = [1, 1]} : vector<8x96xf32> to vector<8x32xf32>
      %295 = vector.extract_strided_slice %292 {offsets = [0, 64], sizes = [8, 32], strides = [1, 1]} : vector<8x96xf32> to vector<8x32xf32>
      %296 = vector.extract_strided_slice %293 {offsets = [0, 0], sizes = [8, 8], strides = [1, 1]} : vector<8x32xf32> to vector<8x8xf32>
      %297 = vector.extract_strided_slice %294 {offsets = [0, 0], sizes = [8, 8], strides = [1, 1]} : vector<8x32xf32> to vector<8x8xf32>
      "tpu.trace_start"() <{level = 10 : i32, message = "nd,md->nm"}> : () -> ()
      %cst_154 = arith.constant dense<0.000000e+00> : vector<8x8xf32>
      %298 = tpu.matmul %296, %297, %cst_154 {dimension_numbers = #tpu.dot_dimension_numbers<[1], [1], [0], [0], [0, 0, 1, 0], [], []>} : vector<8x8xf32>, vector<8x8xf32>, vector<8x8xf32> -> vector<8x8xf32>
      "tpu.trace_stop"() : () -> ()
      %cst_155 = arith.constant 0.353553385 : f32
      %299 = vector.broadcast %cst_155 : f32 to vector<8x8xf32>
      %300 = arith.mulf %298, %299 : vector<8x8xf32>
      %cst_156 = arith.constant dense<0xFF800000> : vector<8xf32>
      %301 = vector.multi_reduction <maximumf>, %300, %cst_156 [1] : vector<8x8xf32> to vector<8xf32>
      %302 = vector.shape_cast %301 : vector<8xf32> to vector<8x1xf32>
      %303 = vector.broadcast %302 : vector<8x1xf32> to vector<8x8xf32>
      %304 = arith.subf %300, %303 : vector<8x8xf32>
      %305 = math.exp %304 : vector<8x8xf32>
      %cst_157 = arith.constant dense<0.000000e+00> : vector<8xf32>
      %306 = vector.multi_reduction <add>, %305, %cst_157 [1] : vector<8x8xf32> to vector<8xf32>
      %307 = vector.shape_cast %306 : vector<8xf32> to vector<8x1xf32>
      %308 = vector.broadcast %307 : vector<8x1xf32> to vector<8x8xf32>
      %309 = arith.divf %305, %308 : vector<8x8xf32>
      %310 = vector.extract_strided_slice %295 {offsets = [0, 0], sizes = [8, 8], strides = [1, 1]} : vector<8x32xf32> to vector<8x8xf32>
      %cst_158 = arith.constant dense<0.000000e+00> : vector<8x8xf32>
      %311 = tpu.matmul %309, %310, %cst_158 {dimension_numbers = #tpu.dot_dimension_numbers<[1], [0], [0], [1], [0, 0, 1, 1], [], []>} : vector<8x8xf32>, vector<8x8xf32>, vector<8x8xf32> -> vector<8x8xf32>
      %c0_159 = arith.constant 0 : index
      %c0_160 = arith.constant 0 : index
      %312 = vector.load %arg33[%c0_159, %c0_160] : memref<8x32xf32, #tpu.memory_space<vmem>>, vector<8x8xf32>
      tpu.vector_store %arg33[%c0_159, %c0_160], %311 {strides = array<i32>} : memref<8x32xf32, #tpu.memory_space<vmem>>, vector<8x8xf32>,
      %313 = vector.extract_strided_slice %293 {offsets = [0, 8], sizes = [8, 8], strides = [1, 1]} : vector<8x32xf32> to vector<8x8xf32>
      %314 = vector.extract_strided_slice %294 {offsets = [0, 8], sizes = [8, 8], strides = [1, 1]} : vector<8x32xf32> to vector<8x8xf32>
      "tpu.trace_start"() <{level = 10 : i32, message = "nd,md->nm"}> : () -> ()
      %cst_161 = arith.constant dense<0.000000e+00> : vector<8x8xf32>
      %315 = tpu.matmul %313, %314, %cst_161 {dimension_numbers = #tpu.dot_dimension_numbers<[1], [1], [0], [0], [0, 0, 1, 0], [], []>} : vector<8x8xf32>, vector<8x8xf32>, vector<8x8xf32> -> vector<8x8xf32>
      "tpu.trace_stop"() : () -> ()
      %cst_162 = arith.constant 0.353553385 : f32
      %316 = vector.broadcast %cst_162 : f32 to vector<8x8xf32>
      %317 = arith.mulf %315, %316 : vector<8x8xf32>
      %cst_163 = arith.constant dense<0xFF800000> : vector<8xf32>
      %318 = vector.multi_reduction <maximumf>, %317, %cst_163 [1] : vector<8x8xf32> to vector<8xf32>
      %319 = vector.shape_cast %318 : vector<8xf32> to vector<8x1xf32>
      %320 = vector.broadcast %319 : vector<8x1xf32> to vector<8x8xf32>
      %321 = arith.subf %317, %320 : vector<8x8xf32>
      %322 = math.exp %321 : vector<8x8xf32>
      %cst_164 = arith.constant dense<0.000000e+00> : vector<8xf32>
      %323 = vector.multi_reduction <add>, %322, %cst_164 [1] : vector<8x8xf32> to vector<8xf32>
      %324 = vector.shape_cast %323 : vector<8xf32> to vector<8x1xf32>
      %325 = vector.broadcast %324 : vector<8x1xf32> to vector<8x8xf32>
      %326 = arith.divf %322, %325 : vector<8x8xf32>
      %327 = vector.extract_strided_slice %295 {offsets = [0, 8], sizes = [8, 8], strides = [1, 1]} : vector<8x32xf32> to vector<8x8xf32>
      %cst_165 = arith.constant dense<0.000000e+00> : vector<8x8xf32>
      %328 = tpu.matmul %326, %327, %cst_165 {dimension_numbers = #tpu.dot_dimension_numbers<[1], [0], [0], [1], [0, 0, 1, 1], [], []>} : vector<8x8xf32>, vector<8x8xf32>, vector<8x8xf32> -> vector<8x8xf32>
      %c0_166 = arith.constant 0 : index
      %c8_167 = arith.constant 8 : index
      %329 = vector.load %arg33[%c0_166, %c8_167] : memref<8x32xf32, #tpu.memory_space<vmem>>, vector<8x8xf32>
      tpu.vector_store %arg33[%c0_166, %c8_167], %328 {strides = array<i32>} : memref<8x32xf32, #tpu.memory_space<vmem>>, vector<8x8xf32>,
      %330 = vector.extract_strided_slice %293 {offsets = [0, 16], sizes = [8, 8], strides = [1, 1]} : vector<8x32xf32> to vector<8x8xf32>
      %331 = vector.extract_strided_slice %294 {offsets = [0, 16], sizes = [8, 8], strides = [1, 1]} : vector<8x32xf32> to vector<8x8xf32>
      "tpu.trace_start"() <{level = 10 : i32, message = "nd,md->nm"}> : () -> ()
      %cst_168 = arith.constant dense<0.000000e+00> : vector<8x8xf32>
      %332 = tpu.matmul %330, %331, %cst_168 {dimension_numbers = #tpu.dot_dimension_numbers<[1], [1], [0], [0], [0, 0, 1, 0], [], []>} : vector<8x8xf32>, vector<8x8xf32>, vector<8x8xf32> -> vector<8x8xf32>
      "tpu.trace_stop"() : () -> ()
      %cst_169 = arith.constant 0.353553385 : f32
      %333 = vector.broadcast %cst_169 : f32 to vector<8x8xf32>
      %334 = arith.mulf %332, %333 : vector<8x8xf32>
      %cst_170 = arith.constant dense<0xFF800000> : vector<8xf32>
      %335 = vector.multi_reduction <maximumf>, %334, %cst_170 [1] : vector<8x8xf32> to vector<8xf32>
      %336 = vector.shape_cast %335 : vector<8xf32> to vector<8x1xf32>
      %337 = vector.broadcast %336 : vector<8x1xf32> to vector<8x8xf32>
      %338 = arith.subf %334, %337 : vector<8x8xf32>
      %339 = math.exp %338 : vector<8x8xf32>
      %cst_171 = arith.constant dense<0.000000e+00> : vector<8xf32>
      %340 = vector.multi_reduction <add>, %339, %cst_171 [1] : vector<8x8xf32> to vector<8xf32>
      %341 = vector.shape_cast %340 : vector<8xf32> to vector<8x1xf32>
      %342 = vector.broadcast %341 : vector<8x1xf32> to vector<8x8xf32>
      %343 = arith.divf %339, %342 : vector<8x8xf32>
      %344 = vector.extract_strided_slice %295 {offsets = [0, 16], sizes = [8, 8], strides = [1, 1]} : vector<8x32xf32> to vector<8x8xf32>
      %cst_172 = arith.constant dense<0.000000e+00> : vector<8x8xf32>
      %345 = tpu.matmul %343, %344, %cst_172 {dimension_numbers = #tpu.dot_dimension_numbers<[1], [0], [0], [1], [0, 0, 1, 1], [], []>} : vector<8x8xf32>, vector<8x8xf32>, vector<8x8xf32> -> vector<8x8xf32>
      %c0_173 = arith.constant 0 : index
      %c16_174 = arith.constant 16 : index
      %346 = vector.load %arg33[%c0_173, %c16_174] : memref<8x32xf32, #tpu.memory_space<vmem>>, vector<8x8xf32>
      tpu.vector_store %arg33[%c0_173, %c16_174], %345 {strides = array<i32>} : memref<8x32xf32, #tpu.memory_space<vmem>>, vector<8x8xf32>,
      %347 = vector.extract_strided_slice %293 {offsets = [0, 24], sizes = [8, 8], strides = [1, 1]} : vector<8x32xf32> to vector<8x8xf32>
      %348 = vector.extract_strided_slice %294 {offsets = [0, 24], sizes = [8, 8], strides = [1, 1]} : vector<8x32xf32> to vector<8x8xf32>
      "tpu.trace_start"() <{level = 10 : i32, message = "nd,md->nm"}> : () -> ()
      %cst_175 = arith.constant dense<0.000000e+00> : vector<8x8xf32>
      %349 = tpu.matmul %347, %348, %cst_175 {dimension_numbers = #tpu.dot_dimension_numbers<[1], [1], [0], [0], [0, 0, 1, 0], [], []>} : vector<8x8xf32>, vector<8x8xf32>, vector<8x8xf32> -> vector<8x8xf32>
      "tpu.trace_stop"() : () -> ()
      %cst_176 = arith.constant 0.353553385 : f32
      %350 = vector.broadcast %cst_176 : f32 to vector<8x8xf32>
      %351 = arith.mulf %349, %350 : vector<8x8xf32>
      %cst_177 = arith.constant dense<0xFF800000> : vector<8xf32>
      %352 = vector.multi_reduction <maximumf>, %351, %cst_177 [1] : vector<8x8xf32> to vector<8xf32>
      %353 = vector.shape_cast %352 : vector<8xf32> to vector<8x1xf32>
      %354 = vector.broadcast %353 : vector<8x1xf32> to vector<8x8xf32>
      %355 = arith.subf %351, %354 : vector<8x8xf32>
      %356 = math.exp %355 : vector<8x8xf32>
      %cst_178 = arith.constant dense<0.000000e+00> : vector<8xf32>
      %357 = vector.multi_reduction <add>, %356, %cst_178 [1] : vector<8x8xf32> to vector<8xf32>
      %358 = vector.shape_cast %357 : vector<8xf32> to vector<8x1xf32>
      %359 = vector.broadcast %358 : vector<8x1xf32> to vector<8x8xf32>
      %360 = arith.divf %356, %359 : vector<8x8xf32>
      %361 = vector.extract_strided_slice %295 {offsets = [0, 24], sizes = [8, 8], strides = [1, 1]} : vector<8x32xf32> to vector<8x8xf32>
      %cst_179 = arith.constant dense<0.000000e+00> : vector<8x8xf32>
      %362 = tpu.matmul %360, %361, %cst_179 {dimension_numbers = #tpu.dot_dimension_numbers<[1], [0], [0], [1], [0, 0, 1, 1], [], []>} : vector<8x8xf32>, vector<8x8xf32>, vector<8x8xf32> -> vector<8x8xf32>
      %c0_180 = arith.constant 0 : index
      %c24_181 = arith.constant 24 : index
      %363 = vector.load %arg33[%c0_180, %c24_181] : memref<8x32xf32, #tpu.memory_space<vmem>>, vector<8x8xf32>
      tpu.vector_store %arg33[%c0_180, %c24_181], %362 {strides = array<i32>} : memref<8x32xf32, #tpu.memory_space<vmem>>, vector<8x8xf32>,
      %c0_182 = arith.constant 0 : index
      %c0_183 = arith.constant 0 : index
      %364 = vector.load %arg33[%c0_182, %c0_183] : memref<8x32xf32, #tpu.memory_space<vmem>>, vector<8x32xf32>
      %cst_184 = arith.constant dense<0.000000e+00> : vector<8x32xf32>
      %365 = tpu.matmul %364, %288, %cst_184 {dimension_numbers = #tpu.dot_dimension_numbers<[1], [0], [0], [1], [0, 0, 1, 1], [], []>} : vector<8x32xf32>, vector<32x32xf32>, vector<8x32xf32> -> vector<8x32xf32>
      %366 = vector.broadcast %289 : vector<1x32xf32> to vector<8x32xf32>
      %367 = arith.addf %365, %366 : vector<8x32xf32>
      %368 = arith.addf %265, %367 : vector<8x32xf32>
      %cst_185 = arith.constant dense<0.000000e+00> : vector<8xf32>
      %369 = vector.multi_reduction <add>, %368, %cst_185 [1] : vector<8x32xf32> to vector<8xf32>
      %370 = vector.shape_cast %369 : vector<8xf32> to vector<8x1xf32>
      %cst_186 = arith.constant 3.200000e+01 : f32
      %371 = vector.broadcast %cst_186 : f32 to vector<8x1xf32>
      %372 = arith.divf %370, %371 : vector<8x1xf32>
      %373 = vector.broadcast %372 : vector<8x1xf32> to vector<8x32xf32>
      %374 = arith.subf %368, %373 : vector<8x32xf32>
      %375 = arith.mulf %374, %374 : vector<8x32xf32>
      %cst_187 = arith.constant dense<0.000000e+00> : vector<8xf32>
      %376 = vector.multi_reduction <add>, %375, %cst_187 [1] : vector<8x32xf32> to vector<8xf32>
      %377 = vector.shape_cast %376 : vector<8xf32> to vector<8x1xf32>
      %cst_188 = arith.constant 3.100000e+01 : f32
      %378 = vector.broadcast %cst_188 : f32 to vector<8x1xf32>
      %379 = arith.divf %377, %378 : vector<8x1xf32>
      %380 = math.sqrt %379 : vector<8x1xf32>
      %cst_189 = arith.constant 9.99999997E-7 : f32
      %381 = vector.broadcast %cst_189 : f32 to vector<8x1xf32>
      %382 = arith.addf %380, %381 : vector<8x1xf32>
      %383 = vector.broadcast %382 : vector<8x1xf32> to vector<8x32xf32>
      %384 = arith.divf %374, %383 : vector<8x32xf32>
      %c0_190 = arith.constant 0 : index
      %c0_191 = arith.constant 0 : index
      %385 = vector.load %arg10[%c0_190, %c0_191] : memref<32x64xf32, #tpu.memory_space<vmem>>, vector<32x64xf32>
      %c0_192 = arith.constant 0 : index
      %c0_193 = arith.constant 0 : index
      %386 = vector.load %arg11[%c0_192, %c0_193] : memref<1x64xf32, #tpu.memory_space<vmem>>, vector<1x64xf32>
      %c0_194 = arith.constant 0 : index
      %c0_195 = arith.constant 0 : index
      %387 = vector.load %arg12[%c0_194, %c0_195] : memref<64x32xf32, #tpu.memory_space<vmem>>, vector<64x32xf32>
      %c0_196 = arith.constant 0 : index
      %c0_197 = arith.constant 0 : index
      %388 = vector.load %arg13[%c0_196, %c0_197] : memref<1x32xf32, #tpu.memory_space<vmem>>, vector<1x32xf32>
      %cst_198 = arith.constant dense<0.000000e+00> : vector<8x64xf32>
      %389 = tpu.matmul %384, %385, %cst_198 {dimension_numbers = #tpu.dot_dimension_numbers<[1], [0], [0], [1], [0, 0, 1, 1], [], []>} : vector<8x32xf32>, vector<32x64xf32>, vector<8x64xf32> -> vector<8x64xf32>
      %390 = vector.broadcast %386 : vector<1x64xf32> to vector<8x64xf32>
      %391 = arith.addf %389, %390 : vector<8x64xf32>
      %cst_199 = arith.constant 0.000000e+00 : f32
      %392 = vector.broadcast %cst_199 : f32 to vector<8x64xf32>
      %393 = arith.maximumf %391, %392 : vector<8x64xf32>
      %cst_200 = arith.constant dense<0.000000e+00> : vector<8x32xf32>
      %394 = tpu.matmul %393, %387, %cst_200 {dimension_numbers = #tpu.dot_dimension_numbers<[1], [0], [0], [1], [0, 0, 1, 1], [], []>} : vector<8x64xf32>, vector<64x32xf32>, vector<8x32xf32> -> vector<8x32xf32>
      %395 = vector.broadcast %388 : vector<1x32xf32> to vector<8x32xf32>
      %396 = arith.addf %394, %395 : vector<8x32xf32>
      %397 = arith.addf %368, %396 : vector<8x32xf32>
      %cst_201 = arith.constant dense<0.000000e+00> : vector<8xf32>
      %398 = vector.multi_reduction <add>, %397, %cst_201 [1] : vector<8x32xf32> to vector<8xf32>
      %399 = vector.shape_cast %398 : vector<8xf32> to vector<8x1xf32>
      %cst_202 = arith.constant 3.200000e+01 : f32
      %400 = vector.broadcast %cst_202 : f32 to vector<8x1xf32>
      %401 = arith.divf %399, %400 : vector<8x1xf32>
      %402 = vector.broadcast %401 : vector<8x1xf32> to vector<8x32xf32>
      %403 = arith.subf %397, %402 : vector<8x32xf32>
      %404 = arith.mulf %403, %403 : vector<8x32xf32>
      %cst_203 = arith.constant dense<0.000000e+00> : vector<8xf32>
      %405 = vector.multi_reduction <add>, %404, %cst_203 [1] : vector<8x32xf32> to vector<8xf32>
      %406 = vector.shape_cast %405 : vector<8xf32> to vector<8x1xf32>
      %cst_204 = arith.constant 3.100000e+01 : f32
      %407 = vector.broadcast %cst_204 : f32 to vector<8x1xf32>
      %408 = arith.divf %406, %407 : vector<8x1xf32>
      %409 = math.sqrt %408 : vector<8x1xf32>
      %cst_205 = arith.constant 9.99999997E-7 : f32
      %410 = vector.broadcast %cst_205 : f32 to vector<8x1xf32>
      %411 = arith.addf %409, %410 : vector<8x1xf32>
      %412 = vector.broadcast %411 : vector<8x1xf32> to vector<8x32xf32>
      %413 = arith.divf %403, %412 : vector<8x32xf32>
      %c0_206 = arith.constant 0 : index
      %c0_207 = arith.constant 0 : index
      %414 = vector.load %arg31[%c0_206, %c0_207] : memref<8x32xf32, #tpu.memory_space<vmem>>, vector<8x32xf32>
      tpu.vector_store %arg31[%c0_206, %c0_207], %413 {strides = array<i32>} : memref<8x32xf32, #tpu.memory_space<vmem>>, vector<8x32xf32>,
      %c0_208 = arith.constant 0 : index
      %c0_209 = arith.constant 0 : index
      %415 = vector.load %arg32[%c0_208, %c0_209] : memref<8x32xf32, #tpu.memory_space<vmem>>, vector<8x32xf32>
      tpu.vector_store %arg32[%c0_208, %c0_209], %269 {strides = array<i32>} : memref<8x32xf32, #tpu.memory_space<vmem>>, vector<8x32xf32>,
    } else {
    }
    %c0 = arith.constant 0 : index
    %c0_1 = arith.constant 0 : index
    %3 = vector.load %arg32[%c0, %c0_1] : memref<8x32xf32, #tpu.memory_space<vmem>>, vector<8x32xf32>
    %c0_2 = arith.constant 0 : index
    %c0_3 = arith.constant 0 : index
    %4 = vector.load %arg31[%c0_2, %c0_3] : memref<8x32xf32, #tpu.memory_space<vmem>>, vector<8x32xf32>
    %cst = arith.constant dense<0.000000e+00> : vector<8xf32>
    %5 = vector.multi_reduction <add>, %3, %cst [1] : vector<8x32xf32> to vector<8xf32>
    %6 = vector.shape_cast %5 : vector<8xf32> to vector<8x1xf32>
    %cst_4 = arith.constant 3.200000e+01 : f32
    %7 = vector.broadcast %cst_4 : f32 to vector<8x1xf32>
    %8 = arith.divf %6, %7 : vector<8x1xf32>
    %9 = vector.broadcast %8 : vector<8x1xf32> to vector<8x32xf32>
    %10 = arith.subf %3, %9 : vector<8x32xf32>
    %11 = arith.mulf %10, %10 : vector<8x32xf32>
    %cst_5 = arith.constant dense<0.000000e+00> : vector<8xf32>
    %12 = vector.multi_reduction <add>, %11, %cst_5 [1] : vector<8x32xf32> to vector<8xf32>
    %13 = vector.shape_cast %12 : vector<8xf32> to vector<8x1xf32>
    %cst_6 = arith.constant 3.100000e+01 : f32
    %14 = vector.broadcast %cst_6 : f32 to vector<8x1xf32>
    %15 = arith.divf %13, %14 : vector<8x1xf32>
    %16 = math.sqrt %15 : vector<8x1xf32>
    %cst_7 = arith.constant 9.99999997E-7 : f32
    %17 = vector.broadcast %cst_7 : f32 to vector<8x1xf32>
    %18 = arith.addf %16, %17 : vector<8x1xf32>
    %19 = vector.broadcast %18 : vector<8x1xf32> to vector<8x32xf32>
    %20 = arith.divf %10, %19 : vector<8x32xf32>
    %c0_8 = arith.constant 0 : index
    %c0_9 = arith.constant 0 : index
    %c0_10 = arith.constant 0 : index
    %21 = vector.load %arg14[%c0_8, %c0_9, %c0_10] : memref<1x32x96xf32, #tpu.memory_space<vmem>>, vector<1x32x96xf32>
    %22 = vector.shape_cast %21 : vector<1x32x96xf32> to vector<32x96xf32>
    %c0_11 = arith.constant 0 : index
    %c0_12 = arith.constant 0 : index
    %c0_13 = arith.constant 0 : index
    %23 = vector.load %arg15[%c0_11, %c0_12, %c0_13] : memref<1x1x96xf32, #tpu.memory_space<vmem>>, vector<1x1x96xf32>
    %24 = vector.shape_cast %23 : vector<1x1x96xf32> to vector<1x96xf32>
    %c0_14 = arith.constant 0 : index
    %c0_15 = arith.constant 0 : index
    %c0_16 = arith.constant 0 : index
    %25 = vector.load %arg16[%c0_14, %c0_15, %c0_16] : memref<1x32x32xf32, #tpu.memory_space<vmem>>, vector<1x32x32xf32>
    %26 = vector.shape_cast %25 : vector<1x32x32xf32> to vector<32x32xf32>
    %c0_17 = arith.constant 0 : index
    %c0_18 = arith.constant 0 : index
    %c0_19 = arith.constant 0 : index
    %27 = vector.load %arg17[%c0_17, %c0_18, %c0_19] : memref<1x1x32xf32, #tpu.memory_space<vmem>>, vector<1x1x32xf32>
    %28 = vector.shape_cast %27 : vector<1x1x32xf32> to vector<1x32xf32>
    %cst_20 = arith.constant dense<0.000000e+00> : vector<8x96xf32>
    %29 = tpu.matmul %20, %22, %cst_20 {dimension_numbers = #tpu.dot_dimension_numbers<[1], [0], [0], [1], [0, 0, 1, 1], [], []>} : vector<8x32xf32>, vector<32x96xf32>, vector<8x96xf32> -> vector<8x96xf32>
    %30 = vector.broadcast %24 : vector<1x96xf32> to vector<8x96xf32>
    %31 = arith.addf %29, %30 : vector<8x96xf32>
    %32 = vector.extract_strided_slice %31 {offsets = [0, 0], sizes = [8, 32], strides = [1, 1]} : vector<8x96xf32> to vector<8x32xf32>
    %33 = vector.extract_strided_slice %31 {offsets = [0, 32], sizes = [8, 32], strides = [1, 1]} : vector<8x96xf32> to vector<8x32xf32>
    %34 = vector.extract_strided_slice %31 {offsets = [0, 64], sizes = [8, 32], strides = [1, 1]} : vector<8x96xf32> to vector<8x32xf32>
    %35 = vector.extract_strided_slice %32 {offsets = [0, 0], sizes = [8, 8], strides = [1, 1]} : vector<8x32xf32> to vector<8x8xf32>
    %36 = vector.extract_strided_slice %33 {offsets = [0, 0], sizes = [8, 8], strides = [1, 1]} : vector<8x32xf32> to vector<8x8xf32>
    "tpu.trace_start"() <{level = 10 : i32, message = "nd,md->nm"}> : () -> ()
    %cst_21 = arith.constant dense<0.000000e+00> : vector<8x8xf32>
    %37 = tpu.matmul %35, %36, %cst_21 {dimension_numbers = #tpu.dot_dimension_numbers<[1], [1], [0], [0], [0, 0, 1, 0], [], []>} : vector<8x8xf32>, vector<8x8xf32>, vector<8x8xf32> -> vector<8x8xf32>
    "tpu.trace_stop"() : () -> ()
    %cst_22 = arith.constant 0.353553385 : f32
    %38 = vector.broadcast %cst_22 : f32 to vector<8x8xf32>
    %39 = arith.mulf %37, %38 : vector<8x8xf32>
    %cst_23 = arith.constant dense<0xFF800000> : vector<8xf32>
    %40 = vector.multi_reduction <maximumf>, %39, %cst_23 [1] : vector<8x8xf32> to vector<8xf32>
    %41 = vector.shape_cast %40 : vector<8xf32> to vector<8x1xf32>
    %42 = vector.broadcast %41 : vector<8x1xf32> to vector<8x8xf32>
    %43 = arith.subf %39, %42 : vector<8x8xf32>
    %44 = math.exp %43 : vector<8x8xf32>
    %cst_24 = arith.constant dense<0.000000e+00> : vector<8xf32>
    %45 = vector.multi_reduction <add>, %44, %cst_24 [1] : vector<8x8xf32> to vector<8xf32>
    %46 = vector.shape_cast %45 : vector<8xf32> to vector<8x1xf32>
    %47 = vector.broadcast %46 : vector<8x1xf32> to vector<8x8xf32>
    %48 = arith.divf %44, %47 : vector<8x8xf32>
    %49 = vector.extract_strided_slice %34 {offsets = [0, 0], sizes = [8, 8], strides = [1, 1]} : vector<8x32xf32> to vector<8x8xf32>
    %cst_25 = arith.constant dense<0.000000e+00> : vector<8x8xf32>
    %50 = tpu.matmul %48, %49, %cst_25 {dimension_numbers = #tpu.dot_dimension_numbers<[1], [0], [0], [1], [0, 0, 1, 1], [], []>} : vector<8x8xf32>, vector<8x8xf32>, vector<8x8xf32> -> vector<8x8xf32>
    %c0_26 = arith.constant 0 : index
    %c0_27 = arith.constant 0 : index
    %51 = vector.load %arg33[%c0_26, %c0_27] : memref<8x32xf32, #tpu.memory_space<vmem>>, vector<8x8xf32>
    tpu.vector_store %arg33[%c0_26, %c0_27], %50 {strides = array<i32>} : memref<8x32xf32, #tpu.memory_space<vmem>>, vector<8x8xf32>,
    %52 = vector.extract_strided_slice %32 {offsets = [0, 8], sizes = [8, 8], strides = [1, 1]} : vector<8x32xf32> to vector<8x8xf32>
    %53 = vector.extract_strided_slice %33 {offsets = [0, 8], sizes = [8, 8], strides = [1, 1]} : vector<8x32xf32> to vector<8x8xf32>
    "tpu.trace_start"() <{level = 10 : i32, message = "nd,md->nm"}> : () -> ()
    %cst_28 = arith.constant dense<0.000000e+00> : vector<8x8xf32>
    %54 = tpu.matmul %52, %53, %cst_28 {dimension_numbers = #tpu.dot_dimension_numbers<[1], [1], [0], [0], [0, 0, 1, 0], [], []>} : vector<8x8xf32>, vector<8x8xf32>, vector<8x8xf32> -> vector<8x8xf32>
    "tpu.trace_stop"() : () -> ()
    %cst_29 = arith.constant 0.353553385 : f32
    %55 = vector.broadcast %cst_29 : f32 to vector<8x8xf32>
    %56 = arith.mulf %54, %55 : vector<8x8xf32>
    %cst_30 = arith.constant dense<0xFF800000> : vector<8xf32>
    %57 = vector.multi_reduction <maximumf>, %56, %cst_30 [1] : vector<8x8xf32> to vector<8xf32>
    %58 = vector.shape_cast %57 : vector<8xf32> to vector<8x1xf32>
    %59 = vector.broadcast %58 : vector<8x1xf32> to vector<8x8xf32>
    %60 = arith.subf %56, %59 : vector<8x8xf32>
    %61 = math.exp %60 : vector<8x8xf32>
    %cst_31 = arith.constant dense<0.000000e+00> : vector<8xf32>
    %62 = vector.multi_reduction <add>, %61, %cst_31 [1] : vector<8x8xf32> to vector<8xf32>
    %63 = vector.shape_cast %62 : vector<8xf32> to vector<8x1xf32>
    %64 = vector.broadcast %63 : vector<8x1xf32> to vector<8x8xf32>
    %65 = arith.divf %61, %64 : vector<8x8xf32>
    %66 = vector.extract_strided_slice %34 {offsets = [0, 8], sizes = [8, 8], strides = [1, 1]} : vector<8x32xf32> to vector<8x8xf32>
    %cst_32 = arith.constant dense<0.000000e+00> : vector<8x8xf32>
    %67 = tpu.matmul %65, %66, %cst_32 {dimension_numbers = #tpu.dot_dimension_numbers<[1], [0], [0], [1], [0, 0, 1, 1], [], []>} : vector<8x8xf32>, vector<8x8xf32>, vector<8x8xf32> -> vector<8x8xf32>
    %c0_33 = arith.constant 0 : index
    %c8 = arith.constant 8 : index
    %68 = vector.load %arg33[%c0_33, %c8] : memref<8x32xf32, #tpu.memory_space<vmem>>, vector<8x8xf32>
    tpu.vector_store %arg33[%c0_33, %c8], %67 {strides = array<i32>} : memref<8x32xf32, #tpu.memory_space<vmem>>, vector<8x8xf32>,
    %69 = vector.extract_strided_slice %32 {offsets = [0, 16], sizes = [8, 8], strides = [1, 1]} : vector<8x32xf32> to vector<8x8xf32>
    %70 = vector.extract_strided_slice %33 {offsets = [0, 16], sizes = [8, 8], strides = [1, 1]} : vector<8x32xf32> to vector<8x8xf32>
    "tpu.trace_start"() <{level = 10 : i32, message = "nd,md->nm"}> : () -> ()
    %cst_34 = arith.constant dense<0.000000e+00> : vector<8x8xf32>
    %71 = tpu.matmul %69, %70, %cst_34 {dimension_numbers = #tpu.dot_dimension_numbers<[1], [1], [0], [0], [0, 0, 1, 0], [], []>} : vector<8x8xf32>, vector<8x8xf32>, vector<8x8xf32> -> vector<8x8xf32>
    "tpu.trace_stop"() : () -> ()
    %cst_35 = arith.constant 0.353553385 : f32
    %72 = vector.broadcast %cst_35 : f32 to vector<8x8xf32>
    %73 = arith.mulf %71, %72 : vector<8x8xf32>
    %cst_36 = arith.constant dense<0xFF800000> : vector<8xf32>
    %74 = vector.multi_reduction <maximumf>, %73, %cst_36 [1] : vector<8x8xf32> to vector<8xf32>
    %75 = vector.shape_cast %74 : vector<8xf32> to vector<8x1xf32>
    %76 = vector.broadcast %75 : vector<8x1xf32> to vector<8x8xf32>
    %77 = arith.subf %73, %76 : vector<8x8xf32>
    %78 = math.exp %77 : vector<8x8xf32>
    %cst_37 = arith.constant dense<0.000000e+00> : vector<8xf32>
    %79 = vector.multi_reduction <add>, %78, %cst_37 [1] : vector<8x8xf32> to vector<8xf32>
    %80 = vector.shape_cast %79 : vector<8xf32> to vector<8x1xf32>
    %81 = vector.broadcast %80 : vector<8x1xf32> to vector<8x8xf32>
    %82 = arith.divf %78, %81 : vector<8x8xf32>
    %83 = vector.extract_strided_slice %34 {offsets = [0, 16], sizes = [8, 8], strides = [1, 1]} : vector<8x32xf32> to vector<8x8xf32>
    %cst_38 = arith.constant dense<0.000000e+00> : vector<8x8xf32>
    %84 = tpu.matmul %82, %83, %cst_38 {dimension_numbers = #tpu.dot_dimension_numbers<[1], [0], [0], [1], [0, 0, 1, 1], [], []>} : vector<8x8xf32>, vector<8x8xf32>, vector<8x8xf32> -> vector<8x8xf32>
    %c0_39 = arith.constant 0 : index
    %c16 = arith.constant 16 : index
    %85 = vector.load %arg33[%c0_39, %c16] : memref<8x32xf32, #tpu.memory_space<vmem>>, vector<8x8xf32>
    tpu.vector_store %arg33[%c0_39, %c16], %84 {strides = array<i32>} : memref<8x32xf32, #tpu.memory_space<vmem>>, vector<8x8xf32>,
    %86 = vector.extract_strided_slice %32 {offsets = [0, 24], sizes = [8, 8], strides = [1, 1]} : vector<8x32xf32> to vector<8x8xf32>
    %87 = vector.extract_strided_slice %33 {offsets = [0, 24], sizes = [8, 8], strides = [1, 1]} : vector<8x32xf32> to vector<8x8xf32>
    "tpu.trace_start"() <{level = 10 : i32, message = "nd,md->nm"}> : () -> ()
    %cst_40 = arith.constant dense<0.000000e+00> : vector<8x8xf32>
    %88 = tpu.matmul %86, %87, %cst_40 {dimension_numbers = #tpu.dot_dimension_numbers<[1], [1], [0], [0], [0, 0, 1, 0], [], []>} : vector<8x8xf32>, vector<8x8xf32>, vector<8x8xf32> -> vector<8x8xf32>
    "tpu.trace_stop"() : () -> ()
    %cst_41 = arith.constant 0.353553385 : f32
    %89 = vector.broadcast %cst_41 : f32 to vector<8x8xf32>
    %90 = arith.mulf %88, %89 : vector<8x8xf32>
    %cst_42 = arith.constant dense<0xFF800000> : vector<8xf32>
    %91 = vector.multi_reduction <maximumf>, %90, %cst_42 [1] : vector<8x8xf32> to vector<8xf32>
    %92 = vector.shape_cast %91 : vector<8xf32> to vector<8x1xf32>
    %93 = vector.broadcast %92 : vector<8x1xf32> to vector<8x8xf32>
    %94 = arith.subf %90, %93 : vector<8x8xf32>
    %95 = math.exp %94 : vector<8x8xf32>
    %cst_43 = arith.constant dense<0.000000e+00> : vector<8xf32>
    %96 = vector.multi_reduction <add>, %95, %cst_43 [1] : vector<8x8xf32> to vector<8xf32>
    %97 = vector.shape_cast %96 : vector<8xf32> to vector<8x1xf32>
    %98 = vector.broadcast %97 : vector<8x1xf32> to vector<8x8xf32>
    %99 = arith.divf %95, %98 : vector<8x8xf32>
    %100 = vector.extract_strided_slice %34 {offsets = [0, 24], sizes = [8, 8], strides = [1, 1]} : vector<8x32xf32> to vector<8x8xf32>
    %cst_44 = arith.constant dense<0.000000e+00> : vector<8x8xf32>
    %101 = tpu.matmul %99, %100, %cst_44 {dimension_numbers = #tpu.dot_dimension_numbers<[1], [0], [0], [1], [0, 0, 1, 1], [], []>} : vector<8x8xf32>, vector<8x8xf32>, vector<8x8xf32> -> vector<8x8xf32>
    %c0_45 = arith.constant 0 : index
    %c24 = arith.constant 24 : index
    %102 = vector.load %arg33[%c0_45, %c24] : memref<8x32xf32, #tpu.memory_space<vmem>>, vector<8x8xf32>
    tpu.vector_store %arg33[%c0_45, %c24], %101 {strides = array<i32>} : memref<8x32xf32, #tpu.memory_space<vmem>>, vector<8x8xf32>,
    %c0_46 = arith.constant 0 : index
    %c0_47 = arith.constant 0 : index
    %103 = vector.load %arg33[%c0_46, %c0_47] : memref<8x32xf32, #tpu.memory_space<vmem>>, vector<8x32xf32>
    %cst_48 = arith.constant dense<0.000000e+00> : vector<8x32xf32>
    %104 = tpu.matmul %103, %26, %cst_48 {dimension_numbers = #tpu.dot_dimension_numbers<[1], [0], [0], [1], [0, 0, 1, 1], [], []>} : vector<8x32xf32>, vector<32x32xf32>, vector<8x32xf32> -> vector<8x32xf32>
    %105 = vector.broadcast %28 : vector<1x32xf32> to vector<8x32xf32>
    %106 = arith.addf %104, %105 : vector<8x32xf32>
    %107 = arith.addf %3, %106 : vector<8x32xf32>
    %cst_49 = arith.constant dense<0.000000e+00> : vector<8xf32>
    %108 = vector.multi_reduction <add>, %107, %cst_49 [1] : vector<8x32xf32> to vector<8xf32>
    %109 = vector.shape_cast %108 : vector<8xf32> to vector<8x1xf32>
    %cst_50 = arith.constant 3.200000e+01 : f32
    %110 = vector.broadcast %cst_50 : f32 to vector<8x1xf32>
    %111 = arith.divf %109, %110 : vector<8x1xf32>
    %112 = vector.broadcast %111 : vector<8x1xf32> to vector<8x32xf32>
    %113 = arith.subf %107, %112 : vector<8x32xf32>
    %114 = arith.mulf %113, %113 : vector<8x32xf32>
    %cst_51 = arith.constant dense<0.000000e+00> : vector<8xf32>
    %115 = vector.multi_reduction <add>, %114, %cst_51 [1] : vector<8x32xf32> to vector<8xf32>
    %116 = vector.shape_cast %115 : vector<8xf32> to vector<8x1xf32>
    %cst_52 = arith.constant 3.100000e+01 : f32
    %117 = vector.broadcast %cst_52 : f32 to vector<8x1xf32>
    %118 = arith.divf %116, %117 : vector<8x1xf32>
    %119 = math.sqrt %118 : vector<8x1xf32>
    %cst_53 = arith.constant 9.99999997E-7 : f32
    %120 = vector.broadcast %cst_53 : f32 to vector<8x1xf32>
    %121 = arith.addf %119, %120 : vector<8x1xf32>
    %122 = vector.broadcast %121 : vector<8x1xf32> to vector<8x32xf32>
    %123 = arith.divf %113, %122 : vector<8x32xf32>
    %c0_54 = arith.constant 0 : index
    %c0_55 = arith.constant 0 : index
    %c0_56 = arith.constant 0 : index
    %124 = vector.load %arg18[%c0_54, %c0_55, %c0_56] : memref<1x32x32xf32, #tpu.memory_space<vmem>>, vector<1x32x32xf32>
    %125 = vector.shape_cast %124 : vector<1x32x32xf32> to vector<32x32xf32>
    %c0_57 = arith.constant 0 : index
    %c0_58 = arith.constant 0 : index
    %c0_59 = arith.constant 0 : index
    %126 = vector.load %arg19[%c0_57, %c0_58, %c0_59] : memref<1x1x32xf32, #tpu.memory_space<vmem>>, vector<1x1x32xf32>
    %127 = vector.shape_cast %126 : vector<1x1x32xf32> to vector<1x32xf32>
    %c0_60 = arith.constant 0 : index
    %c0_61 = arith.constant 0 : index
    %c0_62 = arith.constant 0 : index
    %128 = vector.load %arg20[%c0_60, %c0_61, %c0_62] : memref<1x32x64xf32, #tpu.memory_space<vmem>>, vector<1x32x64xf32>
    %129 = vector.shape_cast %128 : vector<1x32x64xf32> to vector<32x64xf32>
    %c0_63 = arith.constant 0 : index
    %c0_64 = arith.constant 0 : index
    %c0_65 = arith.constant 0 : index
    %130 = vector.load %arg21[%c0_63, %c0_64, %c0_65] : memref<1x1x64xf32, #tpu.memory_space<vmem>>, vector<1x1x64xf32>
    %131 = vector.shape_cast %130 : vector<1x1x64xf32> to vector<1x64xf32>
    %c0_66 = arith.constant 0 : index
    %c0_67 = arith.constant 0 : index
    %c0_68 = arith.constant 0 : index
    %132 = vector.load %arg22[%c0_66, %c0_67, %c0_68] : memref<1x32x32xf32, #tpu.memory_space<vmem>>, vector<1x32x32xf32>
    %133 = vector.shape_cast %132 : vector<1x32x32xf32> to vector<32x32xf32>
    %c0_69 = arith.constant 0 : index
    %c0_70 = arith.constant 0 : index
    %c0_71 = arith.constant 0 : index
    %134 = vector.load %arg23[%c0_69, %c0_70, %c0_71] : memref<1x1x32xf32, #tpu.memory_space<vmem>>, vector<1x1x32xf32>
    %135 = vector.shape_cast %134 : vector<1x1x32xf32> to vector<1x32xf32>
    %cst_72 = arith.constant dense<0.000000e+00> : vector<8x32xf32>
    %136 = tpu.matmul %123, %125, %cst_72 {dimension_numbers = #tpu.dot_dimension_numbers<[1], [0], [0], [1], [0, 0, 1, 1], [], []>} : vector<8x32xf32>, vector<32x32xf32>, vector<8x32xf32> -> vector<8x32xf32>
    %137 = vector.broadcast %127 : vector<1x32xf32> to vector<8x32xf32>
    %138 = arith.addf %136, %137 : vector<8x32xf32>
    %cst_73 = arith.constant dense<0.000000e+00> : vector<8x64xf32>
    %139 = tpu.matmul %4, %129, %cst_73 {dimension_numbers = #tpu.dot_dimension_numbers<[1], [0], [0], [1], [0, 0, 1, 1], [], []>} : vector<8x32xf32>, vector<32x64xf32>, vector<8x64xf32> -> vector<8x64xf32>
    %140 = vector.broadcast %131 : vector<1x64xf32> to vector<8x64xf32>
    %141 = arith.addf %139, %140 : vector<8x64xf32>
    %142 = vector.extract_strided_slice %141 {offsets = [0, 0], sizes = [8, 32], strides = [1, 1]} : vector<8x64xf32> to vector<8x32xf32>
    %143 = vector.extract_strided_slice %141 {offsets = [0, 32], sizes = [8, 32], strides = [1, 1]} : vector<8x64xf32> to vector<8x32xf32>
    %144 = vector.extract_strided_slice %138 {offsets = [0, 0], sizes = [8, 8], strides = [1, 1]} : vector<8x32xf32> to vector<8x8xf32>
    %145 = vector.extract_strided_slice %142 {offsets = [0, 0], sizes = [8, 8], strides = [1, 1]} : vector<8x32xf32> to vector<8x8xf32>
    "tpu.trace_start"() <{level = 10 : i32, message = "nd,md->nm"}> : () -> ()
    %cst_74 = arith.constant dense<0.000000e+00> : vector<8x8xf32>
    %146 = tpu.matmul %144, %145, %cst_74 {dimension_numbers = #tpu.dot_dimension_numbers<[1], [1], [0], [0], [0, 0, 1, 0], [], []>} : vector<8x8xf32>, vector<8x8xf32>, vector<8x8xf32> -> vector<8x8xf32>
    "tpu.trace_stop"() : () -> ()
    %cst_75 = arith.constant 0.353553385 : f32
    %147 = vector.broadcast %cst_75 : f32 to vector<8x8xf32>
    %148 = arith.mulf %146, %147 : vector<8x8xf32>
    %cst_76 = arith.constant dense<0xFF800000> : vector<8xf32>
    %149 = vector.multi_reduction <maximumf>, %148, %cst_76 [1] : vector<8x8xf32> to vector<8xf32>
    %150 = vector.shape_cast %149 : vector<8xf32> to vector<8x1xf32>
    %151 = vector.broadcast %150 : vector<8x1xf32> to vector<8x8xf32>
    %152 = arith.subf %148, %151 : vector<8x8xf32>
    %153 = math.exp %152 : vector<8x8xf32>
    %cst_77 = arith.constant dense<0.000000e+00> : vector<8xf32>
    %154 = vector.multi_reduction <add>, %153, %cst_77 [1] : vector<8x8xf32> to vector<8xf32>
    %155 = vector.shape_cast %154 : vector<8xf32> to vector<8x1xf32>
    %156 = vector.broadcast %155 : vector<8x1xf32> to vector<8x8xf32>
    %157 = arith.divf %153, %156 : vector<8x8xf32>
    %158 = vector.extract_strided_slice %143 {offsets = [0, 0], sizes = [8, 8], strides = [1, 1]} : vector<8x32xf32> to vector<8x8xf32>
    %cst_78 = arith.constant dense<0.000000e+00> : vector<8x8xf32>
    %159 = tpu.matmul %157, %158, %cst_78 {dimension_numbers = #tpu.dot_dimension_numbers<[1], [0], [0], [1], [0, 0, 1, 1], [], []>} : vector<8x8xf32>, vector<8x8xf32>, vector<8x8xf32> -> vector<8x8xf32>
    %c0_79 = arith.constant 0 : index
    %c0_80 = arith.constant 0 : index
    %160 = vector.load %arg33[%c0_79, %c0_80] : memref<8x32xf32, #tpu.memory_space<vmem>>, vector<8x8xf32>
    tpu.vector_store %arg33[%c0_79, %c0_80], %159 {strides = array<i32>} : memref<8x32xf32, #tpu.memory_space<vmem>>, vector<8x8xf32>,
    %161 = vector.extract_strided_slice %138 {offsets = [0, 8], sizes = [8, 8], strides = [1, 1]} : vector<8x32xf32> to vector<8x8xf32>
    %162 = vector.extract_strided_slice %142 {offsets = [0, 8], sizes = [8, 8], strides = [1, 1]} : vector<8x32xf32> to vector<8x8xf32>
    "tpu.trace_start"() <{level = 10 : i32, message = "nd,md->nm"}> : () -> ()
    %cst_81 = arith.constant dense<0.000000e+00> : vector<8x8xf32>
    %163 = tpu.matmul %161, %162, %cst_81 {dimension_numbers = #tpu.dot_dimension_numbers<[1], [1], [0], [0], [0, 0, 1, 0], [], []>} : vector<8x8xf32>, vector<8x8xf32>, vector<8x8xf32> -> vector<8x8xf32>
    "tpu.trace_stop"() : () -> ()
    %cst_82 = arith.constant 0.353553385 : f32
    %164 = vector.broadcast %cst_82 : f32 to vector<8x8xf32>
    %165 = arith.mulf %163, %164 : vector<8x8xf32>
    %cst_83 = arith.constant dense<0xFF800000> : vector<8xf32>
    %166 = vector.multi_reduction <maximumf>, %165, %cst_83 [1] : vector<8x8xf32> to vector<8xf32>
    %167 = vector.shape_cast %166 : vector<8xf32> to vector<8x1xf32>
    %168 = vector.broadcast %167 : vector<8x1xf32> to vector<8x8xf32>
    %169 = arith.subf %165, %168 : vector<8x8xf32>
    %170 = math.exp %169 : vector<8x8xf32>
    %cst_84 = arith.constant dense<0.000000e+00> : vector<8xf32>
    %171 = vector.multi_reduction <add>, %170, %cst_84 [1] : vector<8x8xf32> to vector<8xf32>
    %172 = vector.shape_cast %171 : vector<8xf32> to vector<8x1xf32>
    %173 = vector.broadcast %172 : vector<8x1xf32> to vector<8x8xf32>
    %174 = arith.divf %170, %173 : vector<8x8xf32>
    %175 = vector.extract_strided_slice %143 {offsets = [0, 8], sizes = [8, 8], strides = [1, 1]} : vector<8x32xf32> to vector<8x8xf32>
    %cst_85 = arith.constant dense<0.000000e+00> : vector<8x8xf32>
    %176 = tpu.matmul %174, %175, %cst_85 {dimension_numbers = #tpu.dot_dimension_numbers<[1], [0], [0], [1], [0, 0, 1, 1], [], []>} : vector<8x8xf32>, vector<8x8xf32>, vector<8x8xf32> -> vector<8x8xf32>
    %c0_86 = arith.constant 0 : index
    %c8_87 = arith.constant 8 : index
    %177 = vector.load %arg33[%c0_86, %c8_87] : memref<8x32xf32, #tpu.memory_space<vmem>>, vector<8x8xf32>
    tpu.vector_store %arg33[%c0_86, %c8_87], %176 {strides = array<i32>} : memref<8x32xf32, #tpu.memory_space<vmem>>, vector<8x8xf32>,
    %178 = vector.extract_strided_slice %138 {offsets = [0, 16], sizes = [8, 8], strides = [1, 1]} : vector<8x32xf32> to vector<8x8xf32>
    %179 = vector.extract_strided_slice %142 {offsets = [0, 16], sizes = [8, 8], strides = [1, 1]} : vector<8x32xf32> to vector<8x8xf32>
    "tpu.trace_start"() <{level = 10 : i32, message = "nd,md->nm"}> : () -> ()
    %cst_88 = arith.constant dense<0.000000e+00> : vector<8x8xf32>
    %180 = tpu.matmul %178, %179, %cst_88 {dimension_numbers = #tpu.dot_dimension_numbers<[1], [1], [0], [0], [0, 0, 1, 0], [], []>} : vector<8x8xf32>, vector<8x8xf32>, vector<8x8xf32> -> vector<8x8xf32>
    "tpu.trace_stop"() : () -> ()
    %cst_89 = arith.constant 0.353553385 : f32
    %181 = vector.broadcast %cst_89 : f32 to vector<8x8xf32>
    %182 = arith.mulf %180, %181 : vector<8x8xf32>
    %cst_90 = arith.constant dense<0xFF800000> : vector<8xf32>
    %183 = vector.multi_reduction <maximumf>, %182, %cst_90 [1] : vector<8x8xf32> to vector<8xf32>
    %184 = vector.shape_cast %183 : vector<8xf32> to vector<8x1xf32>
    %185 = vector.broadcast %184 : vector<8x1xf32> to vector<8x8xf32>
    %186 = arith.subf %182, %185 : vector<8x8xf32>
    %187 = math.exp %186 : vector<8x8xf32>
    %cst_91 = arith.constant dense<0.000000e+00> : vector<8xf32>
    %188 = vector.multi_reduction <add>, %187, %cst_91 [1] : vector<8x8xf32> to vector<8xf32>
    %189 = vector.shape_cast %188 : vector<8xf32> to vector<8x1xf32>
    %190 = vector.broadcast %189 : vector<8x1xf32> to vector<8x8xf32>
    %191 = arith.divf %187, %190 : vector<8x8xf32>
    %192 = vector.extract_strided_slice %143 {offsets = [0, 16], sizes = [8, 8], strides = [1, 1]} : vector<8x32xf32> to vector<8x8xf32>
    %cst_92 = arith.constant dense<0.000000e+00> : vector<8x8xf32>
    %193 = tpu.matmul %191, %192, %cst_92 {dimension_numbers = #tpu.dot_dimension_numbers<[1], [0], [0], [1], [0, 0, 1, 1], [], []>} : vector<8x8xf32>, vector<8x8xf32>, vector<8x8xf32> -> vector<8x8xf32>
    %c0_93 = arith.constant 0 : index
    %c16_94 = arith.constant 16 : index
    %194 = vector.load %arg33[%c0_93, %c16_94] : memref<8x32xf32, #tpu.memory_space<vmem>>, vector<8x8xf32>
    tpu.vector_store %arg33[%c0_93, %c16_94], %193 {strides = array<i32>} : memref<8x32xf32, #tpu.memory_space<vmem>>, vector<8x8xf32>,
    %195 = vector.extract_strided_slice %138 {offsets = [0, 24], sizes = [8, 8], strides = [1, 1]} : vector<8x32xf32> to vector<8x8xf32>
    %196 = vector.extract_strided_slice %142 {offsets = [0, 24], sizes = [8, 8], strides = [1, 1]} : vector<8x32xf32> to vector<8x8xf32>
    "tpu.trace_start"() <{level = 10 : i32, message = "nd,md->nm"}> : () -> ()
    %cst_95 = arith.constant dense<0.000000e+00> : vector<8x8xf32>
    %197 = tpu.matmul %195, %196, %cst_95 {dimension_numbers = #tpu.dot_dimension_numbers<[1], [1], [0], [0], [0, 0, 1, 0], [], []>} : vector<8x8xf32>, vector<8x8xf32>, vector<8x8xf32> -> vector<8x8xf32>
    "tpu.trace_stop"() : () -> ()
    %cst_96 = arith.constant 0.353553385 : f32
    %198 = vector.broadcast %cst_96 : f32 to vector<8x8xf32>
    %199 = arith.mulf %197, %198 : vector<8x8xf32>
    %cst_97 = arith.constant dense<0xFF800000> : vector<8xf32>
    %200 = vector.multi_reduction <maximumf>, %199, %cst_97 [1] : vector<8x8xf32> to vector<8xf32>
    %201 = vector.shape_cast %200 : vector<8xf32> to vector<8x1xf32>
    %202 = vector.broadcast %201 : vector<8x1xf32> to vector<8x8xf32>
    %203 = arith.subf %199, %202 : vector<8x8xf32>
    %204 = math.exp %203 : vector<8x8xf32>
    %cst_98 = arith.constant dense<0.000000e+00> : vector<8xf32>
    %205 = vector.multi_reduction <add>, %204, %cst_98 [1] : vector<8x8xf32> to vector<8xf32>
    %206 = vector.shape_cast %205 : vector<8xf32> to vector<8x1xf32>
    %207 = vector.broadcast %206 : vector<8x1xf32> to vector<8x8xf32>
    %208 = arith.divf %204, %207 : vector<8x8xf32>
    %209 = vector.extract_strided_slice %143 {offsets = [0, 24], sizes = [8, 8], strides = [1, 1]} : vector<8x32xf32> to vector<8x8xf32>
    %cst_99 = arith.constant dense<0.000000e+00> : vector<8x8xf32>
    %210 = tpu.matmul %208, %209, %cst_99 {dimension_numbers = #tpu.dot_dimension_numbers<[1], [0], [0], [1], [0, 0, 1, 1], [], []>} : vector<8x8xf32>, vector<8x8xf32>, vector<8x8xf32> -> vector<8x8xf32>
    %c0_100 = arith.constant 0 : index
    %c24_101 = arith.constant 24 : index
    %211 = vector.load %arg33[%c0_100, %c24_101] : memref<8x32xf32, #tpu.memory_space<vmem>>, vector<8x8xf32>
    tpu.vector_store %arg33[%c0_100, %c24_101], %210 {strides = array<i32>} : memref<8x32xf32, #tpu.memory_space<vmem>>, vector<8x8xf32>,
    %c0_102 = arith.constant 0 : index
    %c0_103 = arith.constant 0 : index
    %212 = vector.load %arg33[%c0_102, %c0_103] : memref<8x32xf32, #tpu.memory_space<vmem>>, vector<8x32xf32>
    %cst_104 = arith.constant dense<0.000000e+00> : vector<8x32xf32>
    %213 = tpu.matmul %212, %133, %cst_104 {dimension_numbers = #tpu.dot_dimension_numbers<[1], [0], [0], [1], [0, 0, 1, 1], [], []>} : vector<8x32xf32>, vector<32x32xf32>, vector<8x32xf32> -> vector<8x32xf32>
    %214 = vector.broadcast %135 : vector<1x32xf32> to vector<8x32xf32>
    %215 = arith.addf %213, %214 : vector<8x32xf32>
    %216 = arith.addf %107, %215 : vector<8x32xf32>
    %cst_105 = arith.constant dense<0.000000e+00> : vector<8xf32>
    %217 = vector.multi_reduction <add>, %216, %cst_105 [1] : vector<8x32xf32> to vector<8xf32>
    %218 = vector.shape_cast %217 : vector<8xf32> to vector<8x1xf32>
    %cst_106 = arith.constant 3.200000e+01 : f32
    %219 = vector.broadcast %cst_106 : f32 to vector<8x1xf32>
    %220 = arith.divf %218, %219 : vector<8x1xf32>
    %221 = vector.broadcast %220 : vector<8x1xf32> to vector<8x32xf32>
    %222 = arith.subf %216, %221 : vector<8x32xf32>
    %223 = arith.mulf %222, %222 : vector<8x32xf32>
    %cst_107 = arith.constant dense<0.000000e+00> : vector<8xf32>
    %224 = vector.multi_reduction <add>, %223, %cst_107 [1] : vector<8x32xf32> to vector<8xf32>
    %225 = vector.shape_cast %224 : vector<8xf32> to vector<8x1xf32>
    %cst_108 = arith.constant 3.100000e+01 : f32
    %226 = vector.broadcast %cst_108 : f32 to vector<8x1xf32>
    %227 = arith.divf %225, %226 : vector<8x1xf32>
    %228 = math.sqrt %227 : vector<8x1xf32>
    %cst_109 = arith.constant 9.99999997E-7 : f32
    %229 = vector.broadcast %cst_109 : f32 to vector<8x1xf32>
    %230 = arith.addf %228, %229 : vector<8x1xf32>
    %231 = vector.broadcast %230 : vector<8x1xf32> to vector<8x32xf32>
    %232 = arith.divf %222, %231 : vector<8x32xf32>
    %c0_110 = arith.constant 0 : index
    %c0_111 = arith.constant 0 : index
    %c0_112 = arith.constant 0 : index
    %233 = vector.load %arg24[%c0_110, %c0_111, %c0_112] : memref<1x32x64xf32, #tpu.memory_space<vmem>>, vector<1x32x64xf32>
    %234 = vector.shape_cast %233 : vector<1x32x64xf32> to vector<32x64xf32>
    %c0_113 = arith.constant 0 : index
    %c0_114 = arith.constant 0 : index
    %c0_115 = arith.constant 0 : index
    %235 = vector.load %arg25[%c0_113, %c0_114, %c0_115] : memref<1x1x64xf32, #tpu.memory_space<vmem>>, vector<1x1x64xf32>
    %236 = vector.shape_cast %235 : vector<1x1x64xf32> to vector<1x64xf32>
    %c0_116 = arith.constant 0 : index
    %c0_117 = arith.constant 0 : index
    %c0_118 = arith.constant 0 : index
    %237 = vector.load %arg26[%c0_116, %c0_117, %c0_118] : memref<1x64x32xf32, #tpu.memory_space<vmem>>, vector<1x64x32xf32>
    %238 = vector.shape_cast %237 : vector<1x64x32xf32> to vector<64x32xf32>
    %c0_119 = arith.constant 0 : index
    %c0_120 = arith.constant 0 : index
    %c0_121 = arith.constant 0 : index
    %239 = vector.load %arg27[%c0_119, %c0_120, %c0_121] : memref<1x1x32xf32, #tpu.memory_space<vmem>>, vector<1x1x32xf32>
    %240 = vector.shape_cast %239 : vector<1x1x32xf32> to vector<1x32xf32>
    %cst_122 = arith.constant dense<0.000000e+00> : vector<8x64xf32>
    %241 = tpu.matmul %232, %234, %cst_122 {dimension_numbers = #tpu.dot_dimension_numbers<[1], [0], [0], [1], [0, 0, 1, 1], [], []>} : vector<8x32xf32>, vector<32x64xf32>, vector<8x64xf32> -> vector<8x64xf32>
    %242 = vector.broadcast %236 : vector<1x64xf32> to vector<8x64xf32>
    %243 = arith.addf %241, %242 : vector<8x64xf32>
    %cst_123 = arith.constant 0.000000e+00 : f32
    %244 = vector.broadcast %cst_123 : f32 to vector<8x64xf32>
    %245 = arith.maximumf %243, %244 : vector<8x64xf32>
    %cst_124 = arith.constant dense<0.000000e+00> : vector<8x32xf32>
    %246 = tpu.matmul %245, %238, %cst_124 {dimension_numbers = #tpu.dot_dimension_numbers<[1], [0], [0], [1], [0, 0, 1, 1], [], []>} : vector<8x64xf32>, vector<64x32xf32>, vector<8x32xf32> -> vector<8x32xf32>
    %247 = vector.broadcast %240 : vector<1x32xf32> to vector<8x32xf32>
    %248 = arith.addf %246, %247 : vector<8x32xf32>
    %249 = arith.addf %216, %248 : vector<8x32xf32>
    %c0_125 = arith.constant 0 : index
    %c0_126 = arith.constant 0 : index
    %250 = vector.load %arg32[%c0_125, %c0_126] : memref<8x32xf32, #tpu.memory_space<vmem>>, vector<8x32xf32>
    tpu.vector_store %arg32[%c0_125, %c0_126], %249 {strides = array<i32>} : memref<8x32xf32, #tpu.memory_space<vmem>>, vector<8x32xf32>,
    %c1_i32 = arith.constant 1 : i32
    %251 = arith.cmpi eq, %arg1, %c1_i32 : i32
    %252 = arith.extui %251 : i1 to i32
    %c0_i32_127 = arith.constant 0 : i32
    %253 = arith.cmpi ne, %252, %c0_i32_127 : i32
    scf.if %253 {
      %c0_128 = arith.constant 0 : index
      %c0_129 = arith.constant 0 : index
      %254 = vector.load %arg32[%c0_128, %c0_129] : memref<8x32xf32, #tpu.memory_space<vmem>>, vector<8x32xf32>
      %cst_130 = arith.constant dense<0.000000e+00> : vector<8xf32>
      %255 = vector.multi_reduction <add>, %254, %cst_130 [1] : vector<8x32xf32> to vector<8xf32>
      %256 = vector.shape_cast %255 : vector<8xf32> to vector<8x1xf32>
      %cst_131 = arith.constant 3.200000e+01 : f32
      %257 = vector.broadcast %cst_131 : f32 to vector<8x1xf32>
      %258 = arith.divf %256, %257 : vector<8x1xf32>
      %259 = vector.broadcast %258 : vector<8x1xf32> to vector<8x32xf32>
      %260 = arith.subf %254, %259 : vector<8x32xf32>
      %261 = arith.mulf %260, %260 : vector<8x32xf32>
      %cst_132 = arith.constant dense<0.000000e+00> : vector<8xf32>
      %262 = vector.multi_reduction <add>, %261, %cst_132 [1] : vector<8x32xf32> to vector<8xf32>
      %263 = vector.shape_cast %262 : vector<8xf32> to vector<8x1xf32>
      %cst_133 = arith.constant 3.100000e+01 : f32
      %264 = vector.broadcast %cst_133 : f32 to vector<8x1xf32>
      %265 = arith.divf %263, %264 : vector<8x1xf32>
      %266 = math.sqrt %265 : vector<8x1xf32>
      %cst_134 = arith.constant 9.99999997E-7 : f32
      %267 = vector.broadcast %cst_134 : f32 to vector<8x1xf32>
      %268 = arith.addf %266, %267 : vector<8x1xf32>
      %269 = vector.broadcast %268 : vector<8x1xf32> to vector<8x32xf32>
      %270 = arith.divf %260, %269 : vector<8x32xf32>
      %c0_135 = arith.constant 0 : index
      %c0_136 = arith.constant 0 : index
      %271 = vector.load %arg28[%c0_135, %c0_136] : memref<32x128xf32, #tpu.memory_space<vmem>>, vector<32x128xf32>
      %cst_137 = arith.constant dense<0.000000e+00> : vector<8x128xf32>
      %272 = tpu.matmul %270, %271, %cst_137 {dimension_numbers = #tpu.dot_dimension_numbers<[1], [0], [0], [1], [0, 0, 1, 1], [], []>} : vector<8x32xf32>, vector<32x128xf32>, vector<8x128xf32> -> vector<8x128xf32>
      %c0_138 = arith.constant 0 : index
      %c0_139 = arith.constant 0 : index
      %273 = vector.load %arg29[%c0_138, %c0_139] : memref<1x128xf32, #tpu.memory_space<vmem>>, vector<1x128xf32>
      %274 = vector.broadcast %273 : vector<1x128xf32> to vector<8x128xf32>
      %275 = arith.addf %272, %274 : vector<8x128xf32>
      %c0_140 = arith.constant 0 : index
      %c0_141 = arith.constant 0 : index
      %c0_142 = arith.constant 0 : index
      %276 = vector.load %arg30[%c0_140, %c0_141, %c0_142] : memref<1x8x128xf32, #tpu.memory_space<vmem>>, vector<1x8x128xf32>
      %277 = vector.shape_cast %276 : vector<1x8x128xf32> to vector<8x128xf32>
      %278 = vector.shape_cast %275 : vector<8x128xf32> to vector<1x8x128xf32>
      tpu.vector_store %arg30[%c0_140, %c0_141, %c0_142], %278 {strides = array<i32>} : memref<1x8x128xf32, #tpu.memory_space<vmem>>, vector<1x8x128xf32>,
    } else {
    }
    return
  }
  func.func @transform_0(%arg0: i32, %arg1: i32) -> (i32, i32, i32) {
    %c0_i32 = arith.constant 0 : i32
    %c0_i32_0 = arith.constant 0 : i32
    %c0_i32_1 = arith.constant 0 : i32
    return %arg0, %c0_i32, %c0_i32_0 : i32, i32, i32
  }
  func.func @transform_1(%arg0: i32, %arg1: i32) -> (i32, i32) {
    %c0_i32 = arith.constant 0 : i32
    %c0_i32_0 = arith.constant 0 : i32
    %c0_i32_1 = arith.constant 0 : i32
    return %c0_i32, %c0_i32_0 : i32, i32
  }
  func.func @transform_2(%arg0: i32, %arg1: i32) -> (i32, i32) {
    %c0_i32 = arith.constant 0 : i32
    %c0_i32_0 = arith.constant 0 : i32
    %c0_i32_1 = arith.constant 0 : i32
    return %c0_i32, %c0_i32_0 : i32, i32
  }
  func.func @transform_3(%arg0: i32, %arg1: i32) -> (i32, i32) {
    %c0_i32 = arith.constant 0 : i32
    %c0_i32_0 = arith.constant 0 : i32
    %c0_i32_1 = arith.constant 0 : i32
    return %c0_i32, %c0_i32_0 : i32, i32
  }
  func.func @transform_4(%arg0: i32, %arg1: i32) -> (i32, i32) {
    %c0_i32 = arith.constant 0 : i32
    %c0_i32_0 = arith.constant 0 : i32
    %c0_i32_1 = arith.constant 0 : i32
    return %c0_i32, %c0_i32_0 : i32, i32
  }
  func.func @transform_5(%arg0: i32, %arg1: i32) -> (i32, i32) {
    %c0_i32 = arith.constant 0 : i32
    %c0_i32_0 = arith.constant 0 : i32
    %c0_i32_1 = arith.constant 0 : i32
    return %c0_i32, %c0_i32_0 : i32, i32
  }
  func.func @transform_6(%arg0: i32, %arg1: i32) -> (i32, i32) {
    %c0_i32 = arith.constant 0 : i32
    %c0_i32_0 = arith.constant 0 : i32
    %c0_i32_1 = arith.constant 0 : i32
    return %c0_i32, %c0_i32_0 : i32, i32
  }
  func.func @transform_7(%arg0: i32, %arg1: i32) -> (i32, i32) {
    %c0_i32 = arith.constant 0 : i32
    %c0_i32_0 = arith.constant 0 : i32
    %c0_i32_1 = arith.constant 0 : i32
    return %c0_i32, %c0_i32_0 : i32, i32
  }
  func.func @transform_8(%arg0: i32, %arg1: i32) -> (i32, i32) {
    %c0_i32 = arith.constant 0 : i32
    %c0_i32_0 = arith.constant 0 : i32
    %c0_i32_1 = arith.constant 0 : i32
    return %c0_i32, %c0_i32_0 : i32, i32
  }
  func.func @transform_9(%arg0: i32, %arg1: i32) -> (i32, i32) {
    %c0_i32 = arith.constant 0 : i32
    %c0_i32_0 = arith.constant 0 : i32
    %c0_i32_1 = arith.constant 0 : i32
    return %c0_i32, %c0_i32_0 : i32, i32
  }
  func.func @transform_10(%arg0: i32, %arg1: i32) -> (i32, i32) {
    %c0_i32 = arith.constant 0 : i32
    %c0_i32_0 = arith.constant 0 : i32
    %c0_i32_1 = arith.constant 0 : i32
    return %c0_i32, %c0_i32_0 : i32, i32
  }
  func.func @transform_11(%arg0: i32, %arg1: i32) -> (i32, i32) {
    %c0_i32 = arith.constant 0 : i32
    %c0_i32_0 = arith.constant 0 : i32
    %c0_i32_1 = arith.constant 0 : i32
    return %c0_i32, %c0_i32_0 : i32, i32
  }
  func.func @transform_12(%arg0: i32, %arg1: i32) -> (i32, i32, i32) {
    %c0_i32 = arith.constant 0 : i32
    %c0_i32_0 = arith.constant 0 : i32
    %c0_i32_1 = arith.constant 0 : i32
    return %arg1, %c0_i32, %c0_i32_0 : i32, i32, i32
  }
  func.func @transform_13(%arg0: i32, %arg1: i32) -> (i32, i32, i32) {
    %c0_i32 = arith.constant 0 : i32
    %c0_i32_0 = arith.constant 0 : i32
    %c0_i32_1 = arith.constant 0 : i32
    return %arg1, %c0_i32, %c0_i32_0 : i32, i32, i32
  }
  func.func @transform_14(%arg0: i32, %arg1: i32) -> (i32, i32, i32) {
    %c0_i32 = arith.constant 0 : i32
    %c0_i32_0 = arith.constant 0 : i32
    %c0_i32_1 = arith.constant 0 : i32
    return %arg1, %c0_i32, %c0_i32_0 : i32, i32, i32
  }
  func.func @transform_15(%arg0: i32, %arg1: i32) -> (i32, i32, i32) {
    %c0_i32 = arith.constant 0 : i32
    %c0_i32_0 = arith.constant 0 : i32
    %c0_i32_1 = arith.constant 0 : i32
    return %arg1, %c0_i32, %c0_i32_0 : i32, i32, i32
  }
  func.func @transform_16(%arg0: i32, %arg1: i32) -> (i32, i32, i32) {
    %c0_i32 = arith.constant 0 : i32
    %c0_i32_0 = arith.constant 0 : i32
    %c0_i32_1 = arith.constant 0 : i32
    return %arg1, %c0_i32, %c0_i32_0 : i32, i32, i32
  }
  func.func @transform_17(%arg0: i32, %arg1: i32) -> (i32, i32, i32) {
    %c0_i32 = arith.constant 0 : i32
    %c0_i32_0 = arith.constant 0 : i32
    %c0_i32_1 = arith.constant 0 : i32
    return %arg1, %c0_i32, %c0_i32_0 : i32, i32, i32
  }
  func.func @transform_18(%arg0: i32, %arg1: i32) -> (i32, i32, i32) {
    %c0_i32 = arith.constant 0 : i32
    %c0_i32_0 = arith.constant 0 : i32
    %c0_i32_1 = arith.constant 0 : i32
    return %arg1, %c0_i32, %c0_i32_0 : i32, i32, i32
  }
  func.func @transform_19(%arg0: i32, %arg1: i32) -> (i32, i32, i32) {
    %c0_i32 = arith.constant 0 : i32
    %c0_i32_0 = arith.constant 0 : i32
    %c0_i32_1 = arith.constant 0 : i32
    return %arg1, %c0_i32, %c0_i32_0 : i32, i32, i32
  }
  func.func @transform_20(%arg0: i32, %arg1: i32) -> (i32, i32, i32) {
    %c0_i32 = arith.constant 0 : i32
    %c0_i32_0 = arith.constant 0 : i32
    %c0_i32_1 = arith.constant 0 : i32
    return %arg1, %c0_i32, %c0_i32_0 : i32, i32, i32
  }
  func.func @transform_21(%arg0: i32, %arg1: i32) -> (i32, i32, i32) {
    %c0_i32 = arith.constant 0 : i32
    %c0_i32_0 = arith.constant 0 : i32
    %c0_i32_1 = arith.constant 0 : i32
    return %arg1, %c0_i32, %c0_i32_0 : i32, i32, i32
  }
  func.func @transform_22(%arg0: i32, %arg1: i32) -> (i32, i32, i32) {
    %c0_i32 = arith.constant 0 : i32
    %c0_i32_0 = arith.constant 0 : i32
    %c0_i32_1 = arith.constant 0 : i32
    return %arg1, %c0_i32, %c0_i32_0 : i32, i32, i32
  }
  func.func @transform_23(%arg0: i32, %arg1: i32) -> (i32, i32, i32) {
    %c0_i32 = arith.constant 0 : i32
    %c0_i32_0 = arith.constant 0 : i32
    %c0_i32_1 = arith.constant 0 : i32
    return %arg1, %c0_i32, %c0_i32_0 : i32, i32, i32
  }
  func.func @transform_24(%arg0: i32, %arg1: i32) -> (i32, i32, i32) {
    %c0_i32 = arith.constant 0 : i32
    %c0_i32_0 = arith.constant 0 : i32
    %c0_i32_1 = arith.constant 0 : i32
    return %arg1, %c0_i32, %c0_i32_0 : i32, i32, i32
  }
  func.func @transform_25(%arg0: i32, %arg1: i32) -> (i32, i32, i32) {
    %c0_i32 = arith.constant 0 : i32
    %c0_i32_0 = arith.constant 0 : i32
    %c0_i32_1 = arith.constant 0 : i32
    return %arg1, %c0_i32, %c0_i32_0 : i32, i32, i32
  }
  func.func @transform_26(%arg0: i32, %arg1: i32) -> (i32, i32) {
    %c0_i32 = arith.constant 0 : i32
    %c0_i32_0 = arith.constant 0 : i32
    %c0_i32_1 = arith.constant 0 : i32
    return %c0_i32, %c0_i32_0 : i32, i32
  }
  func.func @transform_27(%arg0: i32, %arg1: i32) -> (i32, i32) {
    %c0_i32 = arith.constant 0 : i32
    %c0_i32_0 = arith.constant 0 : i32
    %c0_i32_1 = arith.constant 0 : i32
    return %c0_i32, %c0_i32_0 : i32, i32
  }
  func.func @transform_28(%arg0: i32, %arg1: i32) -> (i32, i32, i32) {
    %c0_i32 = arith.constant 0 : i32
    %c0_i32_0 = arith.constant 0 : i32
    %c0_i32_1 = arith.constant 0 : i32
    return %arg0, %c0_i32, %c0_i32_0 : i32, i32, i32
  }
}

</mosaic_0001>

<llo_original>
// kernel: gridformer_forward.1
$region0: #{gridformer_forward.1}
  #allocation0 [shape = 'u32[]', space=smem, size = 0x4, offset = 0x4, fixed_abs, tag = 'smem constant byte address 0x4 - core index']
  #allocation1 [shape = 'u32[144,128]{1,0:T(1,128)}', space=vmem, size = 0x12000, scoped, tag = 'internal scratch']
  #allocation2 [shape = 'f32[8,32]{1,0:T(8,128)}', space=vmem, size = 0x1000, scoped, tag = 'scratch operand']
  #allocation3 [shape = 'f32[8,32]{1,0:T(8,128)}', space=vmem, size = 0x1000, scoped, tag = 'scratch operand']
  #allocation4 [shape = 'f32[8,32]{1,0:T(8,128)}', space=vmem, size = 0x1000, scoped, tag = 'scratch operand']
  %s0 = inlined_call_operand.vmem [shape: f32[2,8,8], index: 0, kind: input, shape index: {}]
  %s1 = inlined_call_operand.vmem [shape: f32[8,32], index: 1, kind: input, shape index: {}]
  %s2 = inlined_call_operand.vmem [shape: f32[8,64], index: 2, kind: input, shape index: {}]
  %s3 = inlined_call_operand.vmem [shape: f32[1,64], index: 3, kind: input, shape index: {}]
  %s4 = inlined_call_operand.vmem [shape: f32[32,96], index: 4, kind: input, shape index: {}]
  %s5 = inlined_call_operand.vmem [shape: f32[1,96], index: 5, kind: input, shape index: {}]
  %s6 = inlined_call_operand.vmem [shape: f32[32,32], index: 6, kind: input, shape index: {}]
  %s7 = inlined_call_operand.vmem [shape: f32[1,32], index: 7, kind: input, shape index: {}]
  %s8 = inlined_call_operand.vmem [shape: f32[32,64], index: 8, kind: input, shape index: {}]
  %s9 = inlined_call_operand.vmem [shape: f32[1,64], index: 9, kind: input, shape index: {}]
  %s10 = inlined_call_operand.vmem [shape: f32[64,32], index: 10, kind: input, shape index: {}]
  %s11 = inlined_call_operand.vmem [shape: f32[1,32], index: 11, kind: input, shape index: {}]
  %s12 = inlined_call_operand.vmem [shape: f32[2,32,96], index: 12, kind: input, shape index: {}]
  %s13 = inlined_call_operand.vmem [shape: f32[2,1,96], index: 13, kind: input, shape index: {}]
  %s14 = inlined_call_operand.vmem [shape: f32[2,32,32], index: 14, kind: input, shape index: {}]
  %s15 = inlined_call_operand.vmem [shape: f32[2,1,32], index: 15, kind: input, shape index: {}]
  %s16 = inlined_call_operand.vmem [shape: f32[2,32,32], index: 16, kind: input, shape index: {}]
  %s17 = inlined_call_operand.vmem [shape: f32[2,1,32], index: 17, kind: input, shape index: {}]
  %s18 = inlined_call_operand.vmem [shape: f32[2,32,64], index: 18, kind: input, shape index: {}]
  %s19 = inlined_call_operand.vmem [shape: f32[2,1,64], index: 19, kind: input, shape index: {}]
  %s20 = inlined_call_operand.vmem [shape: f32[2,32,32], index: 20, kind: input, shape index: {}]
  %s21 = inlined_call_operand.vmem [shape: f32[2,1,32], index: 21, kind: input, shape index: {}]
  %s22 = inlined_call_operand.vmem [shape: f32[2,32,64], index: 22, kind: input, shape index: {}]
  %s23 = inlined_call_operand.vmem [shape: f32[2,1,64], index: 23, kind: input, shape index: {}]
  %s24 = inlined_call_operand.vmem [shape: f32[2,64,32], index: 24, kind: input, shape index: {}]
  %s25 = inlined_call_operand.vmem [shape: f32[2,1,32], index: 25, kind: input, shape index: {}]
  %s26 = inlined_call_operand.vmem [shape: f32[32,128], index: 26, kind: input, shape index: {}]
  %s27 = inlined_call_operand.vmem [shape: f32[1,128], index: 27, kind: input, shape index: {}]
  %s28 = inlined_call_operand.vmem [shape: f32[2,8,128], index: 28, kind: output, shape index: {}]
  %s29 = sld [smem:[#allocation0]]
  $region153: #{gridformer_forward.1} parent=0
    _
  %s31 = ssub.s32 1, %s29
  %s32 = scalar_select 0, %s31, %s29
  loop: start=0, step=1, limit=6
  $region2: #{gridformer_forward.1} parent=0 // loop_pre_header
    _
  $region3: #{gridformer_forward.1} parent=0 // loop_header
    %s34 = sphi 0, %s38
    %p35 = scmp.ge.s32.totalorder %s34, 6
    %s41 = sphi 0, %s53
    %s42 = sphi 0, %s49
    %s43 = sphi 0, %s41
    %s44 = sphi 0, %s42
    %s45 = sphi 0, %s43
    %s46 = sphi 0, %s44
    %s56 = sphi 0, %s58
    %s59 = sphi 0, %s56
    %s60 = sphi 0, %s59
    %s76 = sphi 0, %s60
    %s80 = sphi 0, %s80
    %s82 = sphi 0, %s80
    %s83 = sphi 0, %s82
    %s97 = sphi 0, %s83
    %s101 = sphi 0, %s101
    %s103 = sphi 0, %s101
    %s104 = sphi 0, %s103
    %s118 = sphi 0, %s104
    %s122 = sphi 0, %s122
    %s124 = sphi 0, %s122
    %s125 = sphi 0, %s124
    %s139 = sphi 0, %s125
    %s143 = sphi 0, %s143
    %s145 = sphi 0, %s143
    %s146 = sphi 0, %s145
    %s160 = sphi 0, %s146
    %s164 = sphi 0, %s164
    %s166 = sphi 0, %s164
    %s167 = sphi 0, %s166
    %s181 = sphi 0, %s167
    %s185 = sphi 0, %s185
    %s187 = sphi 0, %s185
    %s188 = sphi 0, %s187
    %s202 = sphi 0, %s188
    %s206 = sphi 0, %s206
    %s208 = sphi 0, %s206
    %s209 = sphi 0, %s208
    %s223 = sphi 0, %s209
    %s227 = sphi 0, %s227
    %s229 = sphi 0, %s227
    %s230 = sphi 0, %s229
    %s244 = sphi 0, %s230
    %s248 = sphi 0, %s248
    %s250 = sphi 0, %s248
    %s251 = sphi 0, %s250
    %s265 = sphi 0, %s251
    %s269 = sphi 0, %s269
    %s271 = sphi 0, %s269
    %s272 = sphi 0, %s271
    %s286 = sphi 0, %s272
    %s290 = sphi 0, %s290
    %s292 = sphi 0, %s290
    %s293 = sphi 0, %s292
    %s307 = sphi 0, %s293
    %s313 = sphi 0, %s315
    %s316 = sphi 0, %s313
    %s317 = sphi 0, %s316
    %s333 = sphi 0, %s317
    %s339 = sphi 0, %s341
    %s342 = sphi 0, %s339
    %s343 = sphi 0, %s342
    %s359 = sphi 0, %s343
    %s365 = sphi 0, %s367
    %s368 = sphi 0, %s365
    %s369 = sphi 0, %s368
    %s385 = sphi 0, %s369
    %s391 = sphi 0, %s393
    %s394 = sphi 0, %s391
    %s395 = sphi 0, %s394
    %s411 = sphi 0, %s395
    %s417 = sphi 0, %s419
    %s420 = sphi 0, %s417
    %s421 = sphi 0, %s420
    %s437 = sphi 0, %s421
    %s443 = sphi 0, %s445
    %s446 = sphi 0, %s443
    %s447 = sphi 0, %s446
    %s463 = sphi 0, %s447
    %s469 = sphi 0, %s471
    %s472 = sphi 0, %s469
    %s473 = sphi 0, %s472
    %s489 = sphi 0, %s473
    %s495 = sphi 0, %s497
    %s498 = sphi 0, %s495
    %s499 = sphi 0, %s498
    %s515 = sphi 0, %s499
    %s521 = sphi 0, %s523
    %s524 = sphi 0, %s521
    %s525 = sphi 0, %s524
    %s541 = sphi 0, %s525
    %s547 = sphi 0, %s549
    %s550 = sphi 0, %s547
    %s551 = sphi 0, %s550
    %s567 = sphi 0, %s551
    %s573 = sphi 0, %s575
    %s576 = sphi 0, %s573
    %s577 = sphi 0, %s576
    %s593 = sphi 0, %s577
    %s599 = sphi 0, %s601
    %s602 = sphi 0, %s599
    %s603 = sphi 0, %s602
    %s619 = sphi 0, %s603
    %s625 = sphi 0, %s627
    %s628 = sphi 0, %s625
    %s629 = sphi 0, %s628
    %s645 = sphi 0, %s629
    %s651 = sphi 0, %s653
    %s654 = sphi 0, %s651
    %s655 = sphi 0, %s654
    %s671 = sphi 0, %s655
    %s675 = sphi 0, %s675
    %s677 = sphi 0, %s675
    %s678 = sphi 0, %s677
    %s692 = sphi 0, %s678
    %s696 = sphi 0, %s696
    %s698 = sphi 0, %s696
    %s699 = sphi 0, %s698
    %s713 = sphi 0, %s699
    %s719 = sphi 0, %s721
    %s722 = sphi 0, %s719
    %s723 = sphi 0, %s722
    %s739 = sphi 0, %s723
  $region4: #{gridformer_forward.1} parent=0 // loop_header_branch
    %37 = sbr.rel (%p35) target = $region8
  $region5: #{gridformer_forward.1} parent=0 // loop_body
    %s39 = ssub.s32 %s34, 1
    %s40 = ssub.s32 %s34, 2
    %s47 = sadd.s32 1, %s42
    %p48 = scmp.ge.s32.totalorder %s47, 2
    %s49 = scalar_select %p48, 0, %s47
    %s50 = sadd.s32 1, %s41
    %s51 = scalar_select %p48, %s50, %s41
    %p52 = scmp.ge.s32.totalorder %s51, 2
    %s53 = scalar_select %p52, 0, %s51
    %s54 = ssub.s32 %s41, %s53
    %p55 = scmp.eq.s32.totalorder %s54, 0
    %s57 = sadd.s32 %s56, 1
    %s58 = scalar_select %p55, %s56, %s57
    %p61 = pneg %p55
    %p62 = scmp.eq.s32.totalorder %s34, 3
    %p63 = por %p61, %p62
    %p64 = scmp.ne.s32.totalorder %s56, %s59
    %p65 = scmp.eq.s32.totalorder %s34, 0
    %p66 = por %p64, %p65
    %p67 = scmp.ne.s32.totalorder %s56, %s59
    %p68 = scmp.eq.s32.totalorder %s39, 3
    %p69 = por %p67, %p68
    %p70 = scmp.ne.s32.totalorder %s59, %s60
    %p71 = scmp.eq.s32.totalorder %s39, 0
    %p72 = por %p70, %p71
    %p73 = scmp.ne.s32.totalorder %s59, %s60
    %p74 = scmp.eq.s32.totalorder %s40, 3
    %p75 = por %p73, %p74
    %p77 = scmp.ne.s32.totalorder %s60, %s76
    %p78 = scmp.eq.s32.totalorder %s40, 0
    %p79 = por %p77, %p78
    %s81 = sadd.s32 %s80, 1
    %p84 = scmp.eq.s32.totalorder %s34, 3
    %p85 = scmp.ne.s32.totalorder %s80, %s82
    %p86 = scmp.eq.s32.totalorder %s34, 0
    %p87 = por %p85, %p86
    %p88 = scmp.ne.s32.totalorder %s80, %s82
    %p89 = scmp.eq.s32.totalorder %s39, 3
    %p90 = por %p88, %p89
    %p91 = scmp.ne.s32.totalorder %s82, %s83
    %p92 = scmp.eq.s32.totalorder %s39, 0
    %p93 = por %p91, %p92
    %p94 = scmp.ne.s32.totalorder %s82, %s83
    %p95 = scmp.eq.s32.totalorder %s40, 3
    %p96 = por %p94, %p95
    %p98 = scmp.ne.s32.totalorder %s83, %s97
    %p99 = scmp.eq.s32.totalorder %s40, 0
    %p100 = por %p98, %p99
    %s102 = sadd.s32 %s101, 1
    %p105 = scmp.eq.s32.totalorder %s34, 3
    %p106 = scmp.ne.s32.totalorder %s101, %s103
    %p107 = scmp.eq.s32.totalorder %s34, 0
    %p108 = por %p106, %p107
    %p109 = scmp.ne.s32.totalorder %s101, %s103
    %p110 = scmp.eq.s32.totalorder %s39, 3
    %p111 = por %p109, %p110
    %p112 = scmp.ne.s32.totalorder %s103, %s104
    %p113 = scmp.eq.s32.totalorder %s39, 0
    %p114 = por %p112, %p113
    %p115 = scmp.ne.s32.totalorder %s103, %s104
    %p116 = scmp.eq.s32.totalorder %s40, 3
    %p117 = por %p115, %p116
    %p119 = scmp.ne.s32.totalorder %s104, %s118
    %p120 = scmp.eq.s32.totalorder %s40, 0
    %p121 = por %p119, %p120
    %s123 = sadd.s32 %s122, 1
    %p126 = scmp.eq.s32.totalorder %s34, 3
    %p127 = scmp.ne.s32.totalorder %s122, %s124
    %p128 = scmp.eq.s32.totalorder %s34, 0
    %p129 = por %p127, %p128
    %p130 = scmp.ne.s32.totalorder %s122, %s124
    %p131 = scmp.eq.s32.totalorder %s39, 3
    %p132 = por %p130, %p131
    %p133 = scmp.ne.s32.totalorder %s124, %s125
    %p134 = scmp.eq.s32.totalorder %s39, 0
    %p135 = por %p133, %p134
    %p136 = scmp.ne.s32.totalorder %s124, %s125
    %p137 = scmp.eq.s32.totalorder %s40, 3
    %p138 = por %p136, %p137
    %p140 = scmp.ne.s32.totalorder %s125, %s139
    %p141 = scmp.eq.s32.totalorder %s40, 0
    %p142 = por %p140, %p141
    %s144 = sadd.s32 %s143, 1
    %p147 = scmp.eq.s32.totalorder %s34, 3
    %p148 = scmp.ne.s32.totalorder %s143, %s145
    %p149 = scmp.eq.s32.totalorder %s34, 0
    %p150 = por %p148, %p149
    %p151 = scmp.ne.s32.totalorder %s143, %s145
    %p152 = scmp.eq.s32.totalorder %s39, 3
    %p153 = por %p151, %p152
    %p154 = scmp.ne.s32.totalorder %s145, %s146
    %p155 = scmp.eq.s32.totalorder %s39, 0
    %p156 = por %p154, %p155
    %p157 = scmp.ne.s32.totalorder %s145, %s146
    %p158 = scmp.eq.s32.totalorder %s40, 3
    %p159 = por %p157, %p158
    %p161 = scmp.ne.s32.totalorder %s146, %s160
    %p162 = scmp.eq.s32.totalorder %s40, 0
    %p163 = por %p161, %p162
    %s165 = sadd.s32 %s164, 1
    %p168 = scmp.eq.s32.totalorder %s34, 3
    %p169 = scmp.ne.s32.totalorder %s164, %s166
    %p170 = scmp.eq.s32.totalorder %s34, 0
    %p171 = por %p169, %p170
    %p172 = scmp.ne.s32.totalorder %s164, %s166
    %p173 = scmp.eq.s32.totalorder %s39, 3
    %p174 = por %p172, %p173
    %p175 = scmp.ne.s32.totalorder %s166, %s167
    %p176 = scmp.eq.s32.totalorder %s39, 0
    %p177 = por %p175, %p176
    %p178 = scmp.ne.s32.totalorder %s166, %s167
    %p179 = scmp.eq.s32.totalorder %s40, 3
    %p180 = por %p178, %p179
    %p182 = scmp.ne.s32.totalorder %s167, %s181
    %p183 = scmp.eq.s32.totalorder %s40, 0
    %p184 = por %p182, %p183
    %s186 = sadd.s32 %s185, 1
    %p189 = scmp.eq.s32.totalorder %s34, 3
    %p190 = scmp.ne.s32.totalorder %s185, %s187
    %p191 = scmp.eq.s32.totalorder %s34, 0
    %p192 = por %p190, %p191
    %p193 = scmp.ne.s32.totalorder %s185, %s187
    %p194 = scmp.eq.s32.totalorder %s39, 3
    %p195 = por %p193, %p194
    %p196 = scmp.ne.s32.totalorder %s187, %s188
    %p197 = scmp.eq.s32.totalorder %s39, 0
    %p198 = por %p196, %p197
    %p199 = scmp.ne.s32.totalorder %s187, %s188
    %p200 = scmp.eq.s32.totalorder %s40, 3
    %p201 = por %p199, %p200
    %p203 = scmp.ne.s32.totalorder %s188, %s202
    %p204 = scmp.eq.s32.totalorder %s40, 0
    %p205 = por %p203, %p204
    %s207 = sadd.s32 %s206, 1
    %p210 = scmp.eq.s32.totalorder %s34, 3
    %p211 = scmp.ne.s32.totalorder %s206, %s208
    %p212 = scmp.eq.s32.totalorder %s34, 0
    %p213 = por %p211, %p212
    %p214 = scmp.ne.s32.totalorder %s206, %s208
    %p215 = scmp.eq.s32.totalorder %s39, 3
    %p216 = por %p214, %p215
    %p217 = scmp.ne.s32.totalorder %s208, %s209
    %p218 = scmp.eq.s32.totalorder %s39, 0
    %p219 = por %p217, %p218
    %p220 = scmp.ne.s32.totalorder %s208, %s209
    %p221 = scmp.eq.s32.totalorder %s40, 3
    %p222 = por %p220, %p221
    %p224 = scmp.ne.s32.totalorder %s209, %s223
    %p225 = scmp.eq.s32.totalorder %s40, 0
    %p226 = por %p224, %p225
    %s228 = sadd.s32 %s227, 1
    %p231 = scmp.eq.s32.totalorder %s34, 3
    %p232 = scmp.ne.s32.totalorder %s227, %s229
    %p233 = scmp.eq.s32.totalorder %s34, 0
    %p234 = por %p232, %p233
    %p235 = scmp.ne.s32.totalorder %s227, %s229
    %p236 = scmp.eq.s32.totalorder %s39, 3
    %p237 = por %p235, %p236
    %p238 = scmp.ne.s32.totalorder %s229, %s230
    %p239 = scmp.eq.s32.totalorder %s39, 0
    %p240 = por %p238, %p239
    %p241 = scmp.ne.s32.totalorder %s229, %s230
    %p242 = scmp.eq.s32.totalorder %s40, 3
    %p243 = por %p241, %p242
    %p245 = scmp.ne.s32.totalorder %s230, %s244
    %p246 = scmp.eq.s32.totalorder %s40, 0
    %p247 = por %p245, %p246
    %s249 = sadd.s32 %s248, 1
    %p252 = scmp.eq.s32.totalorder %s34, 3
    %p253 = scmp.ne.s32.totalorder %s248, %s250
    %p254 = scmp.eq.s32.totalorder %s34, 0
    %p255 = por %p253, %p254
    %p256 = scmp.ne.s32.totalorder %s248, %s250
    %p257 = scmp.eq.s32.totalorder %s39, 3
    %p258 = por %p256, %p257
    %p259 = scmp.ne.s32.totalorder %s250, %s251
    %p260 = scmp.eq.s32.totalorder %s39, 0
    %p261 = por %p259, %p260
    %p262 = scmp.ne.s32.totalorder %s250, %s251
    %p263 = scmp.eq.s32.totalorder %s40, 3
    %p264 = por %p262, %p263
    %p266 = scmp.ne.s32.totalorder %s251, %s265
    %p267 = scmp.eq.s32.totalorder %s40, 0
    %p268 = por %p266, %p267
    %s270 = sadd.s32 %s269, 1
    %p273 = scmp.eq.s32.totalorder %s34, 3
    %p274 = scmp.ne.s32.totalorder %s269, %s271
    %p275 = scmp.eq.s32.totalorder %s34, 0
    %p276 = por %p274, %p275
    %p277 = scmp.ne.s32.totalorder %s269, %s271
    %p278 = scmp.eq.s32.totalorder %s39, 3
    %p279 = por %p277, %p278
    %p280 = scmp.ne.s32.totalorder %s271, %s272
    %p281 = scmp.eq.s32.totalorder %s39, 0
    %p282 = por %p280, %p281
    %p283 = scmp.ne.s32.totalorder %s271, %s272
    %p284 = scmp.eq.s32.totalorder %s40, 3
    %p285 = por %p283, %p284
    %p287 = scmp.ne.s32.totalorder %s272, %s286
    %p288 = scmp.eq.s32.totalorder %s40, 0
    %p289 = por %p287, %p288
    %s291 = sadd.s32 %s290, 1
    %p294 = scmp.eq.s32.totalorder %s34, 3
    %p295 = scmp.ne.s32.totalorder %s290, %s292
    %p296 = scmp.eq.s32.totalorder %s34, 0
    %p297 = por %p295, %p296
    %p298 = scmp.ne.s32.totalorder %s290, %s292
    %p299 = scmp.eq.s32.totalorder %s39, 3
    %p300 = por %p298, %p299
    %p301 = scmp.ne.s32.totalorder %s292, %s293
    %p302 = scmp.eq.s32.totalorder %s39, 0
    %p303 = por %p301, %p302
    %p304 = scmp.ne.s32.totalorder %s292, %s293
    %p305 = scmp.eq.s32.totalorder %s40, 3
    %p306 = por %p304, %p305
    %p308 = scmp.ne.s32.totalorder %s293, %s307
    %p309 = scmp.eq.s32.totalorder %s40, 0
    %p310 = por %p308, %p309
    %s311 = ssub.s32 %s42, %s49
    %p312 = scmp.eq.s32.totalorder %s311, 0
    %s314 = sadd.s32 %s313, 1
    %s315 = scalar_select %p312, %s313, %s314
    %p318 = pneg %p312
    %p319 = scmp.eq.s32.totalorder %s34, 3
    %p320 = por %p318, %p319
    %p321 = scmp.ne.s32.totalorder %s313, %s316
    %p322 = scmp.eq.s32.totalorder %s34, 0
    %p323 = por %p321, %p322
    %p324 = scmp.ne.s32.totalorder %s313, %s316
    %p325 = scmp.eq.s32.totalorder %s39, 3
    %p326 = por %p324, %p325
    %p327 = scmp.ne.s32.totalorder %s316, %s317
    %p328 = scmp.eq.s32.totalorder %s39, 0
    %p329 = por %p327, %p328
    %p330 = scmp.ne.s32.totalorder %s316, %s317
    %p331 = scmp.eq.s32.totalorder %s40, 3
    %p332 = por %p330, %p331
    %p334 = scmp.ne.s32.totalorder %s317, %s333
    %p335 = scmp.eq.s32.totalorder %s40, 0
    %p336 = por %p334, %p335
    %s337 = ssub.s32 %s42, %s49
    %p338 = scmp.eq.s32.totalorder %s337, 0
    %s340 = sadd.s32 %s339, 1
    %s341 = scalar_select %p338, %s339, %s340
    %p344 = pneg %p338
    %p345 = scmp.eq.s32.totalorder %s34, 3
    %p346 = por %p344, %p345
    %p347 = scmp.ne.s32.totalorder %s339, %s342
    %p348 = scmp.eq.s32.totalorder %s34, 0
    %p349 = por %p347, %p348
    %p350 = scmp.ne.s32.totalorder %s339, %s342
    %p351 = scmp.eq.s32.totalorder %s39, 3
    %p352 = por %p350, %p351
    %p353 = scmp.ne.s32.totalorder %s342, %s343
    %p354 = scmp.eq.s32.totalorder %s39, 0
    %p355 = por %p353, %p354
    %p356 = scmp.ne.s32.totalorder %s342, %s343
    %p357 = scmp.eq.s32.totalorder %s40, 3
    %p358 = por %p356, %p357
    %p360 = scmp.ne.s32.totalorder %s343, %s359
    %p361 = scmp.eq.s32.totalorder %s40, 0
    %p362 = por %p360, %p361
    %s363 = ssub.s32 %s42, %s49
    %p364 = scmp.eq.s32.totalorder %s363, 0
    %s366 = sadd.s32 %s365, 1
    %s367 = scalar_select %p364, %s365, %s366
    %p370 = pneg %p364
    %p371 = scmp.eq.s32.totalorder %s34, 3
    %p372 = por %p370, %p371
    %p373 = scmp.ne.s32.totalorder %s365, %s368
    %p374 = scmp.eq.s32.totalorder %s34, 0
    %p375 = por %p373, %p374
    %p376 = scmp.ne.s32.totalorder %s365, %s368
    %p377 = scmp.eq.s32.totalorder %s39, 3
    %p378 = por %p376, %p377
    %p379 = scmp.ne.s32.totalorder %s368, %s369
    %p380 = scmp.eq.s32.totalorder %s39, 0
    %p381 = por %p379, %p380
    %p382 = scmp.ne.s32.totalorder %s368, %s369
    %p383 = scmp.eq.s32.totalorder %s40, 3
    %p384 = por %p382, %p383
    %p386 = scmp.ne.s32.totalorder %s369, %s385
    %p387 = scmp.eq.s32.totalorder %s40, 0
    %p388 = por %p386, %p387
    %s389 = ssub.s32 %s42, %s49
    %p390 = scmp.eq.s32.totalorder %s389, 0
    %s392 = sadd.s32 %s391, 1
    %s393 = scalar_select %p390, %s391, %s392
    %p396 = pneg %p390
    %p397 = scmp.eq.s32.totalorder %s34, 3
    %p398 = por %p396, %p397
    %p399 = scmp.ne.s32.totalorder %s391, %s394
    %p400 = scmp.eq.s32.totalorder %s34, 0
    %p401 = por %p399, %p400
    %p402 = scmp.ne.s32.totalorder %s391, %s394
    %p403 = scmp.eq.s32.totalorder %s39, 3
    %p404 = por %p402, %p403
    %p405 = scmp.ne.s32.totalorder %s394, %s395
    %p406 = scmp.eq.s32.totalorder %s39, 0
    %p407 = por %p405, %p406
    %p408 = scmp.ne.s32.totalorder %s394, %s395
    %p409 = scmp.eq.s32.totalorder %s40, 3
    %p410 = por %p408, %p409
    %p412 = scmp.ne.s32.totalorder %s395, %s411
    %p413 = scmp.eq.s32.totalorder %s40, 0
    %p414 = por %p412, %p413
    %s415 = ssub.s32 %s42, %s49
    %p416 = scmp.eq.s32.totalorder %s415, 0
    %s418 = sadd.s32 %s417, 1
    %s419 = scalar_select %p416, %s417, %s418
    %p422 = pneg %p416
    %p423 = scmp.eq.s32.totalorder %s34, 3
    %p424 = por %p422, %p423
    %p425 = scmp.ne.s32.totalorder %s417, %s420
    %p426 = scmp.eq.s32.totalorder %s34, 0
    %p427 = por %p425, %p426
    %p428 = scmp.ne.s32.totalorder %s417, %s420
    %p429 = scmp.eq.s32.totalorder %s39, 3
    %p430 = por %p428, %p429
    %p431 = scmp.ne.s32.totalorder %s420, %s421
    %p432 = scmp.eq.s32.totalorder %s39, 0
    %p433 = por %p431, %p432
    %p434 = scmp.ne.s32.totalorder %s420, %s421
    %p435 = scmp.eq.s32.totalorder %s40, 3
    %p436 = por %p434, %p435
    %p438 = scmp.ne.s32.totalorder %s421, %s437
    %p439 = scmp.eq.s32.totalorder %s40, 0
    %p440 = por %p438, %p439
    %s441 = ssub.s32 %s42, %s49
    %p442 = scmp.eq.s32.totalorder %s441, 0
    %s444 = sadd.s32 %s443, 1
    %s445 = scalar_select %p442, %s443, %s444
    %p448 = pneg %p442
    %p449 = scmp.eq.s32.totalorder %s34, 3
    %p450 = por %p448, %p449
    %p451 = scmp.ne.s32.totalorder %s443, %s446
    %p452 = scmp.eq.s32.totalorder %s34, 0
    %p453 = por %p451, %p452
    %p454 = scmp.ne.s32.totalorder %s443, %s446
    %p455 = scmp.eq.s32.totalorder %s39, 3
    %p456 = por %p454, %p455
    %p457 = scmp.ne.s32.totalorder %s446, %s447
    %p458 = scmp.eq.s32.totalorder %s39, 0
    %p459 = por %p457, %p458
    %p460 = scmp.ne.s32.totalorder %s446, %s447
    %p461 = scmp.eq.s32.totalorder %s40, 3
    %p462 = por %p460, %p461
    %p464 = scmp.ne.s32.totalorder %s447, %s463
    %p465 = scmp.eq.s32.totalorder %s40, 0
    %p466 = por %p464, %p465
    %s467 = ssub.s32 %s42, %s49
    %p468 = scmp.eq.s32.totalorder %s467, 0
    %s470 = sadd.s32 %s469, 1
    %s471 = scalar_select %p468, %s469, %s470
    %p474 = pneg %p468
    %p475 = scmp.eq.s32.totalorder %s34, 3
    %p476 = por %p474, %p475
    %p477 = scmp.ne.s32.totalorder %s469, %s472
    %p478 = scmp.eq.s32.totalorder %s34, 0
    %p479 = por %p477, %p478
    %p480 = scmp.ne.s32.totalorder %s469, %s472
    %p481 = scmp.eq.s32.totalorder %s39, 3
    %p482 = por %p480, %p481
    %p483 = scmp.ne.s32.totalorder %s472, %s473
    %p484 = scmp.eq.s32.totalorder %s39, 0
    %p485 = por %p483, %p484
    %p486 = scmp.ne.s32.totalorder %s472, %s473
    %p487 = scmp.eq.s32.totalorder %s40, 3
    %p488 = por %p486, %p487
    %p490 = scmp.ne.s32.totalorder %s473, %s489
    %p491 = scmp.eq.s32.totalorder %s40, 0
    %p492 = por %p490, %p491
    %s493 = ssub.s32 %s42, %s49
    %p494 = scmp.eq.s32.totalorder %s493, 0
    %s496 = sadd.s32 %s495, 1
    %s497 = scalar_select %p494, %s495, %s496
    %p500 = pneg %p494
    %p501 = scmp.eq.s32.totalorder %s34, 3
    %p502 = por %p500, %p501
    %p503 = scmp.ne.s32.totalorder %s495, %s498
    %p504 = scmp.eq.s32.totalorder %s34, 0
    %p505 = por %p503, %p504
    %p506 = scmp.ne.s32.totalorder %s495, %s498
    %p507 = scmp.eq.s32.totalorder %s39, 3
    %p508 = por %p506, %p507
    %p509 = scmp.ne.s32.totalorder %s498, %s499
    %p510 = scmp.eq.s32.totalorder %s39, 0
    %p511 = por %p509, %p510
    %p512 = scmp.ne.s32.totalorder %s498, %s499
    %p513 = scmp.eq.s32.totalorder %s40, 3
    %p514 = por %p512, %p513
    %p516 = scmp.ne.s32.totalorder %s499, %s515
    %p517 = scmp.eq.s32.totalorder %s40, 0
    %p518 = por %p516, %p517
    %s519 = ssub.s32 %s42, %s49
    %p520 = scmp.eq.s32.totalorder %s519, 0
    %s522 = sadd.s32 %s521, 1
    %s523 = scalar_select %p520, %s521, %s522
    %p526 = pneg %p520
    %p527 = scmp.eq.s32.totalorder %s34, 3
    %p528 = por %p526, %p527
    %p529 = scmp.ne.s32.totalorder %s521, %s524
    %p530 = scmp.eq.s32.totalorder %s34, 0
    %p531 = por %p529, %p530
    %p532 = scmp.ne.s32.totalorder %s521, %s524
    %p533 = scmp.eq.s32.totalorder %s39, 3
    %p534 = por %p532, %p533
    %p535 = scmp.ne.s32.totalorder %s524, %s525
    %p536 = scmp.eq.s32.totalorder %s39, 0
    %p537 = por %p535, %p536
    %p538 = scmp.ne.s32.totalorder %s524, %s525
    %p539 = scmp.eq.s32.totalorder %s40, 3
    %p540 = por %p538, %p539
    %p542 = scmp.ne.s32.totalorder %s525, %s541
    %p543 = scmp.eq.s32.totalorder %s40, 0
    %p544 = por %p542, %p543
    %s545 = ssub.s32 %s42, %s49
    %p546 = scmp.eq.s32.totalorder %s545, 0
    %s548 = sadd.s32 %s547, 1
    %s549 = scalar_select %p546, %s547, %s548
    %p552 = pneg %p546
    %p553 = scmp.eq.s32.totalorder %s34, 3
    %p554 = por %p552, %p553
    %p555 = scmp.ne.s32.totalorder %s547, %s550
    %p556 = scmp.eq.s32.totalorder %s34, 0
    %p557 = por %p555, %p556
    %p558 = scmp.ne.s32.totalorder %s547, %s550
    %p559 = scmp.eq.s32.totalorder %s39, 3
    %p560 = por %p558, %p559
    %p561 = scmp.ne.s32.totalorder %s550, %s551
    %p562 = scmp.eq.s32.totalorder %s39, 0
    %p563 = por %p561, %p562
    %p564 = scmp.ne.s32.totalorder %s550, %s551
    %p565 = scmp.eq.s32.totalorder %s40, 3
    %p566 = por %p564, %p565
    %p568 = scmp.ne.s32.totalorder %s551, %s567
    %p569 = scmp.eq.s32.totalorder %s40, 0
    %p570 = por %p568, %p569
    %s571 = ssub.s32 %s42, %s49
    %p572 = scmp.eq.s32.totalorder %s571, 0
    %s574 = sadd.s32 %s573, 1
    %s575 = scalar_select %p572, %s573, %s574
    %p578 = pneg %p572
    %p579 = scmp.eq.s32.totalorder %s34, 3
    %p580 = por %p578, %p579
    %p581 = scmp.ne.s32.totalorder %s573, %s576
    %p582 = scmp.eq.s32.totalorder %s34, 0
    %p583 = por %p581, %p582
    %p584 = scmp.ne.s32.totalorder %s573, %s576
    %p585 = scmp.eq.s32.totalorder %s39, 3
    %p586 = por %p584, %p585
    %p587 = scmp.ne.s32.totalorder %s576, %s577
    %p588 = scmp.eq.s32.totalorder %s39, 0
    %p589 = por %p587, %p588
    %p590 = scmp.ne.s32.totalorder %s576, %s577
    %p591 = scmp.eq.s32.totalorder %s40, 3
    %p592 = por %p590, %p591
    %p594 = scmp.ne.s32.totalorder %s577, %s593
    %p595 = scmp.eq.s32.totalorder %s40, 0
    %p596 = por %p594, %p595
    %s597 = ssub.s32 %s42, %s49
    %p598 = scmp.eq.s32.totalorder %s597, 0
    %s600 = sadd.s32 %s599, 1
    %s601 = scalar_select %p598, %s599, %s600
    %p604 = pneg %p598
    %p605 = scmp.eq.s32.totalorder %s34, 3
    %p606 = por %p604, %p605
    %p607 = scmp.ne.s32.totalorder %s599, %s602
    %p608 = scmp.eq.s32.totalorder %s34, 0
    %p609 = por %p607, %p608
    %p610 = scmp.ne.s32.totalorder %s599, %s602
    %p611 = scmp.eq.s32.totalorder %s39, 3
    %p612 = por %p610, %p611
    %p613 = scmp.ne.s32.totalorder %s602, %s603
    %p614 = scmp.eq.s32.totalorder %s39, 0
    %p615 = por %p613, %p614
    %p616 = scmp.ne.s32.totalorder %s602, %s603
    %p617 = scmp.eq.s32.totalorder %s40, 3
    %p618 = por %p616, %p617
    %p620 = scmp.ne.s32.totalorder %s603, %s619
    %p621 = scmp.eq.s32.totalorder %s40, 0
    %p622 = por %p620, %p621
    %s623 = ssub.s32 %s42, %s49
    %p624 = scmp.eq.s32.totalorder %s623, 0
    %s626 = sadd.s32 %s625, 1
    %s627 = scalar_select %p624, %s625, %s626
    %p630 = pneg %p624
    %p631 = scmp.eq.s32.totalorder %s34, 3
    %p632 = por %p630, %p631
    %p633 = scmp.ne.s32.totalorder %s625, %s628
    %p634 = scmp.eq.s32.totalorder %s34, 0
    %p635 = por %p633, %p634
    %p636 = scmp.ne.s32.totalorder %s625, %s628
    %p637 = scmp.eq.s32.totalorder %s39, 3
    %p638 = por %p636, %p637
    %p639 = scmp.ne.s32.totalorder %s628, %s629
    %p640 = scmp.eq.s32.totalorder %s39, 0
    %p641 = por %p639, %p640
    %p642 = scmp.ne.s32.totalorder %s628, %s629
    %p643 = scmp.eq.s32.totalorder %s40, 3
    %p644 = por %p642, %p643
    %p646 = scmp.ne.s32.totalorder %s629, %s645
    %p647 = scmp.eq.s32.totalorder %s40, 0
    %p648 = por %p646, %p647
    %s649 = ssub.s32 %s42, %s49
    %p650 = scmp.eq.s32.totalorder %s649, 0
    %s652 = sadd.s32 %s651, 1
    %s653 = scalar_select %p650, %s651, %s652
    %p656 = pneg %p650
    %p657 = scmp.eq.s32.totalorder %s34, 3
    %p658 = por %p656, %p657
    %p659 = scmp.ne.s32.totalorder %s651, %s654
    %p660 = scmp.eq.s32.totalorder %s34, 0
    %p661 = por %p659, %p660
    %p662 = scmp.ne.s32.totalorder %s651, %s654
    %p663 = scmp.eq.s32.totalorder %s39, 3
    %p664 = por %p662, %p663
    %p665 = scmp.ne.s32.totalorder %s654, %s655
    %p666 = scmp.eq.s32.totalorder %s39, 0
    %p667 = por %p665, %p666
    %p668 = scmp.ne.s32.totalorder %s654, %s655
    %p669 = scmp.eq.s32.totalorder %s40, 3
    %p670 = por %p668, %p669
    %p672 = scmp.ne.s32.totalorder %s655, %s671
    %p673 = scmp.eq.s32.totalorder %s40, 0
    %p674 = por %p672, %p673
    %s676 = sadd.s32 %s675, 1
    %p679 = scmp.eq.s32.totalorder %s34, 3
    %p680 = scmp.ne.s32.totalorder %s675, %s677
    %p681 = scmp.eq.s32.totalorder %s34, 0
    %p682 = por %p680, %p681
    %p683 = scmp.ne.s32.totalorder %s675, %s677
    %p684 = scmp.eq.s32.totalorder %s39, 3
    %p685 = por %p683, %p684
    %p686 = scmp.ne.s32.totalorder %s677, %s678
    %p687 = scmp.eq.s32.totalorder %s39, 0
    %p688 = por %p686, %p687
    %p689 = scmp.ne.s32.totalorder %s677, %s678
    %p690 = scmp.eq.s32.totalorder %s40, 3
    %p691 = por %p689, %p690
    %p693 = scmp.ne.s32.totalorder %s678, %s692
    %p694 = scmp.eq.s32.totalorder %s40, 0
    %p695 = por %p693, %p694
    %s697 = sadd.s32 %s696, 1
    %p700 = scmp.eq.s32.totalorder %s34, 3
    %p701 = scmp.ne.s32.totalorder %s696, %s698
    %p702 = scmp.eq.s32.totalorder %s34, 0
    %p703 = por %p701, %p702
    %p704 = scmp.ne.s32.totalorder %s696, %s698
    %p705 = scmp.eq.s32.totalorder %s39, 3
    %p706 = por %p704, %p705
    %p707 = scmp.ne.s32.totalorder %s698, %s699
    %p708 = scmp.eq.s32.totalorder %s39, 0
    %p709 = por %p707, %p708
    %p710 = scmp.ne.s32.totalorder %s698, %s699
    %p711 = scmp.eq.s32.totalorder %s40, 3
    %p712 = por %p710, %p711
    %p714 = scmp.ne.s32.totalorder %s699, %s713
    %p715 = scmp.eq.s32.totalorder %s40, 0
    %p716 = por %p714, %p715
    %s717 = ssub.s32 %s41, %s53
    %p718 = scmp.eq.s32.totalorder %s717, 0
    %s720 = sadd.s32 %s719, 1
    %s721 = scalar_select %p718, %s719, %s720
    %p724 = pneg %p718
    %p725 = scmp.eq.s32.totalorder %s34, 3
    %p726 = por %p724, %p725
    %p727 = scmp.ne.s32.totalorder %s719, %s722
    %p728 = scmp.eq.s32.totalorder %s34, 0
    %p729 = por %p727, %p728
    %p730 = scmp.ne.s32.totalorder %s719, %s722
    %p731 = scmp.eq.s32.totalorder %s39, 3
    %p732 = por %p730, %p731
    %p733 = scmp.ne.s32.totalorder %s722, %s723
    %p734 = scmp.eq.s32.totalorder %s39, 0
    %p735 = por %p733, %p734
    %p736 = scmp.ne.s32.totalorder %s722, %s723
    %p737 = scmp.eq.s32.totalorder %s40, 3
    %p738 = por %p736, %p737
    %p740 = scmp.ne.s32.totalorder %s723, %s739
    %p741 = scmp.eq.s32.totalorder %s40, 0
    %p742 = por %p740, %p741
    %p743 = scmp.le.s32.totalorder 1, %s34
    %p744 = scmp.lt.s32.totalorder %s34, 5
    %p745 = pnand %p743, %p744
    %p746 = pneg %p745
    // Predicated region
    $region9: #{gridformer_forward.1} parent=5 // pred_check
      _
    $region10: #{gridformer_forward.1} parent=5 // pred_check_branch
      %748 = sbr.rel (%p745) target = $region12
    $region11: #{gridformer_forward.1} parent=5 // pred_region
      %s749 = ssub.s32 %s34, 1
      // Predicated region
      $region13: #{gridformer_forward.1} parent=11 // pred_check
        %p750 = pneg %p93
      $region14: #{gridformer_forward.1} parent=11 // pred_check_branch
        %752 = sbr.rel (%p750) target = $region16
      $region15: #{gridformer_forward.1} parent=11 // pred_region
        _
      $region16: #{gridformer_forward.1} parent=11 // pred_fallthru
        _
      // Predicated region
      $region17: #{gridformer_forward.1} parent=11 // pred_check
        %p753 = pneg %p114
      $region18: #{gridformer_forward.1} parent=11 // pred_check_branch
        %755 = sbr.rel (%p753) target = $region20
      $region19: #{gridformer_forward.1} parent=11 // pred_region
        _
      $region20: #{gridformer_forward.1} parent=11 // pred_fallthru
        _
      // Predicated region
      $region21: #{gridformer_forward.1} parent=11 // pred_check
        %p756 = pneg %p135
      $region22: #{gridformer_forward.1} parent=11 // pred_check_branch
        %758 = sbr.rel (%p756) target = $region24
      $region23: #{gridformer_forward.1} parent=11 // pred_region
        _
      $region24: #{gridformer_forward.1} parent=11 // pred_fallthru
        _
      // Predicated region
      $region25: #{gridformer_forward.1} parent=11 // pred_check
        %p759 = pneg %p156
      $region26: #{gridformer_forward.1} parent=11 // pred_check_branch
        %761 = sbr.rel (%p759) target = $region28
      $region27: #{gridformer_forward.1} parent=11 // pred_region
        _
      $region28: #{gridformer_forward.1} parent=11 // pred_fallthru
        _
      // Predicated region
      $region29: #{gridformer_forward.1} parent=11 // pred_check
        %p762 = pneg %p177
      $region30: #{gridformer_forward.1} parent=11 // pred_check_branch
        %764 = sbr.rel (%p762) target = $region32
      $region31: #{gridformer_forward.1} parent=11 // pred_region
        _
      $region32: #{gridformer_forward.1} parent=11 // pred_fallthru
        _
      // Predicated region
      $region33: #{gridformer_forward.1} parent=11 // pred_check
        %p765 = pneg %p198
      $region34: #{gridformer_forward.1} parent=11 // pred_check_branch
        %767 = sbr.rel (%p765) target = $region36
      $region35: #{gridformer_forward.1} parent=11 // pred_region
        _
      $region36: #{gridformer_forward.1} parent=11 // pred_fallthru
        _
      // Predicated region
      $region37: #{gridformer_forward.1} parent=11 // pred_check
        %p768 = pneg %p219
      $region38: #{gridformer_forward.1} parent=11 // pred_check_branch
        %770 = sbr.rel (%p768) target = $region40
      $region39: #{gridformer_forward.1} parent=11 // pred_region
        _
      $region40: #{gridformer_forward.1} parent=11 // pred_fallthru
        _
      // Predicated region
      $region41: #{gridformer_forward.1} parent=11 // pred_check
        %p771 = pneg %p240
      $region42: #{gridformer_forward.1} parent=11 // pred_check_branch
        %773 = sbr.rel (%p771) target = $region44
      $region43: #{gridformer_forward.1} parent=11 // pred_region
        _
      $region44: #{gridformer_forward.1} parent=11 // pred_fallthru
        _
      // Predicated region
      $region45: #{gridformer_forward.1} parent=11 // pred_check
        %p774 = pneg %p261
      $region46: #{gridformer_forward.1} parent=11 // pred_check_branch
        %776 = sbr.rel (%p774) target = $region48
      $region47: #{gridformer_forward.1} parent=11 // pred_region
        _
      $region48: #{gridformer_forward.1} parent=11 // pred_fallthru
        _
      // Predicated region
      $region49: #{gridformer_forward.1} parent=11 // pred_check
        %p777 = pneg %p282
      $region50: #{gridformer_forward.1} parent=11 // pred_check_branch
        %779 = sbr.rel (%p777) target = $region52
      $region51: #{gridformer_forward.1} parent=11 // pred_region
        _
      $region52: #{gridformer_forward.1} parent=11 // pred_fallthru
        _
      // Predicated region
      $region53: #{gridformer_forward.1} parent=11 // pred_check
        %p780 = pneg %p303
      $region54: #{gridformer_forward.1} parent=11 // pred_check_branch
        %782 = sbr.rel (%p780) target = $region56
      $region55: #{gridformer_forward.1} parent=11 // pred_region
        _
      $region56: #{gridformer_forward.1} parent=11 // pred_fallthru
        _
      // Predicated region
      $region57: #{gridformer_forward.1} parent=11 // pred_check
        %p783 = pneg %p688
      $region58: #{gridformer_forward.1} parent=11 // pred_check_branch
        %785 = sbr.rel (%p783) target = $region60
      $region59: #{gridformer_forward.1} parent=11 // pred_region
        _
      $region60: #{gridformer_forward.1} parent=11 // pred_fallthru
        _
      // Predicated region
      $region61: #{gridformer_forward.1} parent=11 // pred_check
        %p786 = pneg %p709
      $region62: #{gridformer_forward.1} parent=11 // pred_check_branch
        %788 = sbr.rel (%p786) target = $region64
      $region63: #{gridformer_forward.1} parent=11 // pred_region
        _
      $region64: #{gridformer_forward.1} parent=11 // pred_fallthru
        _
    $region12: #{gridformer_forward.1} parent=5 // pred_fallthru
      _
    %p789 = scmp.lt.s32.totalorder %s34, 4
    // Predicated region
    $region65: #{gridformer_forward.1} parent=5 // pred_check
      %p790 = pneg %p789
    $region66: #{gridformer_forward.1} parent=5 // pred_check_branch
      %792 = sbr.rel (%p790) target = $region68
    $region67: #{gridformer_forward.1} parent=5 // pred_region
      // Predicated region
      $region69: #{gridformer_forward.1} parent=67 // pred_check
        %p793 = pneg %p66
      $region70: #{gridformer_forward.1} parent=67 // pred_check_branch
        %795 = sbr.rel (%p793) target = $region72
      $region71: #{gridformer_forward.1} parent=67 // pred_region
        %p796 = scmp.lt.s32.totalorder %s41, 1
        %s797 = scalar_select %p796, %s41, 1
        %s798 = smul.addr %s797, 8
        %s799 = scalar_lea.vmem %s0, %s798
      $region72: #{gridformer_forward.1} parent=67 // pred_fallthru
        _
      // Predicated region
      $region73: #{gridformer_forward.1} parent=67 // pred_check
        %p800 = pneg %p323
      $region74: #{gridformer_forward.1} parent=67 // pred_check_branch
        %802 = sbr.rel (%p800) target = $region76
      $region75: #{gridformer_forward.1} parent=67 // pred_region
        %p803 = scmp.lt.s32.totalorder %s42, 1
        %s804 = scalar_select %p803, %s42, 1
        %s805 = smul.addr %s804, 4
        %s806 = smul.addr %s805, 8
        %s807 = scalar_lea.vmem %s12, %s806
      $region76: #{gridformer_forward.1} parent=67 // pred_fallthru
        _
      // Predicated region
      $region77: #{gridformer_forward.1} parent=67 // pred_check
        %p808 = pneg %p349
      $region78: #{gridformer_forward.1} parent=67 // pred_check_branch
        %810 = sbr.rel (%p808) target = $region80
      $region79: #{gridformer_forward.1} parent=67 // pred_region
        %p811 = scmp.lt.s32.totalorder %s42, 1
        %s812 = scalar_select %p811, %s42, 1
        %s813 = scalar_lea.vmem %s13, %s812
      $region80: #{gridformer_forward.1} parent=67 // pred_fallthru
        _
      // Predicated region
      $region81: #{gridformer_forward.1} parent=67 // pred_check
        %p814 = pneg %p375
      $region82: #{gridformer_forward.1} parent=67 // pred_check_branch
        %816 = sbr.rel (%p814) target = $region84
      $region83: #{gridformer_forward.1} parent=67 // pred_region
        %p817 = scmp.lt.s32.totalorder %s42, 1
        %s818 = scalar_select %p817, %s42, 1
        %s819 = smul.addr %s818, 4
        %s820 = smul.addr %s819, 8
        %s821 = scalar_lea.vmem %s14, %s820
      $region84: #{gridformer_forward.1} parent=67 // pred_fallthru
        _
      // Predicated region
      $region85: #{gridformer_forward.1} parent=67 // pred_check
        %p822 = pneg %p401
      $region86: #{gridformer_forward.1} parent=67 // pred_check_branch
        %824 = sbr.rel (%p822) target = $region88
      $region87: #{gridformer_forward.1} parent=67 // pred_region
        %p825 = scmp.lt.s32.totalorder %s42, 1
        %s826 = scalar_select %p825, %s42, 1
        %s827 = scalar_lea.vmem %s15, %s826
      $region88: #{gridformer_forward.1} parent=67 // pred_fallthru
        _
      // Predicated region
      $region89: #{gridformer_forward.1} parent=67 // pred_check
        %p828 = pneg %p427
      $region90: #{gridformer_forward.1} parent=67 // pred_check_branch
        %830 = sbr.rel (%p828) target = $region92
      $region91: #{gridformer_forward.1} parent=67 // pred_region
        %p831 = scmp.lt.s32.totalorder %s42, 1
        %s832 = scalar_select %p831, %s42, 1
        %s833 = smul.addr %s832, 4
        %s834 = smul.addr %s833, 8
        %s835 = scalar_lea.vmem %s16, %s834
      $region92: #{gridformer_forward.1} parent=67 // pred_fallthru
        _
      // Predicated region
      $region93: #{gridformer_forward.1} parent=67 // pred_check
        %p836 = pneg %p453
      $region94: #{gridformer_forward.1} parent=67 // pred_check_branch
        %838 = sbr.rel (%p836) target = $region96
      $region95: #{gridformer_forward.1} parent=67 // pred_region
        %p839 = scmp.lt.s32.totalorder %s42, 1
        %s840 = scalar_select %p839, %s42, 1
        %s841 = scalar_lea.vmem %s17, %s840
      $region96: #{gridformer_forward.1} parent=67 // pred_fallthru
        _
      // Predicated region
      $region97: #{gridformer_forward.1} parent=67 // pred_check
        %p842 = pneg %p479
      $region98: #{gridformer_forward.1} parent=67 // pred_check_branch
        %844 = sbr.rel (%p842) target = $region100
      $region99: #{gridformer_forward.1} parent=67 // pred_region
        %p845 = scmp.lt.s32.totalorder %s42, 1
        %s846 = scalar_select %p845, %s42, 1
        %s847 = smul.addr %s846, 4
        %s848 = smul.addr %s847, 8
        %s849 = scalar_lea.vmem %s18, %s848
      $region100: #{gridformer_forward.1} parent=67 // pred_fallthru
        _
      // Predicated region
      $region101: #{gridformer_forward.1} parent=67 // pred_check
        %p850 = pneg %p505
      $region102: #{gridformer_forward.1} parent=67 // pred_check_branch
        %852 = sbr.rel (%p850) target = $region104
      $region103: #{gridformer_forward.1} parent=67 // pred_region
        %p853 = scmp.lt.s32.totalorder %s42, 1
        %s854 = scalar_select %p853, %s42, 1
        %s855 = scalar_lea.vmem %s19, %s854
      $region104: #{gridformer_forward.1} parent=67 // pred_fallthru
        _
      // Predicated region
      $region105: #{gridformer_forward.1} parent=67 // pred_check
        %p856 = pneg %p531
      $region106: #{gridformer_forward.1} parent=67 // pred_check_branch
        %858 = sbr.rel (%p856) target = $region108
      $region107: #{gridformer_forward.1} parent=67 // pred_region
        %p859 = scmp.lt.s32.totalorder %s42, 1
        %s860 = scalar_select %p859, %s42, 1
        %s861 = smul.addr %s860, 4
        %s862 = smul.addr %s861, 8
        %s863 = scalar_lea.vmem %s20, %s862
      $region108: #{gridformer_forward.1} parent=67 // pred_fallthru
        _
      // Predicated region
      $region109: #{gridformer_forward.1} parent=67 // pred_check
        %p864 = pneg %p557
      $region110: #{gridformer_forward.1} parent=67 // pred_check_branch
        %866 = sbr.rel (%p864) target = $region112
      $region111: #{gridformer_forward.1} parent=67 // pred_region
        %p867 = scmp.lt.s32.totalorder %s42, 1
        %s868 = scalar_select %p867, %s42, 1
        %s869 = scalar_lea.vmem %s21, %s868
      $region112: #{gridformer_forward.1} parent=67 // pred_fallthru
        _
      // Predicated region
      $region113: #{gridformer_forward.1} parent=67 // pred_check
        %p870 = pneg %p583
      $region114: #{gridformer_forward.1} parent=67 // pred_check_branch
        %872 = sbr.rel (%p870) target = $region116
      $region115: #{gridformer_forward.1} parent=67 // pred_region
        %p873 = scmp.lt.s32.totalorder %s42, 1
        %s874 = scalar_select %p873, %s42, 1
        %s875 = smul.addr %s874, 4
        %s876 = smul.addr %s875, 8
        %s877 = scalar_lea.vmem %s22, %s876
      $region116: #{gridformer_forward.1} parent=67 // pred_fallthru
        _
      // Predicated region
      $region117: #{gridformer_forward.1} parent=67 // pred_check
        %p878 = pneg %p609
      $region118: #{gridformer_forward.1} parent=67 // pred_check_branch
        %880 = sbr.rel (%p878) target = $region120
      $region119: #{gridformer_forward.1} parent=67 // pred_region
        %p881 = scmp.lt.s32.totalorder %s42, 1
        %s882 = scalar_select %p881, %s42, 1
        %s883 = scalar_lea.vmem %s23, %s882
      $region120: #{gridformer_forward.1} parent=67 // pred_fallthru
        _
      // Predicated region
      $region121: #{gridformer_forward.1} parent=67 // pred_check
        %p884 = pneg %p635
      $region122: #{gridformer_forward.1} parent=67 // pred_check_branch
        %886 = sbr.rel (%p884) target = $region124
      $region123: #{gridformer_forward.1} parent=67 // pred_region
        %p887 = scmp.lt.s32.totalorder %s42, 1
        %s888 = scalar_select %p887, %s42, 1
        %s889 = smul.addr %s888, 8
        %s890 = smul.addr %s889, 8
        %s891 = scalar_lea.vmem %s24, %s890
      $region124: #{gridformer_forward.1} parent=67 // pred_fallthru
        _
      // Predicated region
      $region125: #{gridformer_forward.1} parent=67 // pred_check
        %p892 = pneg %p661
      $region126: #{gridformer_forward.1} parent=67 // pred_check_branch
        %894 = sbr.rel (%p892) target = $region128
      $region127: #{gridformer_forward.1} parent=67 // pred_region
        %p895 = scmp.lt.s32.totalorder %s42, 1
        %s896 = scalar_select %p895, %s42, 1
        %s897 = scalar_lea.vmem %s25, %s896
      $region128: #{gridformer_forward.1} parent=67 // pred_fallthru
        _
    $region68: #{gridformer_forward.1} parent=5 // pred_fallthru
      _
    %p898 = scmp.le.s32.totalorder 1, %s34
    %p899 = scmp.lt.s32.totalorder %s34, 5
    %p900 = pnand %p898, %p899
    %p901 = pneg %p900
    // Predicated region
    $region129: #{gridformer_forward.1} parent=5 // pred_check
      _
    $region130: #{gridformer_forward.1} parent=5 // pred_check_branch
      %903 = sbr.rel (%p900) target = $region132
    $region131: #{gridformer_forward.1} parent=5 // pred_region
      %s904 = ssub.s32 %s34, 1
      %p905 = scmp.lt.s32.totalorder %s43, 1
      %s906 = scalar_select %p905, %s43, 1
      %s907 = smul.addr %s906, 8
      %s908 = scalar_lea.vmem %s0, %s907
      %p909 = pneg %p72
      %p910 = pneg %p69
      %p911 = pneg %p93
      %p912 = pneg %p90
      %p913 = pneg %p114
      %p914 = pneg %p111
      %p915 = pneg %p135
      %p916 = pneg %p132
      %p917 = pneg %p156
      %p918 = pneg %p153
      %p919 = pneg %p177
      %p920 = pneg %p174
      %p921 = pneg %p198
      %p922 = pneg %p195
      %p923 = pneg %p219
      %p924 = pneg %p216
      %p925 = pneg %p240
      %p926 = pneg %p237
      %p927 = pneg %p261
      %p928 = pneg %p258
      %p929 = pneg %p282
      %p930 = pneg %p279
      %p931 = pneg %p303
      %p932 = pneg %p300
      %p933 = scmp.lt.s32.totalorder %s44, 1
      %s934 = scalar_select %p933, %s44, 1
      %s935 = smul.addr %s934, 4
      %s936 = smul.addr %s935, 8
      %s937 = scalar_lea.vmem %s12, %s936
      %p938 = pneg %p329
      %p939 = pneg %p326
      %p940 = scmp.lt.s32.totalorder %s44, 1
      %s941 = scalar_select %p940, %s44, 1
      %s942 = scalar_lea.vmem %s13, %s941
      %p943 = pneg %p355
      %p944 = pneg %p352
      %p945 = scmp.lt.s32.totalorder %s44, 1
      %s946 = scalar_select %p945, %s44, 1
      %s947 = smul.addr %s946, 4
      %s948 = smul.addr %s947, 8
      %s949 = scalar_lea.vmem %s14, %s948
      %p950 = pneg %p381
      %p951 = pneg %p378
      %p952 = scmp.lt.s32.totalorder %s44, 1
      %s953 = scalar_select %p952, %s44, 1
      %s954 = scalar_lea.vmem %s15, %s953
      %p955 = pneg %p407
      %p956 = pneg %p404
      %p957 = scmp.lt.s32.totalorder %s44, 1
      %s958 = scalar_select %p957, %s44, 1
      %s959 = smul.addr %s958, 4
      %s960 = smul.addr %s959, 8
      %s961 = scalar_lea.vmem %s16, %s960
      %p962 = pneg %p433
      %p963 = pneg %p430
      %p964 = scmp.lt.s32.totalorder %s44, 1
      %s965 = scalar_select %p964, %s44, 1
      %s966 = scalar_lea.vmem %s17, %s965
      %p967 = pneg %p459
      %p968 = pneg %p456
      %p969 = scmp.lt.s32.totalorder %s44, 1
      %s970 = scalar_select %p969, %s44, 1
      %s971 = smul.addr %s970, 4
      %s972 = smul.addr %s971, 8
      %s973 = scalar_lea.vmem %s18, %s972
      %p974 = pneg %p485
      %p975 = pneg %p482
      %p976 = scmp.lt.s32.totalorder %s44, 1
      %s977 = scalar_select %p976, %s44, 1
      %s978 = scalar_lea.vmem %s19, %s977
      %p979 = pneg %p511
      %p980 = pneg %p508
      %p981 = scmp.lt.s32.totalorder %s44, 1
      %s982 = scalar_select %p981, %s44, 1
      %s983 = smul.addr %s982, 4
      %s984 = smul.addr %s983, 8
      %s985 = scalar_lea.vmem %s20, %s984
      %p986 = pneg %p537
      %p987 = pneg %p534
      %p988 = scmp.lt.s32.totalorder %s44, 1
      %s989 = scalar_select %p988, %s44, 1
      %s990 = scalar_lea.vmem %s21, %s989
      %p991 = pneg %p563
      %p992 = pneg %p560
      %p993 = scmp.lt.s32.totalorder %s44, 1
      %s994 = scalar_select %p993, %s44, 1
      %s995 = smul.addr %s994, 4
      %s996 = smul.addr %s995, 8
      %s997 = scalar_lea.vmem %s22, %s996
      %p998 = pneg %p589
      %p999 = pneg %p586
      %p1000 = scmp.lt.s32.totalorder %s44, 1
      %s1001 = scalar_select %p1000, %s44, 1
      %s1002 = scalar_lea.vmem %s23, %s1001
      %p1003 = pneg %p615
      %p1004 = pneg %p612
      %p1005 = scmp.lt.s32.totalorder %s44, 1
      %s1006 = scalar_select %p1005, %s44, 1
      %s1007 = smul.addr %s1006, 8
      %s1008 = smul.addr %s1007, 8
      %s1009 = scalar_lea.vmem %s24, %s1008
      %p1010 = pneg %p641
      %p1011 = pneg %p638
      %p1012 = scmp.lt.s32.totalorder %s44, 1
      %s1013 = scalar_select %p1012, %s44, 1
      %s1014 = scalar_lea.vmem %s25, %s1013
      %p1015 = pneg %p667
      %p1016 = pneg %p664
      %p1017 = pneg %p688
      %p1018 = pneg %p685
      %p1019 = pneg %p709
      %p1020 = pneg %p706
      %p1021 = pneg %p735
      %p1022 = pneg %p732
      %p1023 = scmp.lt.s32.totalorder %s43, 1
      %s1024 = scalar_select %p1023, %s43, 1
      %s1025 = smul.addr %s1024, 8
      %s1026 = scalar_lea.vmem %s28, %s1025
      %p1027 = scmp.lt.s32.totalorder %s43, 1
      %s1028 = scalar_select %p1027, %s43, 1
      %s1029 = smul.addr %s1028, 8
      %s1030 = scalar_lea.vmem %s0, %s1029
      %p1031 = scmp.lt.s32.totalorder %s44, 1
      %s1032 = scalar_select %p1031, %s44, 1
      %s1033 = smul.addr %s1032, 4
      %s1034 = smul.addr %s1033, 8
      %s1035 = scalar_lea.vmem %s12, %s1034
      %p1036 = scmp.lt.s32.totalorder %s44, 1
      %s1037 = scalar_select %p1036, %s44, 1
      %s1038 = scalar_lea.vmem %s13, %s1037
      %p1039 = scmp.lt.s32.totalorder %s44, 1
      %s1040 = scalar_select %p1039, %s44, 1
      %s1041 = smul.addr %s1040, 4
      %s1042 = smul.addr %s1041, 8
      %s1043 = scalar_lea.vmem %s14, %s1042
      %p1044 = scmp.lt.s32.totalorder %s44, 1
      %s1045 = scalar_select %p1044, %s44, 1
      %s1046 = scalar_lea.vmem %s15, %s1045
      %p1047 = scmp.lt.s32.totalorder %s44, 1
      %s1048 = scalar_select %p1047, %s44, 1
      %s1049 = smul.addr %s1048, 4
      %s1050 = smul.addr %s1049, 8
      %s1051 = scalar_lea.vmem %s16, %s1050
      %p1052 = scmp.lt.s32.totalorder %s44, 1
      %s1053 = scalar_select %p1052, %s44, 1
      %s1054 = scalar_lea.vmem %s17, %s1053
      %p1055 = scmp.lt.s32.totalorder %s44, 1
      %s1056 = scalar_select %p1055, %s44, 1
      %s1057 = smul.addr %s1056, 4
      %s1058 = smul.addr %s1057, 8
      %s1059 = scalar_lea.vmem %s18, %s1058
      %p1060 = scmp.lt.s32.totalorder %s44, 1
      %s1061 = scalar_select %p1060, %s44, 1
      %s1062 = scalar_lea.vmem %s19, %s1061
      %p1063 = scmp.lt.s32.totalorder %s44, 1
      %s1064 = scalar_select %p1063, %s44, 1
      %s1065 = smul.addr %s1064, 4
      %s1066 = smul.addr %s1065, 8
      %s1067 = scalar_lea.vmem %s20, %s1066
      %p1068 = scmp.lt.s32.totalorder %s44, 1
      %s1069 = scalar_select %p1068, %s44, 1
      %s1070 = scalar_lea.vmem %s21, %s1069
      %p1071 = scmp.lt.s32.totalorder %s44, 1
      %s1072 = scalar_select %p1071, %s44, 1
      %s1073 = smul.addr %s1072, 4
      %s1074 = smul.addr %s1073, 8
      %s1075 = scalar_lea.vmem %s22, %s1074
      %p1076 = scmp.lt.s32.totalorder %s44, 1
      %s1077 = scalar_select %p1076, %s44, 1
      %s1078 = scalar_lea.vmem %s23, %s1077
      %p1079 = scmp.lt.s32.totalorder %s44, 1
      %s1080 = scalar_select %p1079, %s44, 1
      %s1081 = smul.addr %s1080, 8
      %s1082 = smul.addr %s1081, 8
      %s1083 = scalar_lea.vmem %s24, %s1082
      %p1084 = scmp.lt.s32.totalorder %s44, 1
      %s1085 = scalar_select %p1084, %s44, 1
      %s1086 = scalar_lea.vmem %s25, %s1085
      %p1087 = scmp.lt.s32.totalorder %s43, 1
      %s1088 = scalar_select %p1087, %s43, 1
      %s1089 = smul.addr %s1088, 8
      %s1090 = scalar_lea.vmem %s28, %s1089
      %p1091 = scmp.eq.s32.totalorder %s44, 0
      // Predicated region
      $region133: #{gridformer_forward.1} parent=131 // pred_check
        %p1092 = pneg %p1091
      $region134: #{gridformer_forward.1} parent=131 // pred_check_branch
        %1094 = sbr.rel (%p1092) target = $region136
      $region135: #{gridformer_forward.1} parent=131 // pred_region
        %v1095 = vld [vmem:[%s1030] sm:$0xff]
        %v1096 = vld [vmem:[%s2] sm:$0xff]
        %v1097 = vld [vmem:[%s3] sm:$0x1]
        %v1099 = vlaneseq
        %v1100 = vshrl.u32 %v1099, 7
        %v1101 = vsub.s32 0, %v1100
        %v1102 = vrot.slane %v1097, %v1101
        %vm1104 = vcmask 64512
        %v1106 = vsel %vm1104, %v1095, 0
        %1108 = vmatprep.subr.mxu0 0.0
        %1109 = vmatpush1.msra.mxu0 %v1096
        %1110 = vmatprep.subr.mxu0 0.0
        %1111 = vmatpush1.msra.mxu0 0.0
        %1112 = vmatprep.subr.mxu0 0.0
        %1113 = vmatpush1.msra.mxu0 0.0
        %1114 = vmatprep.subr.mxu0 0.0
        %1115 = vmatpush1.msra.mxu0 0.0
        %1116 = vmatprep.subr.mxu0 0.0
        %1117 = vmatpush1.msra.mxu0 0.0
        %1118 = vmatprep.subr.mxu0 0.0
        %1119 = vmatpush1.msra.mxu0 0.0
        %1120 = vmatprep.subr.mxu0 0.0
        %1121 = vmatpush1.msra.mxu0 0.0
        %1122 = vmatprep.subr.mxu0 0.0
        %1123 = vmatpush1.msra.mxu0 0.0
        %1124 = vmatprep.subr.mxu0 0.0
        %1125 = vmatpush1.msra.mxu0 0.0
        %1126 = vmatprep.subr.mxu0 0.0
        %1127 = vmatpush1.msra.mxu0 0.0
        %1128 = vmatprep.subr.mxu0 0.0
        %1129 = vmatpush1.msra.mxu0 0.0
        %1130 = vmatprep.subr.mxu0 0.0
        %1131 = vmatpush1.msra.mxu0 0.0
        %1132 = vmatprep.subr.mxu0 0.0
        %1133 = vmatpush1.msra.mxu0 0.0
        %1134 = vmatprep.subr.mxu0 0.0
        %1135 = vmatpush1.msra.mxu0 0.0
        %1136 = vmatprep.subr.mxu0 0.0
        %1137 = vmatpush1.msra.mxu0 0.0
        %1138 = vmatprep.subr.mxu0 0.0
        %1139 = vmatpush1.msra.mxu0 0.0
        %1140 = vmatprep.subr.mxu0 0.0
        %1141 = vmatpush1.msra.mxu0 0.0
        %1142 = vmatprep.subr.mxu0 0.0
        %1143 = vmatpush1.msra.mxu0 0.0
        %1144 = vmatprep.subr.mxu0 0.0
        %1145 = vmatpush1.msra.mxu0 0.0
        %1146 = vmatprep.subr.mxu0 0.0
        %1147 = vmatpush1.msra.mxu0 0.0
        %1148 = vmatprep.subr.mxu0 0.0
        %1149 = vmatpush1.msra.mxu0 0.0
        %1150 = vmatprep.subr.mxu0 0.0
        %1151 = vmatpush1.msra.mxu0 0.0
        %1152 = vmatprep.subr.mxu0 0.0
        %1153 = vmatpush1.msra.mxu0 0.0
        %1154 = vmatprep.subr.mxu0 0.0
        %1155 = vmatpush1.msra.mxu0 0.0
        %1156 = vmatprep.subr.mxu0 0.0
        %1157 = vmatpush1.msra.mxu0 0.0
        %1158 = vmatprep.subr.mxu0 0.0
        %1159 = vmatpush1.msra.mxu0 0.0
        %1160 = vmatprep.subr.mxu0 0.0
        %1161 = vmatpush1.msra.mxu0 0.0
        %1162 = vmatprep.subr.mxu0 0.0
        %1163 = vmatpush1.msra.mxu0 0.0
        %1164 = vmatprep.subr.mxu0 0.0
        %1165 = vmatpush1.msra.mxu0 0.0
        %1166 = vmatprep.subr.mxu0 0.0
        %1167 = vmatpush1.msra.mxu0 0.0
        %1168 = vmatprep.subr.mxu0 0.0
        %1169 = vmatpush1.msra.mxu0 0.0
        %1170 = vmatprep.subr.mxu0 0.0
        %1171 = vmatpush1.msra.mxu0 0.0
        %1172 = vmatprep.mubr.f32.mxu0 0.0
        %1173 = vmatmul.mubr.f32.gmra.mrb[0].mxu0 %v1106
        %v1174 = vpop.f32.mrb[0].mxu0
        %v1175 = vadd.f32 %v1102, %v1174
        %v1176 = vpop.f32.mrb[0].mxu0
        %1177 = vdwg.mxu0
        %v1178 = vld [vmem:[%s1] sm:$0xff]
        %v1179 = vmul.f32 %v1175, 5.656854
        %v1180 = vadd.f32 %v1179, %v1178
        %1182 = vrot.lane.b32.xlu0 %v1178, 32
        %v1183 = vpop.permute.xlu0 %1182
        %v1185 = vadd.f32 %v1179, %v1183
        %vm1186 = vcmask 261120
        %v1187 = vsel %vm1186, %v1180, 0.0
        %1188 = vadd.xlane.f32.xlu0 %v1187
        %v1189 = vpop.xlane.xlu0 %1188
        %v1190 = vrcp.pop 32.0
        %v1191 = vmul.f32 %v1189, %v1190
        %v1192 = vsub.f32 %v1180, %v1191
        %v1193 = vmul.f32 %v1192, %v1192
        %v1194 = vsel %vm1186, %v1193, 0.0
        %1195 = vadd.xlane.f32.xlu0 %v1194
        %v1196 = vpop.xlane.xlu0 %1195
        %v1197 = vrcp.pop 31.0
        %v1198 = vmul.f32 %v1196, %v1197
        %v1199 = vrsqrt.pop %v1198
        %v1200 = vmul.f32 %v1198, %v1199
        %vm1201 = vcmp.eq.f32.partialorder %v1198, inf
        %v1202 = vsel %vm1201, %v1198, %v1200
        %vm1203 = vcmp.eq.f32.partialorder %v1198, 0.0
        %v1204 = vand.u32 %v1198, 2147483648
        %v1205 = vsel %vm1203, %v1204, %v1202
        %v1206 = vadd.f32 %v1205, 1e-06
        %v1207 = vrcp.pop %v1206
        %v1208 = vmul.f32 %v1192, %v1207
        %v1209 = vld [vmem:[%s4] sm:$0xff]
        %v1210 = vld [vmem:[%s4 + $0x8] sm:$0xff]
        %v1211 = vld [vmem:[%s4 + $0x10] sm:$0xff]
        %v1212 = vld [vmem:[%s4 + $0x18] sm:$0xff]
        %v1213 = vld [vmem:[%s5] sm:$0x1]
        %v1214 = vld [vmem:[%s6] sm:$0xff]
        %v1215 = vld [vmem:[%s6 + $0x8] sm:$0xff]
        %v1216 = vld [vmem:[%s6 + $0x10] sm:$0xff]
        %v1217 = vld [vmem:[%s6 + $0x18] sm:$0xff]
        %v1218 = vld [vmem:[%s7] sm:$0x1]
        %v1220 = vlaneseq
        %v1221 = vshrl.u32 %v1220, 7
        %v1222 = vsub.s32 0, %v1221
        %v1223 = vrot.slane %v1213, %v1222
        %v1226 = vsel %vm1186, %v1208, 0
        %1228 = vmatprep.subr.mxu0 0.0
        %1229 = vmatpush1.msra.mxu0 %v1209
        %1230 = vmatprep.subr.mxu0 0.0
        %1231 = vmatpush1.msra.mxu0 %v1210
        %1232 = vmatprep.subr.mxu0 0.0
        %1233 = vmatpush1.msra.mxu0 %v1211
        %1234 = vmatprep.subr.mxu0 0.0
        %1235 = vmatpush1.msra.mxu0 %v1212
        %1236 = vmatprep.subr.mxu0 0.0
        %1237 = vmatpush1.msra.mxu0 0.0
        %1238 = vmatprep.subr.mxu0 0.0
        %1239 = vmatpush1.msra.mxu0 0.0
        %1240 = vmatprep.subr.mxu0 0.0
        %1241 = vmatpush1.msra.mxu0 0.0
        %1242 = vmatprep.subr.mxu0 0.0
        %1243 = vmatpush1.msra.mxu0 0.0
        %1244 = vmatprep.subr.mxu0 0.0
        %1245 = vmatpush1.msra.mxu0 0.0
        %1246 = vmatprep.subr.mxu0 0.0
        %1247 = vmatpush1.msra.mxu0 0.0
        %1248 = vmatprep.subr.mxu0 0.0
        %1249 = vmatpush1.msra.mxu0 0.0
        %1250 = vmatprep.subr.mxu0 0.0
        %1251 = vmatpush1.msra.mxu0 0.0
        %1252 = vmatprep.subr.mxu0 0.0
        %1253 = vmatpush1.msra.mxu0 0.0
        %1254 = vmatprep.subr.mxu0 0.0
        %1255 = vmatpush1.msra.mxu0 0.0
        %1256 = vmatprep.subr.mxu0 0.0
        %1257 = vmatpush1.msra.mxu0 0.0
        %1258 = vmatprep.subr.mxu0 0.0
        %1259 = vmatpush1.msra.mxu0 0.0
        %1260 = vmatprep.subr.mxu0 0.0
        %1261 = vmatpush1.msra.mxu0 0.0
        %1262 = vmatprep.subr.mxu0 0.0
        %1263 = vmatpush1.msra.mxu0 0.0
        %1264 = vmatprep.subr.mxu0 0.0
        %1265 = vmatpush1.msra.mxu0 0.0
        %1266 = vmatprep.subr.mxu0 0.0
        %1267 = vmatpush1.msra.mxu0 0.0
        %1268 = vmatprep.subr.mxu0 0.0
        %1269 = vmatpush1.msra.mxu0 0.0
        %1270 = vmatprep.subr.mxu0 0.0
        %1271 = vmatpush1.msra.mxu0 0.0
        %1272 = vmatprep.subr.mxu0 0.0
        %1273 = vmatpush1.msra.mxu0 0.0
        %1274 = vmatprep.subr.mxu0 0.0
        %1275 = vmatpush1.msra.mxu0 0.0
        %1276 = vmatprep.subr.mxu0 0.0
        %1277 = vmatpush1.msra.mxu0 0.0
        %1278 = vmatprep.subr.mxu0 0.0
        %1279 = vmatpush1.msra.mxu0 0.0
        %1280 = vmatprep.subr.mxu0 0.0
        %1281 = vmatpush1.msra.mxu0 0.0
        %1282 = vmatprep.subr.mxu0 0.0
        %1283 = vmatpush1.msra.mxu0 0.0
        %1284 = vmatprep.subr.mxu0 0.0
        %1285 = vmatpush1.msra.mxu0 0.0
        %1286 = vmatprep.subr.mxu0 0.0
        %1287 = vmatpush1.msra.mxu0 0.0
        %1288 = vmatprep.subr.mxu0 0.0
        %1289 = vmatpush1.msra.mxu0 0.0
        %1290 = vmatprep.subr.mxu0 0.0
        %1291 = vmatpush1.msra.mxu0 0.0
        %1292 = vmatprep.mubr.f32.mxu0 0.0
        %1293 = vmatmul.mubr.f32.gmra.mrb[0].mxu0 %v1226
        %v1294 = vpop.f32.mrb[0].mxu0
        %v1295 = vadd.f32 %v1223, %v1294
        %v1296 = vpop.f32.mrb[0].mxu0
        %1297 = vdwg.mxu0
        %1299 = vrot.lane.b32.xlu0 %v1295, 96
        %v1300 = vpop.permute.xlu0 %1299
        %v1301 = vsel %vm1104, %v1295, 0
        %v1303 = vsel %vm1104, %v1300, 0
        %1305 = vmatprep.subr.mxu0 0.0
        %1306 = vmatpush1.xpose.msra.mxu0 %v1303
        %1307 = vmatprep.subr.mxu0 0.0
        %1308 = vmatpush1.xpose.msra.mxu0 0.0
        %1309 = vmatprep.subr.mxu0 0.0
        %1310 = vmatpush1.xpose.msra.mxu0 0.0
        %1311 = vmatprep.subr.mxu0 0.0
        %1312 = vmatpush1.xpose.msra.mxu0 0.0
        %1313 = vmatprep.subr.mxu0 0.0
        %1314 = vmatpush1.xpose.msra.mxu0 0.0
        %1315 = vmatprep.subr.mxu0 0.0
        %1316 = vmatpush1.xpose.msra.mxu0 0.0
        %1317 = vmatprep.subr.mxu0 0.0
        %1318 = vmatpush1.xpose.msra.mxu0 0.0
        %1319 = vmatprep.subr.mxu0 0.0
        %1320 = vmatpush1.xpose.msra.mxu0 0.0
        %1321 = vmatprep.subr.mxu0 0.0
        %1322 = vmatpush1.xpose.msra.mxu0 0.0
        %1323 = vmatprep.subr.mxu0 0.0
        %1324 = vmatpush1.xpose.msra.mxu0 0.0
        %1325 = vmatprep.subr.mxu0 0.0
        %1326 = vmatpush1.xpose.msra.mxu0 0.0
        %1327 = vmatprep.subr.mxu0 0.0
        %1328 = vmatpush1.xpose.msra.mxu0 0.0
        %1329 = vmatprep.subr.mxu0 0.0
        %1330 = vmatpush1.xpose.msra.mxu0 0.0
        %1331 = vmatprep.subr.mxu0 0.0
        %1332 = vmatpush1.xpose.msra.mxu0 0.0
        %1333 = vmatprep.subr.mxu0 0.0
        %1334 = vmatpush1.xpose.msra.mxu0 0.0
        %1335 = vmatprep.subr.mxu0 0.0
        %1336 = vmatpush1.xpose.msra.mxu0 0.0
        %1337 = vmatprep.subr.mxu0 0.0
        %1338 = vmatpush1.xpose.msra.mxu0 0.0
        %1339 = vmatprep.subr.mxu0 0.0
        %1340 = vmatpush1.xpose.msra.mxu0 0.0
        %1341 = vmatprep.subr.mxu0 0.0
        %1342 = vmatpush1.xpose.msra.mxu0 0.0
        %1343 = vmatprep.subr.mxu0 0.0
        %1344 = vmatpush1.xpose.msra.mxu0 0.0
        %1345 = vmatprep.subr.mxu0 0.0
        %1346 = vmatpush1.xpose.msra.mxu0 0.0
        %1347 = vmatprep.subr.mxu0 0.0
        %1348 = vmatpush1.xpose.msra.mxu0 0.0
        %1349 = vmatprep.subr.mxu0 0.0
        %1350 = vmatpush1.xpose.msra.mxu0 0.0
        %1351 = vmatprep.subr.mxu0 0.0
        %1352 = vmatpush1.xpose.msra.mxu0 0.0
        %1353 = vmatprep.subr.mxu0 0.0
        %1354 = vmatpush1.xpose.msra.mxu0 0.0
        %1355 = vmatprep.subr.mxu0 0.0
        %1356 = vmatpush1.xpose.msra.mxu0 0.0
        %1357 = vmatprep.subr.mxu0 0.0
        %1358 = vmatpush1.xpose.msra.mxu0 0.0
        %1359 = vmatprep.subr.mxu0 0.0
        %1360 = vmatpush1.xpose.msra.mxu0 0.0
        %1361 = vmatprep.subr.mxu0 0.0
        %1362 = vmatpush1.xpose.msra.mxu0 0.0
        %1363 = vmatprep.subr.mxu0 0.0
        %1364 = vmatpush1.xpose.msra.mxu0 0.0
        %1365 = vmatprep.subr.mxu0 0.0
        %1366 = vmatpush1.xpose.msra.mxu0 0.0
        %1367 = vmatprep.subr.mxu0 0.0
        %1368 = vmatpush1.xpose.msra.mxu0 0.0
        %1369 = vmatprep.mubr.f32.mxu0 0.0
        %1370 = vmatmul.mubr.f32.gmra.mrb[0].mxu0 %v1301
        %v1371 = vpop.f32.mrb[0].mxu0
        %v1372 = vadd.f32 0.0, %v1371
        %v1373 = vpop.f32.mrb[0].mxu0
        %1374 = vdwg.mxu0
        %v1375 = vmul.f32 %v1372, 0.35355338
        %v1376 = vsel %vm1104, %v1375, -inf
        %1377 = vmax.xlane.f32.xlu0 %v1376
        %v1378 = vpop.xlane.xlu0 %1377
        %v1379 = vsub.f32 %v1375, %v1378
        %v1380 = vmul.f32 %v1379, 1.442695
        %v1381 = vpow.pop %v1380
        %v1382 = vsel %vm1104, %v1381, 0.0
        %1383 = vadd.xlane.f32.xlu0 %v1382
        %v1384 = vpop.xlane.xlu0 %1383
        %v1385 = vrcp.pop %v1384
        %v1386 = vmul.f32 %v1381, %v1385
        %1387 = vrot.lane.b32.xlu0 %v1295, 64
        %v1388 = vpop.permute.xlu0 %1387
        %v1391 = vsel %vm1104, %v1386, 0
        %1393 = vmatprep.subr.mxu0 0.0
        %1394 = vmatpush1.msra.mxu0 %v1388
        %1395 = vmatprep.subr.mxu0 0.0
        %1396 = vmatpush1.msra.mxu0 0.0
        %1397 = vmatprep.subr.mxu0 0.0
        %1398 = vmatpush1.msra.mxu0 0.0
        %1399 = vmatprep.subr.mxu0 0.0
        %1400 = vmatpush1.msra.mxu0 0.0
        %1401 = vmatprep.subr.mxu0 0.0
        %1402 = vmatpush1.msra.mxu0 0.0
        %1403 = vmatprep.subr.mxu0 0.0
        %1404 = vmatpush1.msra.mxu0 0.0
        %1405 = vmatprep.subr.mxu0 0.0
        %1406 = vmatpush1.msra.mxu0 0.0
        %1407 = vmatprep.subr.mxu0 0.0
        %1408 = vmatpush1.msra.mxu0 0.0
        %1409 = vmatprep.subr.mxu0 0.0
        %1410 = vmatpush1.msra.mxu0 0.0
        %1411 = vmatprep.subr.mxu0 0.0
        %1412 = vmatpush1.msra.mxu0 0.0
        %1413 = vmatprep.subr.mxu0 0.0
        %1414 = vmatpush1.msra.mxu0 0.0
        %1415 = vmatprep.subr.mxu0 0.0
        %1416 = vmatpush1.msra.mxu0 0.0
        %1417 = vmatprep.subr.mxu0 0.0
        %1418 = vmatpush1.msra.mxu0 0.0
        %1419 = vmatprep.subr.mxu0 0.0
        %1420 = vmatpush1.msra.mxu0 0.0
        %1421 = vmatprep.subr.mxu0 0.0
        %1422 = vmatpush1.msra.mxu0 0.0
        %1423 = vmatprep.subr.mxu0 0.0
        %1424 = vmatpush1.msra.mxu0 0.0
        %1425 = vmatprep.subr.mxu0 0.0
        %1426 = vmatpush1.msra.mxu0 0.0
        %1427 = vmatprep.subr.mxu0 0.0
        %1428 = vmatpush1.msra.mxu0 0.0
        %1429 = vmatprep.subr.mxu0 0.0
        %1430 = vmatpush1.msra.mxu0 0.0
        %1431 = vmatprep.subr.mxu0 0.0
        %1432 = vmatpush1.msra.mxu0 0.0
        %1433 = vmatprep.subr.mxu0 0.0
        %1434 = vmatpush1.msra.mxu0 0.0
        %1435 = vmatprep.subr.mxu0 0.0
        %1436 = vmatpush1.msra.mxu0 0.0
        %1437 = vmatprep.subr.mxu0 0.0
        %1438 = vmatpush1.msra.mxu0 0.0
        %1439 = vmatprep.subr.mxu0 0.0
        %1440 = vmatpush1.msra.mxu0 0.0
        %1441 = vmatprep.subr.mxu0 0.0
        %1442 = vmatpush1.msra.mxu0 0.0
        %1443 = vmatprep.subr.mxu0 0.0
        %1444 = vmatpush1.msra.mxu0 0.0
        %1445 = vmatprep.subr.mxu0 0.0
        %1446 = vmatpush1.msra.mxu0 0.0
        %1447 = vmatprep.subr.mxu0 0.0
        %1448 = vmatpush1.msra.mxu0 0.0
        %1449 = vmatprep.subr.mxu0 0.0
        %1450 = vmatpush1.msra.mxu0 0.0
        %1451 = vmatprep.subr.mxu0 0.0
        %1452 = vmatpush1.msra.mxu0 0.0
        %1453 = vmatprep.subr.mxu0 0.0
        %1454 = vmatpush1.msra.mxu0 0.0
        %1455 = vmatprep.subr.mxu0 0.0
        %1456 = vmatpush1.msra.mxu0 0.0
        %1457 = vmatprep.mubr.f32.mxu0 0.0
        %1458 = vmatmul.mubr.f32.gmra.mrb[0].mxu0 %v1391
        %v1459 = vpop.f32.mrb[0].mxu0
        %v1460 = vadd.f32 0.0, %v1459
        %v1461 = vpop.f32.mrb[0].mxu0
        %1462 = vdwg.mxu0
        %1463 = vst.msk [vmem:[#allocation4] sm:$0xff] %vm1104, %v1460
        %1464 = vrot.lane.b32.xlu0 %v1295, 120
        %v1465 = vpop.permute.xlu0 %1464
        %1466 = vrot.lane.b32.xlu0 %v1295, 88
        %v1467 = vpop.permute.xlu0 %1466
        %v1468 = vsel %vm1104, %v1465, 0
        %v1470 = vsel %vm1104, %v1467, 0
        %1472 = vmatprep.subr.mxu0 0.0
        %1473 = vmatpush1.xpose.msra.mxu0 %v1470
        %1474 = vmatprep.subr.mxu0 0.0
        %1475 = vmatpush1.xpose.msra.mxu0 0.0
        %1476 = vmatprep.subr.mxu0 0.0
        %1477 = vmatpush1.xpose.msra.mxu0 0.0
        %1478 = vmatprep.subr.mxu0 0.0
        %1479 = vmatpush1.xpose.msra.mxu0 0.0
        %1480 = vmatprep.subr.mxu0 0.0
        %1481 = vmatpush1.xpose.msra.mxu0 0.0
        %1482 = vmatprep.subr.mxu0 0.0
        %1483 = vmatpush1.xpose.msra.mxu0 0.0
        %1484 = vmatprep.subr.mxu0 0.0
        %1485 = vmatpush1.xpose.msra.mxu0 0.0
        %1486 = vmatprep.subr.mxu0 0.0
        %1487 = vmatpush1.xpose.msra.mxu0 0.0
        %1488 = vmatprep.subr.mxu0 0.0
        %1489 = vmatpush1.xpose.msra.mxu0 0.0
        %1490 = vmatprep.subr.mxu0 0.0
        %1491 = vmatpush1.xpose.msra.mxu0 0.0
        %1492 = vmatprep.subr.mxu0 0.0
        %1493 = vmatpush1.xpose.msra.mxu0 0.0
        %1494 = vmatprep.subr.mxu0 0.0
        %1495 = vmatpush1.xpose.msra.mxu0 0.0
        %1496 = vmatprep.subr.mxu0 0.0
        %1497 = vmatpush1.xpose.msra.mxu0 0.0
        %1498 = vmatprep.subr.mxu0 0.0
        %1499 = vmatpush1.xpose.msra.mxu0 0.0
        %1500 = vmatprep.subr.mxu0 0.0
        %1501 = vmatpush1.xpose.msra.mxu0 0.0
        %1502 = vmatprep.subr.mxu0 0.0
        %1503 = vmatpush1.xpose.msra.mxu0 0.0
        %1504 = vmatprep.subr.mxu0 0.0
        %1505 = vmatpush1.xpose.msra.mxu0 0.0
        %1506 = vmatprep.subr.mxu0 0.0
        %1507 = vmatpush1.xpose.msra.mxu0 0.0
        %1508 = vmatprep.subr.mxu0 0.0
        %1509 = vmatpush1.xpose.msra.mxu0 0.0
        %1510 = vmatprep.subr.mxu0 0.0
        %1511 = vmatpush1.xpose.msra.mxu0 0.0
        %1512 = vmatprep.subr.mxu0 0.0
        %1513 = vmatpush1.xpose.msra.mxu0 0.0
        %1514 = vmatprep.subr.mxu0 0.0
        %1515 = vmatpush1.xpose.msra.mxu0 0.0
        %1516 = vmatprep.subr.mxu0 0.0
        %1517 = vmatpush1.xpose.msra.mxu0 0.0
        %1518 = vmatprep.subr.mxu0 0.0
        %1519 = vmatpush1.xpose.msra.mxu0 0.0
        %1520 = vmatprep.subr.mxu0 0.0
        %1521 = vmatpush1.xpose.msra.mxu0 0.0
        %1522 = vmatprep.subr.mxu0 0.0
        %1523 = vmatpush1.xpose.msra.mxu0 0.0
        %1524 = vmatprep.subr.mxu0 0.0
        %1525 = vmatpush1.xpose.msra.mxu0 0.0
        %1526 = vmatprep.subr.mxu0 0.0
        %1527 = vmatpush1.xpose.msra.mxu0 0.0
        %1528 = vmatprep.subr.mxu0 0.0
        %1529 = vmatpush1.xpose.msra.mxu0 0.0
        %1530 = vmatprep.subr.mxu0 0.0
        %1531 = vmatpush1.xpose.msra.mxu0 0.0
        %1532 = vmatprep.subr.mxu0 0.0
        %1533 = vmatpush1.xpose.msra.mxu0 0.0
        %1534 = vmatprep.subr.mxu0 0.0
        %1535 = vmatpush1.xpose.msra.mxu0 0.0
        %1536 = vmatprep.mubr.f32.mxu0 0.0
        %1537 = vmatmul.mubr.f32.gmra.mrb[0].mxu0 %v1468
        %v1538 = vpop.f32.mrb[0].mxu0
        %v1539 = vadd.f32 0.0, %v1538
        %v1540 = vpop.f32.mrb[0].mxu0
        %1541 = vdwg.mxu0
        %v1542 = vmul.f32 %v1539, 0.35355338
        %v1543 = vsel %vm1104, %v1542, -inf
        %1544 = vmax.xlane.f32.xlu0 %v1543
        %v1545 = vpop.xlane.xlu0 %1544
        %v1546 = vsub.f32 %v1542, %v1545
        %v1547 = vmul.f32 %v1546, 1.442695
        %v1548 = vpow.pop %v1547
        %v1549 = vsel %vm1104, %v1548, 0.0
        %1550 = vadd.xlane.f32.xlu0 %v1549
        %v1551 = vpop.xlane.xlu0 %1550
        %v1552 = vrcp.pop %v1551
        %v1553 = vmul.f32 %v1548, %v1552
        %1554 = vrot.lane.b32.xlu0 %v1295, 56
        %v1555 = vpop.permute.xlu0 %1554
        %v1558 = vsel %vm1104, %v1553, 0
        %1560 = vmatprep.subr.mxu0 0.0
        %1561 = vmatpush1.msra.mxu0 %v1555
        %1562 = vmatprep.subr.mxu0 0.0
        %1563 = vmatpush1.msra.mxu0 0.0
        %1564 = vmatprep.subr.mxu0 0.0
        %1565 = vmatpush1.msra.mxu0 0.0
        %1566 = vmatprep.subr.mxu0 0.0
        %1567 = vmatpush1.msra.mxu0 0.0
        %1568 = vmatprep.subr.mxu0 0.0
        %1569 = vmatpush1.msra.mxu0 0.0
        %1570 = vmatprep.subr.mxu0 0.0
        %1571 = vmatpush1.msra.mxu0 0.0
        %1572 = vmatprep.subr.mxu0 0.0
        %1573 = vmatpush1.msra.mxu0 0.0
        %1574 = vmatprep.subr.mxu0 0.0
        %1575 = vmatpush1.msra.mxu0 0.0
        %1576 = vmatprep.subr.mxu0 0.0
        %1577 = vmatpush1.msra.mxu0 0.0
        %1578 = vmatprep.subr.mxu0 0.0
        %1579 = vmatpush1.msra.mxu0 0.0
        %1580 = vmatprep.subr.mxu0 0.0
        %1581 = vmatpush1.msra.mxu0 0.0
        %1582 = vmatprep.subr.mxu0 0.0
        %1583 = vmatpush1.msra.mxu0 0.0
        %1584 = vmatprep.subr.mxu0 0.0
        %1585 = vmatpush1.msra.mxu0 0.0
        %1586 = vmatprep.subr.mxu0 0.0
        %1587 = vmatpush1.msra.mxu0 0.0
        %1588 = vmatprep.subr.mxu0 0.0
        %1589 = vmatpush1.msra.mxu0 0.0
        %1590 = vmatprep.subr.mxu0 0.0
        %1591 = vmatpush1.msra.mxu0 0.0
        %1592 = vmatprep.subr.mxu0 0.0
        %1593 = vmatpush1.msra.mxu0 0.0
        %1594 = vmatprep.subr.mxu0 0.0
        %1595 = vmatpush1.msra.mxu0 0.0
        %1596 = vmatprep.subr.mxu0 0.0
        %1597 = vmatpush1.msra.mxu0 0.0
        %1598 = vmatprep.subr.mxu0 0.0
        %1599 = vmatpush1.msra.mxu0 0.0
        %1600 = vmatprep.subr.mxu0 0.0
        %1601 = vmatpush1.msra.mxu0 0.0
        %1602 = vmatprep.subr.mxu0 0.0
        %1603 = vmatpush1.msra.mxu0 0.0
        %1604 = vmatprep.subr.mxu0 0.0
        %1605 = vmatpush1.msra.mxu0 0.0
        %1606 = vmatprep.subr.mxu0 0.0
        %1607 = vmatpush1.msra.mxu0 0.0
        %1608 = vmatprep.subr.mxu0 0.0
        %1609 = vmatpush1.msra.mxu0 0.0
        %1610 = vmatprep.subr.mxu0 0.0
        %1611 = vmatpush1.msra.mxu0 0.0
        %1612 = vmatprep.subr.mxu0 0.0
        %1613 = vmatpush1.msra.mxu0 0.0
        %1614 = vmatprep.subr.mxu0 0.0
        %1615 = vmatpush1.msra.mxu0 0.0
        %1616 = vmatprep.subr.mxu0 0.0
        %1617 = vmatpush1.msra.mxu0 0.0
        %1618 = vmatprep.subr.mxu0 0.0
        %1619 = vmatpush1.msra.mxu0 0.0
        %1620 = vmatprep.subr.mxu0 0.0
        %1621 = vmatpush1.msra.mxu0 0.0
        %1622 = vmatprep.subr.mxu0 0.0
        %1623 = vmatpush1.msra.mxu0 0.0
        %1624 = vmatprep.mubr.f32.mxu0 0.0
        %1625 = vmatmul.mubr.f32.gmra.mrb[0].mxu0 %v1558
        %v1626 = vpop.f32.mrb[0].mxu0
        %v1627 = vadd.f32 0.0, %v1626
        %v1628 = vpop.f32.mrb[0].mxu0
        %1629 = vdwg.mxu0
        %1631 = vrot.lane.b32.xlu0 %v1627, 8
        %v1632 = vpop.permute.xlu0 %1631
        %vm1634 = vcmask 130112
        %1635 = vst.msk [vmem:[#allocation4] sm:$0xff] %vm1634, %v1632
        %1636 = vrot.lane.b32.xlu0 %v1295, 112
        %v1637 = vpop.permute.xlu0 %1636
        %1638 = vrot.lane.b32.xlu0 %v1295, 80
        %v1639 = vpop.permute.xlu0 %1638
        %v1640 = vsel %vm1104, %v1637, 0
        %v1642 = vsel %vm1104, %v1639, 0
        %1644 = vmatprep.subr.mxu0 0.0
        %1645 = vmatpush1.xpose.msra.mxu0 %v1642
        %1646 = vmatprep.subr.mxu0 0.0
        %1647 = vmatpush1.xpose.msra.mxu0 0.0
        %1648 = vmatprep.subr.mxu0 0.0
        %1649 = vmatpush1.xpose.msra.mxu0 0.0
        %1650 = vmatprep.subr.mxu0 0.0
        %1651 = vmatpush1.xpose.msra.mxu0 0.0
        %1652 = vmatprep.subr.mxu0 0.0
        %1653 = vmatpush1.xpose.msra.mxu0 0.0
        %1654 = vmatprep.subr.mxu0 0.0
        %1655 = vmatpush1.xpose.msra.mxu0 0.0
        %1656 = vmatprep.subr.mxu0 0.0
        %1657 = vmatpush1.xpose.msra.mxu0 0.0
        %1658 = vmatprep.subr.mxu0 0.0
        %1659 = vmatpush1.xpose.msra.mxu0 0.0
        %1660 = vmatprep.subr.mxu0 0.0
        %1661 = vmatpush1.xpose.msra.mxu0 0.0
        %1662 = vmatprep.subr.mxu0 0.0
        %1663 = vmatpush1.xpose.msra.mxu0 0.0
        %1664 = vmatprep.subr.mxu0 0.0
        %1665 = vmatpush1.xpose.msra.mxu0 0.0
        %1666 = vmatprep.subr.mxu0 0.0
        %1667 = vmatpush1.xpose.msra.mxu0 0.0
        %1668 = vmatprep.subr.mxu0 0.0
        %1669 = vmatpush1.xpose.msra.mxu0 0.0
        %1670 = vmatprep.subr.mxu0 0.0
        %1671 = vmatpush1.xpose.msra.mxu0 0.0
        %1672 = vmatprep.subr.mxu0 0.0
        %1673 = vmatpush1.xpose.msra.mxu0 0.0
        %1674 = vmatprep.subr.mxu0 0.0
        %1675 = vmatpush1.xpose.msra.mxu0 0.0
        %1676 = vmatprep.subr.mxu0 0.0
        %1677 = vmatpush1.xpose.msra.mxu0 0.0
        %1678 = vmatprep.subr.mxu0 0.0
        %1679 = vmatpush1.xpose.msra.mxu0 0.0
        %1680 = vmatprep.subr.mxu0 0.0
        %1681 = vmatpush1.xpose.msra.mxu0 0.0
        %1682 = vmatprep.subr.mxu0 0.0
        %1683 = vmatpush1.xpose.msra.mxu0 0.0
        %1684 = vmatprep.subr.mxu0 0.0
        %1685 = vmatpush1.xpose.msra.mxu0 0.0
        %1686 = vmatprep.subr.mxu0 0.0
        %1687 = vmatpush1.xpose.msra.mxu0 0.0
        %1688 = vmatprep.subr.mxu0 0.0
        %1689 = vmatpush1.xpose.msra.mxu0 0.0
        %1690 = vmatprep.subr.mxu0 0.0
        %1691 = vmatpush1.xpose.msra.mxu0 0.0
        %1692 = vmatprep.subr.mxu0 0.0
        %1693 = vmatpush1.xpose.msra.mxu0 0.0
        %1694 = vmatprep.subr.mxu0 0.0
        %1695 = vmatpush1.xpose.msra.mxu0 0.0
        %1696 = vmatprep.subr.mxu0 0.0
        %1697 = vmatpush1.xpose.msra.mxu0 0.0
        %1698 = vmatprep.subr.mxu0 0.0
        %1699 = vmatpush1.xpose.msra.mxu0 0.0
        %1700 = vmatprep.subr.mxu0 0.0
        %1701 = vmatpush1.xpose.msra.mxu0 0.0
        %1702 = vmatprep.subr.mxu0 0.0
        %1703 = vmatpush1.xpose.msra.mxu0 0.0
        %1704 = vmatprep.subr.mxu0 0.0
        %1705 = vmatpush1.xpose.msra.mxu0 0.0
        %1706 = vmatprep.subr.mxu0 0.0
        %1707 = vmatpush1.xpose.msra.mxu0 0.0
        %1708 = vmatprep.mubr.f32.mxu0 0.0
        %1709 = vmatmul.mubr.f32.gmra.mrb[0].mxu0 %v1640
        %v1710 = vpop.f32.mrb[0].mxu0
        %v1711 = vadd.f32 0.0, %v1710
        %v1712 = vpop.f32.mrb[0].mxu0
        %1713 = vdwg.mxu0
        %v1714 = vmul.f32 %v1711, 0.35355338
        %v1715 = vsel %vm1104, %v1714, -inf
        %1716 = vmax.xlane.f32.xlu0 %v1715
        %v1717 = vpop.xlane.xlu0 %1716
        %v1718 = vsub.f32 %v1714, %v1717
        %v1719 = vmul.f32 %v1718, 1.442695
        %v1720 = vpow.pop %v1719
        %v1721 = vsel %vm1104, %v1720, 0.0
        %1722 = vadd.xlane.f32.xlu0 %v1721
        %v1723 = vpop.xlane.xlu0 %1722
        %v1724 = vrcp.pop %v1723
        %v1725 = vmul.f32 %v1720, %v1724
        %1726 = vrot.lane.b32.xlu0 %v1295, 48
        %v1727 = vpop.permute.xlu0 %1726
        %v1730 = vsel %vm1104, %v1725, 0
        %1732 = vmatprep.subr.mxu0 0.0
        %1733 = vmatpush1.msra.mxu0 %v1727
        %1734 = vmatprep.subr.mxu0 0.0
        %1735 = vmatpush1.msra.mxu0 0.0
        %1736 = vmatprep.subr.mxu0 0.0
        %1737 = vmatpush1.msra.mxu0 0.0
        %1738 = vmatprep.subr.mxu0 0.0
        %1739 = vmatpush1.msra.mxu0 0.0
        %1740 = vmatprep.subr.mxu0 0.0
        %1741 = vmatpush1.msra.mxu0 0.0
        %1742 = vmatprep.subr.mxu0 0.0
        %1743 = vmatpush1.msra.mxu0 0.0
        %1744 = vmatprep.subr.mxu0 0.0
        %1745 = vmatpush1.msra.mxu0 0.0
        %1746 = vmatprep.subr.mxu0 0.0
        %1747 = vmatpush1.msra.mxu0 0.0
        %1748 = vmatprep.subr.mxu0 0.0
        %1749 = vmatpush1.msra.mxu0 0.0
        %1750 = vmatprep.subr.mxu0 0.0
        %1751 = vmatpush1.msra.mxu0 0.0
        %1752 = vmatprep.subr.mxu0 0.0
        %1753 = vmatpush1.msra.mxu0 0.0
        %1754 = vmatprep.subr.mxu0 0.0
        %1755 = vmatpush1.msra.mxu0 0.0
        %1756 = vmatprep.subr.mxu0 0.0
        %1757 = vmatpush1.msra.mxu0 0.0
        %1758 = vmatprep.subr.mxu0 0.0
        %1759 = vmatpush1.msra.mxu0 0.0
        %1760 = vmatprep.subr.mxu0 0.0
        %1761 = vmatpush1.msra.mxu0 0.0
        %1762 = vmatprep.subr.mxu0 0.0
        %1763 = vmatpush1.msra.mxu0 0.0
        %1764 = vmatprep.subr.mxu0 0.0
        %1765 = vmatpush1.msra.mxu0 0.0
        %1766 = vmatprep.subr.mxu0 0.0
        %1767 = vmatpush1.msra.mxu0 0.0
        %1768 = vmatprep.subr.mxu0 0.0
        %1769 = vmatpush1.msra.mxu0 0.0
        %1770 = vmatprep.subr.mxu0 0.0
        %1771 = vmatpush1.msra.mxu0 0.0
        %1772 = vmatprep.subr.mxu0 0.0
        %1773 = vmatpush1.msra.mxu0 0.0
        %1774 = vmatprep.subr.mxu0 0.0
        %1775 = vmatpush1.msra.mxu0 0.0
        %1776 = vmatprep.subr.mxu0 0.0
        %1777 = vmatpush1.msra.mxu0 0.0
        %1778 = vmatprep.subr.mxu0 0.0
        %1779 = vmatpush1.msra.mxu0 0.0
        %1780 = vmatprep.subr.mxu0 0.0
        %1781 = vmatpush1.msra.mxu0 0.0
        %1782 = vmatprep.subr.mxu0 0.0
        %1783 = vmatpush1.msra.mxu0 0.0
        %1784 = vmatprep.subr.mxu0 0.0
        %1785 = vmatpush1.msra.mxu0 0.0
        %1786 = vmatprep.subr.mxu0 0.0
        %1787 = vmatpush1.msra.mxu0 0.0
        %1788 = vmatprep.subr.mxu0 0.0
        %1789 = vmatpush1.msra.mxu0 0.0
        %1790 = vmatprep.subr.mxu0 0.0
        %1791 = vmatpush1.msra.mxu0 0.0
        %1792 = vmatprep.subr.mxu0 0.0
        %1793 = vmatpush1.msra.mxu0 0.0
        %1794 = vmatprep.subr.mxu0 0.0
        %1795 = vmatpush1.msra.mxu0 0.0
        %1796 = vmatprep.mubr.f32.mxu0 0.0
        %1797 = vmatmul.mubr.f32.gmra.mrb[0].mxu0 %v1730
        %v1798 = vpop.f32.mrb[0].mxu0
        %v1799 = vadd.f32 0.0, %v1798
        %v1800 = vpop.f32.mrb[0].mxu0
        %1801 = vdwg.mxu0
        %1803 = vrot.lane.b32.xlu0 %v1799, 16
        %v1804 = vpop.permute.xlu0 %1803
        %vm1806 = vcmask 195712
        %1807 = vst.msk [vmem:[#allocation4] sm:$0xff] %vm1806, %v1804
        %1808 = vrot.lane.b32.xlu0 %v1295, 104
        %v1809 = vpop.permute.xlu0 %1808
        %1810 = vrot.lane.b32.xlu0 %v1295, 72
        %v1811 = vpop.permute.xlu0 %1810
        %v1812 = vsel %vm1104, %v1809, 0
        %v1814 = vsel %vm1104, %v1811, 0
        %1816 = vmatprep.subr.mxu0 0.0
        %1817 = vmatpush1.xpose.msra.mxu0 %v1814
        %1818 = vmatprep.subr.mxu0 0.0
        %1819 = vmatpush1.xpose.msra.mxu0 0.0
        %1820 = vmatprep.subr.mxu0 0.0
        %1821 = vmatpush1.xpose.msra.mxu0 0.0
        %1822 = vmatprep.subr.mxu0 0.0
        %1823 = vmatpush1.xpose.msra.mxu0 0.0
        %1824 = vmatprep.subr.mxu0 0.0
        %1825 = vmatpush1.xpose.msra.mxu0 0.0
        %1826 = vmatprep.subr.mxu0 0.0
        %1827 = vmatpush1.xpose.msra.mxu0 0.0
        %1828 = vmatprep.subr.mxu0 0.0
        %1829 = vmatpush1.xpose.msra.mxu0 0.0
        %1830 = vmatprep.subr.mxu0 0.0
        %1831 = vmatpush1.xpose.msra.mxu0 0.0
        %1832 = vmatprep.subr.mxu0 0.0
        %1833 = vmatpush1.xpose.msra.mxu0 0.0
        %1834 = vmatprep.subr.mxu0 0.0
        %1835 = vmatpush1.xpose.msra.mxu0 0.0
        %1836 = vmatprep.subr.mxu0 0.0
        %1837 = vmatpush1.xpose.msra.mxu0 0.0
        %1838 = vmatprep.subr.mxu0 0.0
        %1839 = vmatpush1.xpose.msra.mxu0 0.0
        %1840 = vmatprep.subr.mxu0 0.0
        %1841 = vmatpush1.xpose.msra.mxu0 0.0
        %1842 = vmatprep.subr.mxu0 0.0
        %1843 = vmatpush1.xpose.msra.mxu0 0.0
        %1844 = vmatprep.subr.mxu0 0.0
        %1845 = vmatpush1.xpose.msra.mxu0 0.0
        %1846 = vmatprep.subr.mxu0 0.0
        %1847 = vmatpush1.xpose.msra.mxu0 0.0
        %1848 = vmatprep.subr.mxu0 0.0
        %1849 = vmatpush1.xpose.msra.mxu0 0.0
        %1850 = vmatprep.subr.mxu0 0.0
        %1851 = vmatpush1.xpose.msra.mxu0 0.0
        %1852 = vmatprep.subr.mxu0 0.0
        %1853 = vmatpush1.xpose.msra.mxu0 0.0
        %1854 = vmatprep.subr.mxu0 0.0
        %1855 = vmatpush1.xpose.msra.mxu0 0.0
        %1856 = vmatprep.subr.mxu0 0.0
        %1857 = vmatpush1.xpose.msra.mxu0 0.0
        %1858 = vmatprep.subr.mxu0 0.0
        %1859 = vmatpush1.xpose.msra.mxu0 0.0
        %1860 = vmatprep.subr.mxu0 0.0
        %1861 = vmatpush1.xpose.msra.mxu0 0.0
        %1862 = vmatprep.subr.mxu0 0.0
        %1863 = vmatpush1.xpose.msra.mxu0 0.0
        %1864 = vmatprep.subr.mxu0 0.0
        %1865 = vmatpush1.xpose.msra.mxu0 0.0
        %1866 = vmatprep.subr.mxu0 0.0
        %1867 = vmatpush1.xpose.msra.mxu0 0.0
        %1868 = vmatprep.subr.mxu0 0.0
        %1869 = vmatpush1.xpose.msra.mxu0 0.0
        %1870 = vmatprep.subr.mxu0 0.0
        %1871 = vmatpush1.xpose.msra.mxu0 0.0
        %1872 = vmatprep.subr.mxu0 0.0
        %1873 = vmatpush1.xpose.msra.mxu0 0.0
        %1874 = vmatprep.subr.mxu0 0.0
        %1875 = vmatpush1.xpose.msra.mxu0 0.0
        %1876 = vmatprep.subr.mxu0 0.0
        %1877 = vmatpush1.xpose.msra.mxu0 0.0
        %1878 = vmatprep.subr.mxu0 0.0
        %1879 = vmatpush1.xpose.msra.mxu0 0.0
        %1880 = vmatprep.mubr.f32.mxu0 0.0
        %1881 = vmatmul.mubr.f32.gmra.mrb[0].mxu0 %v1812
        %v1882 = vpop.f32.mrb[0].mxu0
        %v1883 = vadd.f32 0.0, %v1882
        %v1884 = vpop.f32.mrb[0].mxu0
        %1885 = vdwg.mxu0
        %v1886 = vmul.f32 %v1883, 0.35355338
        %v1887 = vsel %vm1104, %v1886, -inf
        %1888 = vmax.xlane.f32.xlu0 %v1887
        %v1889 = vpop.xlane.xlu0 %1888
        %v1890 = vsub.f32 %v1886, %v1889
        %v1891 = vmul.f32 %v1890, 1.442695
        %v1892 = vpow.pop %v1891
        %v1893 = vsel %vm1104, %v1892, 0.0
        %1894 = vadd.xlane.f32.xlu0 %v1893
        %v1895 = vpop.xlane.xlu0 %1894
        %v1896 = vrcp.pop %v1895
        %v1897 = vmul.f32 %v1892, %v1896
        %1898 = vrot.lane.b32.xlu0 %v1295, 40
        %v1899 = vpop.permute.xlu0 %1898
        %v1902 = vsel %vm1104, %v1897, 0
        %1904 = vmatprep.subr.mxu0 0.0
        %1905 = vmatpush1.msra.mxu0 %v1899
        %1906 = vmatprep.subr.mxu0 0.0
        %1907 = vmatpush1.msra.mxu0 0.0
        %1908 = vmatprep.subr.mxu0 0.0
        %1909 = vmatpush1.msra.mxu0 0.0
        %1910 = vmatprep.subr.mxu0 0.0
        %1911 = vmatpush1.msra.mxu0 0.0
        %1912 = vmatprep.subr.mxu0 0.0
        %1913 = vmatpush1.msra.mxu0 0.0
        %1914 = vmatprep.subr.mxu0 0.0
        %1915 = vmatpush1.msra.mxu0 0.0
        %1916 = vmatprep.subr.mxu0 0.0
        %1917 = vmatpush1.msra.mxu0 0.0
        %1918 = vmatprep.subr.mxu0 0.0
        %1919 = vmatpush1.msra.mxu0 0.0
        %1920 = vmatprep.subr.mxu0 0.0
        %1921 = vmatpush1.msra.mxu0 0.0
        %1922 = vmatprep.subr.mxu0 0.0
        %1923 = vmatpush1.msra.mxu0 0.0
        %1924 = vmatprep.subr.mxu0 0.0
        %1925 = vmatpush1.msra.mxu0 0.0
        %1926 = vmatprep.subr.mxu0 0.0
        %1927 = vmatpush1.msra.mxu0 0.0
        %1928 = vmatprep.subr.mxu0 0.0
        %1929 = vmatpush1.msra.mxu0 0.0
        %1930 = vmatprep.subr.mxu0 0.0
        %1931 = vmatpush1.msra.mxu0 0.0
        %1932 = vmatprep.subr.mxu0 0.0
        %1933 = vmatpush1.msra.mxu0 0.0
        %1934 = vmatprep.subr.mxu0 0.0
        %1935 = vmatpush1.msra.mxu0 0.0
        %1936 = vmatprep.subr.mxu0 0.0
        %1937 = vmatpush1.msra.mxu0 0.0
        %1938 = vmatprep.subr.mxu0 0.0
        %1939 = vmatpush1.msra.mxu0 0.0
        %1940 = vmatprep.subr.mxu0 0.0
        %1941 = vmatpush1.msra.mxu0 0.0
        %1942 = vmatprep.subr.mxu0 0.0
        %1943 = vmatpush1.msra.mxu0 0.0
        %1944 = vmatprep.subr.mxu0 0.0
        %1945 = vmatpush1.msra.mxu0 0.0
        %1946 = vmatprep.subr.mxu0 0.0
        %1947 = vmatpush1.msra.mxu0 0.0
        %1948 = vmatprep.subr.mxu0 0.0
        %1949 = vmatpush1.msra.mxu0 0.0
        %1950 = vmatprep.subr.mxu0 0.0
        %1951 = vmatpush1.msra.mxu0 0.0
        %1952 = vmatprep.subr.mxu0 0.0
        %1953 = vmatpush1.msra.mxu0 0.0
        %1954 = vmatprep.subr.mxu0 0.0
        %1955 = vmatpush1.msra.mxu0 0.0
        %1956 = vmatprep.subr.mxu0 0.0
        %1957 = vmatpush1.msra.mxu0 0.0
        %1958 = vmatprep.subr.mxu0 0.0
        %1959 = vmatpush1.msra.mxu0 0.0
        %1960 = vmatprep.subr.mxu0 0.0
        %1961 = vmatpush1.msra.mxu0 0.0
        %1962 = vmatprep.subr.mxu0 0.0
        %1963 = vmatpush1.msra.mxu0 0.0
        %1964 = vmatprep.subr.mxu0 0.0
        %1965 = vmatpush1.msra.mxu0 0.0
        %1966 = vmatprep.subr.mxu0 0.0
        %1967 = vmatpush1.msra.mxu0 0.0
        %1968 = vmatprep.mubr.f32.mxu0 0.0
        %1969 = vmatmul.mubr.f32.gmra.mrb[0].mxu0 %v1902
        %v1970 = vpop.f32.mrb[0].mxu0
        %v1971 = vadd.f32 0.0, %v1970
        %v1972 = vpop.f32.mrb[0].mxu0
        %1973 = vdwg.mxu0
        %1975 = vrot.lane.b32.xlu0 %v1971, 24
        %v1976 = vpop.permute.xlu0 %1975
        %vm1978 = vcmask 261312
        %1979 = vst.msk [vmem:[#allocation4] sm:$0xff] %vm1978, %v1976
        %v1980 = vld [vmem:[#allocation4] sm:$0xff]
        %v1982 = vlaneseq
        %v1983 = vshrl.u32 %v1982, 7
        %v1984 = vsub.s32 0, %v1983
        %v1985 = vrot.slane %v1218, %v1984
        %v1988 = vsel %vm1186, %v1980, 0
        %1990 = vmatprep.subr.mxu0 0.0
        %1991 = vmatpush1.msra.mxu0 %v1214
        %1992 = vmatprep.subr.mxu0 0.0
        %1993 = vmatpush1.msra.mxu0 %v1215
        %1994 = vmatprep.subr.mxu0 0.0
        %1995 = vmatpush1.msra.mxu0 %v1216
        %1996 = vmatprep.subr.mxu0 0.0
        %1997 = vmatpush1.msra.mxu0 %v1217
        %1998 = vmatprep.subr.mxu0 0.0
        %1999 = vmatpush1.msra.mxu0 0.0
        %2000 = vmatprep.subr.mxu0 0.0
        %2001 = vmatpush1.msra.mxu0 0.0
        %2002 = vmatprep.subr.mxu0 0.0
        %2003 = vmatpush1.msra.mxu0 0.0
        %2004 = vmatprep.subr.mxu0 0.0
        %2005 = vmatpush1.msra.mxu0 0.0
        %2006 = vmatprep.subr.mxu0 0.0
        %2007 = vmatpush1.msra.mxu0 0.0
        %2008 = vmatprep.subr.mxu0 0.0
        %2009 = vmatpush1.msra.mxu0 0.0
        %2010 = vmatprep.subr.mxu0 0.0
        %2011 = vmatpush1.msra.mxu0 0.0
        %2012 = vmatprep.subr.mxu0 0.0
        %2013 = vmatpush1.msra.mxu0 0.0
        %2014 = vmatprep.subr.mxu0 0.0
        %2015 = vmatpush1.msra.mxu0 0.0
        %2016 = vmatprep.subr.mxu0 0.0
        %2017 = vmatpush1.msra.mxu0 0.0
        %2018 = vmatprep.subr.mxu0 0.0
        %2019 = vmatpush1.msra.mxu0 0.0
        %2020 = vmatprep.subr.mxu0 0.0
        %2021 = vmatpush1.msra.mxu0 0.0
        %2022 = vmatprep.subr.mxu0 0.0
        %2023 = vmatpush1.msra.mxu0 0.0
        %2024 = vmatprep.subr.mxu0 0.0
        %2025 = vmatpush1.msra.mxu0 0.0
        %2026 = vmatprep.subr.mxu0 0.0
        %2027 = vmatpush1.msra.mxu0 0.0
        %2028 = vmatprep.subr.mxu0 0.0
        %2029 = vmatpush1.msra.mxu0 0.0
        %2030 = vmatprep.subr.mxu0 0.0
        %2031 = vmatpush1.msra.mxu0 0.0
        %2032 = vmatprep.subr.mxu0 0.0
        %2033 = vmatpush1.msra.mxu0 0.0
        %2034 = vmatprep.subr.mxu0 0.0
        %2035 = vmatpush1.msra.mxu0 0.0
        %2036 = vmatprep.subr.mxu0 0.0
        %2037 = vmatpush1.msra.mxu0 0.0
        %2038 = vmatprep.subr.mxu0 0.0
        %2039 = vmatpush1.msra.mxu0 0.0
        %2040 = vmatprep.subr.mxu0 0.0
        %2041 = vmatpush1.msra.mxu0 0.0
        %2042 = vmatprep.subr.mxu0 0.0
        %2043 = vmatpush1.msra.mxu0 0.0
        %2044 = vmatprep.subr.mxu0 0.0
        %2045 = vmatpush1.msra.mxu0 0.0
        %2046 = vmatprep.subr.mxu0 0.0
        %2047 = vmatpush1.msra.mxu0 0.0
        %2048 = vmatprep.subr.mxu0 0.0
        %2049 = vmatpush1.msra.mxu0 0.0
        %2050 = vmatprep.subr.mxu0 0.0
        %2051 = vmatpush1.msra.mxu0 0.0
        %2052 = vmatprep.subr.mxu0 0.0
        %2053 = vmatpush1.msra.mxu0 0.0
        %2054 = vmatprep.mubr.f32.mxu0 0.0
        %2055 = vmatmul.mubr.f32.gmra.mrb[0].mxu0 %v1988
        %v2056 = vpop.f32.mrb[0].mxu0
        %v2057 = vadd.f32 %v1985, %v2056
        %v2058 = vpop.f32.mrb[0].mxu0
        %2059 = vdwg.mxu0
        %v2060 = vadd.f32 %v1180, %v2057
        %v2061 = vsel %vm1186, %v2060, 0.0
        %2062 = vadd.xlane.f32.xlu0 %v2061
        %v2063 = vpop.xlane.xlu0 %2062
        %v2064 = vmul.f32 %v2063, %v1190
        %v2065 = vsub.f32 %v2060, %v2064
        %v2066 = vmul.f32 %v2065, %v2065
        %v2067 = vsel %vm1186, %v2066, 0.0
        %2068 = vadd.xlane.f32.xlu0 %v2067
        %v2069 = vpop.xlane.xlu0 %2068
        %v2070 = vmul.f32 %v2069, %v1197
        %v2071 = vrsqrt.pop %v2070
        %v2072 = vmul.f32 %v2070, %v2071
        %vm2073 = vcmp.eq.f32.partialorder %v2070, inf
        %v2074 = vsel %vm2073, %v2070, %v2072
        %vm2075 = vcmp.eq.f32.partialorder %v2070, 0.0
        %v2076 = vand.u32 %v2070, 2147483648
        %v2077 = vsel %vm2075, %v2076, %v2074
        %v2078 = vadd.f32 %v2077, 1e-06
        %v2079 = vrcp.pop %v2078
        %v2080 = vmul.f32 %v2065, %v2079
        %v2081 = vld [vmem:[%s8] sm:$0xff]
        %v2082 = vld [vmem:[%s8 + $0x8] sm:$0xff]
        %v2083 = vld [vmem:[%s8 + $0x10] sm:$0xff]
        %v2084 = vld [vmem:[%s8 + $0x18] sm:$0xff]
        %v2085 = vld [vmem:[%s9] sm:$0x1]
        %v2086 = vld [vmem:[%s10] sm:$0xff]
        %v2087 = vld [vmem:[%s10 + $0x8] sm:$0xff]
        %v2088 = vld [vmem:[%s10 + $0x10] sm:$0xff]
        %v2089 = vld [vmem:[%s10 + $0x18] sm:$0xff]
        %v2090 = vld [vmem:[%s10 + $0x20] sm:$0xff]
        %v2091 = vld [vmem:[%s10 + $0x28] sm:$0xff]
        %v2092 = vld [vmem:[%s10 + $0x30] sm:$0xff]
        %v2093 = vld [vmem:[%s10 + $0x38] sm:$0xff]
        %v2094 = vld [vmem:[%s11] sm:$0x1]
        %v2096 = vlaneseq
        %v2097 = vshrl.u32 %v2096, 7
        %v2098 = vsub.s32 0, %v2097
        %v2099 = vrot.slane %v2085, %v2098
        %v2102 = vsel %vm1186, %v2080, 0
        %2104 = vmatprep.subr.mxu0 0.0
        %2105 = vmatpush1.msra.mxu0 %v2081
        %2106 = vmatprep.subr.mxu0 0.0
        %2107 = vmatpush1.msra.mxu0 %v2082
        %2108 = vmatprep.subr.mxu0 0.0
        %2109 = vmatpush1.msra.mxu0 %v2083
        %2110 = vmatprep.subr.mxu0 0.0
        %2111 = vmatpush1.msra.mxu0 %v2084
        %2112 = vmatprep.subr.mxu0 0.0
        %2113 = vmatpush1.msra.mxu0 0.0
        %2114 = vmatprep.subr.mxu0 0.0
        %2115 = vmatpush1.msra.mxu0 0.0
        %2116 = vmatprep.subr.mxu0 0.0
        %2117 = vmatpush1.msra.mxu0 0.0
        %2118 = vmatprep.subr.mxu0 0.0
        %2119 = vmatpush1.msra.mxu0 0.0
        %2120 = vmatprep.subr.mxu0 0.0
        %2121 = vmatpush1.msra.mxu0 0.0
        %2122 = vmatprep.subr.mxu0 0.0
        %2123 = vmatpush1.msra.mxu0 0.0
        %2124 = vmatprep.subr.mxu0 0.0
        %2125 = vmatpush1.msra.mxu0 0.0
        %2126 = vmatprep.subr.mxu0 0.0
        %2127 = vmatpush1.msra.mxu0 0.0
        %2128 = vmatprep.subr.mxu0 0.0
        %2129 = vmatpush1.msra.mxu0 0.0
        %2130 = vmatprep.subr.mxu0 0.0
        %2131 = vmatpush1.msra.mxu0 0.0
        %2132 = vmatprep.subr.mxu0 0.0
        %2133 = vmatpush1.msra.mxu0 0.0
        %2134 = vmatprep.subr.mxu0 0.0
        %2135 = vmatpush1.msra.mxu0 0.0
        %2136 = vmatprep.subr.mxu0 0.0
        %2137 = vmatpush1.msra.mxu0 0.0
        %2138 = vmatprep.subr.mxu0 0.0
        %2139 = vmatpush1.msra.mxu0 0.0
        %2140 = vmatprep.subr.mxu0 0.0
        %2141 = vmatpush1.msra.mxu0 0.0
        %2142 = vmatprep.subr.mxu0 0.0
        %2143 = vmatpush1.msra.mxu0 0.0
        %2144 = vmatprep.subr.mxu0 0.0
        %2145 = vmatpush1.msra.mxu0 0.0
        %2146 = vmatprep.subr.mxu0 0.0
        %2147 = vmatpush1.msra.mxu0 0.0
        %2148 = vmatprep.subr.mxu0 0.0
        %2149 = vmatpush1.msra.mxu0 0.0
        %2150 = vmatprep.subr.mxu0 0.0
        %2151 = vmatpush1.msra.mxu0 0.0
        %2152 = vmatprep.subr.mxu0 0.0
        %2153 = vmatpush1.msra.mxu0 0.0
        %2154 = vmatprep.subr.mxu0 0.0
        %2155 = vmatpush1.msra.mxu0 0.0
        %2156 = vmatprep.subr.mxu0 0.0
        %2157 = vmatpush1.msra.mxu0 0.0
        %2158 = vmatprep.subr.mxu0 0.0
        %2159 = vmatpush1.msra.mxu0 0.0
        %2160 = vmatprep.subr.mxu0 0.0
        %2161 = vmatpush1.msra.mxu0 0.0
        %2162 = vmatprep.subr.mxu0 0.0
        %2163 = vmatpush1.msra.mxu0 0.0
        %2164 = vmatprep.subr.mxu0 0.0
        %2165 = vmatpush1.msra.mxu0 0.0
        %2166 = vmatprep.subr.mxu0 0.0
        %2167 = vmatpush1.msra.mxu0 0.0
        %2168 = vmatprep.mubr.f32.mxu0 0.0
        %2169 = vmatmul.mubr.f32.gmra.mrb[0].mxu0 %v2102
        %v2170 = vpop.f32.mrb[0].mxu0
        %v2171 = vadd.f32 %v2099, %v2170
        %v2172 = vpop.f32.mrb[0].mxu0
        %2173 = vdwg.mxu0
        %v2174 = vmax.f32 %v2171, 0.0
        %v2176 = vlaneseq
        %v2177 = vshrl.u32 %v2176, 7
        %v2178 = vsub.s32 0, %v2177
        %v2179 = vrot.slane %v2094, %v2178
        %vm2181 = vcmask 523264
        %v2183 = vsel %vm2181, %v2174, 0
        %2185 = vmatprep.subr.mxu0 0.0
        %2186 = vmatpush1.msra.mxu0 %v2086
        %2187 = vmatprep.subr.mxu0 0.0
        %2188 = vmatpush1.msra.mxu0 %v2087
        %2189 = vmatprep.subr.mxu0 0.0
        %2190 = vmatpush1.msra.mxu0 %v2088
        %2191 = vmatprep.subr.mxu0 0.0
        %2192 = vmatpush1.msra.mxu0 %v2089
        %2193 = vmatprep.subr.mxu0 0.0
        %2194 = vmatpush1.msra.mxu0 %v2090
        %2195 = vmatprep.subr.mxu0 0.0
        %2196 = vmatpush1.msra.mxu0 %v2091
        %2197 = vmatprep.subr.mxu0 0.0
        %2198 = vmatpush1.msra.mxu0 %v2092
        %2199 = vmatprep.subr.mxu0 0.0
        %2200 = vmatpush1.msra.mxu0 %v2093
        %2201 = vmatprep.subr.mxu0 0.0
        %2202 = vmatpush1.msra.mxu0 0.0
        %2203 = vmatprep.subr.mxu0 0.0
        %2204 = vmatpush1.msra.mxu0 0.0
        %2205 = vmatprep.subr.mxu0 0.0
        %2206 = vmatpush1.msra.mxu0 0.0
        %2207 = vmatprep.subr.mxu0 0.0
        %2208 = vmatpush1.msra.mxu0 0.0
        %2209 = vmatprep.subr.mxu0 0.0
        %2210 = vmatpush1.msra.mxu0 0.0
        %2211 = vmatprep.subr.mxu0 0.0
        %2212 = vmatpush1.msra.mxu0 0.0
        %2213 = vmatprep.subr.mxu0 0.0
        %2214 = vmatpush1.msra.mxu0 0.0
        %2215 = vmatprep.subr.mxu0 0.0
        %2216 = vmatpush1.msra.mxu0 0.0
        %2217 = vmatprep.subr.mxu0 0.0
        %2218 = vmatpush1.msra.mxu0 0.0
        %2219 = vmatprep.subr.mxu0 0.0
        %2220 = vmatpush1.msra.mxu0 0.0
        %2221 = vmatprep.subr.mxu0 0.0
        %2222 = vmatpush1.msra.mxu0 0.0
        %2223 = vmatprep.subr.mxu0 0.0
        %2224 = vmatpush1.msra.mxu0 0.0
        %2225 = vmatprep.subr.mxu0 0.0
        %2226 = vmatpush1.msra.mxu0 0.0
        %2227 = vmatprep.subr.mxu0 0.0
        %2228 = vmatpush1.msra.mxu0 0.0
        %2229 = vmatprep.subr.mxu0 0.0
        %2230 = vmatpush1.msra.mxu0 0.0
        %2231 = vmatprep.subr.mxu0 0.0
        %2232 = vmatpush1.msra.mxu0 0.0
        %2233 = vmatprep.subr.mxu0 0.0
        %2234 = vmatpush1.msra.mxu0 0.0
        %2235 = vmatprep.subr.mxu0 0.0
        %2236 = vmatpush1.msra.mxu0 0.0
        %2237 = vmatprep.subr.mxu0 0.0
        %2238 = vmatpush1.msra.mxu0 0.0
        %2239 = vmatprep.subr.mxu0 0.0
        %2240 = vmatpush1.msra.mxu0 0.0
        %2241 = vmatprep.subr.mxu0 0.0
        %2242 = vmatpush1.msra.mxu0 0.0
        %2243 = vmatprep.subr.mxu0 0.0
        %2244 = vmatpush1.msra.mxu0 0.0
        %2245 = vmatprep.subr.mxu0 0.0
        %2246 = vmatpush1.msra.mxu0 0.0
        %2247 = vmatprep.subr.mxu0 0.0
        %2248 = vmatpush1.msra.mxu0 0.0
        %2249 = vmatprep.mubr.f32.mxu0 0.0
        %2250 = vmatmul.mubr.f32.gmra.mrb[0].mxu0 %v2183
        %v2251 = vpop.f32.mrb[0].mxu0
        %v2252 = vadd.f32 %v2179, %v2251
        %v2253 = vpop.f32.mrb[0].mxu0
        %2254 = vdwg.mxu0
        %v2255 = vadd.f32 %v2060, %v2252
        %v2256 = vsel %vm1186, %v2255, 0.0
        %2257 = vadd.xlane.f32.xlu0 %v2256
        %v2258 = vpop.xlane.xlu0 %2257
        %v2259 = vmul.f32 %v2258, %v1190
        %v2260 = vsub.f32 %v2255, %v2259
        %v2261 = vmul.f32 %v2260, %v2260
        %v2262 = vsel %vm1186, %v2261, 0.0
        %2263 = vadd.xlane.f32.xlu0 %v2262
        %v2264 = vpop.xlane.xlu0 %2263
        %v2265 = vmul.f32 %v2264, %v1197
        %v2266 = vrsqrt.pop %v2265
        %v2267 = vmul.f32 %v2265, %v2266
        %vm2268 = vcmp.eq.f32.partialorder %v2265, inf
        %v2269 = vsel %vm2268, %v2265, %v2267
        %vm2270 = vcmp.eq.f32.partialorder %v2265, 0.0
        %v2271 = vand.u32 %v2265, 2147483648
        %v2272 = vsel %vm2270, %v2271, %v2269
        %v2273 = vadd.f32 %v2272, 1e-06
        %v2274 = vrcp.pop %v2273
        %v2275 = vmul.f32 %v2260, %v2274
        %2276 = vst.msk [vmem:[#allocation2] sm:$0xff] %vm1186, %v2275
        %2278 = vrot.lane.b32.xlu0 %v1185, 96
        %v2279 = vpop.permute.xlu0 %2278
        %2281 = vst.msk [vmem:[#allocation3] sm:$0xff] %vm1186, %v2279
      $region136: #{gridformer_forward.1} parent=131 // pred_fallthru
        _
      %v2282 = vld [vmem:[#allocation3] sm:$0xff]
      %v2283 = vld [vmem:[#allocation2] sm:$0xff]
      %vm2284 = vcmask 261120
      %v2285 = vsel %vm2284, %v2282, 0.0
      %2286 = vadd.xlane.f32.xlu0 %v2285
      %v2287 = vpop.xlane.xlu0 %2286
      %v2288 = vrcp.pop 32.0
      %v2289 = vmul.f32 %v2287, %v2288
      %v2290 = vsub.f32 %v2282, %v2289
      %v2291 = vmul.f32 %v2290, %v2290
      %v2292 = vsel %vm2284, %v2291, 0.0
      %2293 = vadd.xlane.f32.xlu0 %v2292
      %v2294 = vpop.xlane.xlu0 %2293
      %v2295 = vrcp.pop 31.0
      %v2296 = vmul.f32 %v2294, %v2295
      %v2297 = vrsqrt.pop %v2296
      %v2298 = vmul.f32 %v2296, %v2297
      %vm2299 = vcmp.eq.f32.partialorder %v2296, inf
      %v2300 = vsel %vm2299, %v2296, %v2298
      %vm2301 = vcmp.eq.f32.partialorder %v2296, 0.0
      %v2302 = vand.u32 %v2296, 2147483648
      %v2303 = vsel %vm2301, %v2302, %v2300
      %v2304 = vadd.f32 %v2303, 1e-06
      %v2305 = vrcp.pop %v2304
      %v2306 = vmul.f32 %v2290, %v2305
      %v2307 = vld [vmem:[%s1035] sm:$0xff]
      %v2308 = vld [vmem:[%s1035 + $0x8] sm:$0xff]
      %v2309 = vld [vmem:[%s1035 + $0x10] sm:$0xff]
      %v2310 = vld [vmem:[%s1035 + $0x18] sm:$0xff]
      %v2311 = vld [vmem:[%s1038] sm:$0x1]
      %v2312 = vld [vmem:[%s1043] sm:$0xff]
      %v2313 = vld [vmem:[%s1043 + $0x8] sm:$0xff]
      %v2314 = vld [vmem:[%s1043 + $0x10] sm:$0xff]
      %v2315 = vld [vmem:[%s1043 + $0x18] sm:$0xff]
      %v2316 = vld [vmem:[%s1046] sm:$0x1]
      %v2318 = vlaneseq
      %v2319 = vshrl.u32 %v2318, 7
      %v2320 = vsub.s32 0, %v2319
      %v2321 = vrot.slane %v2311, %v2320
      %v2324 = vsel %vm2284, %v2306, 0
      %2326 = vmatprep.subr.mxu0 0.0
      %2327 = vmatpush1.msra.mxu0 %v2307
      %2328 = vmatprep.subr.mxu0 0.0
      %2329 = vmatpush1.msra.mxu0 %v2308
      %2330 = vmatprep.subr.mxu0 0.0
      %2331 = vmatpush1.msra.mxu0 %v2309
      %2332 = vmatprep.subr.mxu0 0.0
      %2333 = vmatpush1.msra.mxu0 %v2310
      %2334 = vmatprep.subr.mxu0 0.0
      %2335 = vmatpush1.msra.mxu0 0.0
      %2336 = vmatprep.subr.mxu0 0.0
      %2337 = vmatpush1.msra.mxu0 0.0
      %2338 = vmatprep.subr.mxu0 0.0
      %2339 = vmatpush1.msra.mxu0 0.0
      %2340 = vmatprep.subr.mxu0 0.0
      %2341 = vmatpush1.msra.mxu0 0.0
      %2342 = vmatprep.subr.mxu0 0.0
      %2343 = vmatpush1.msra.mxu0 0.0
      %2344 = vmatprep.subr.mxu0 0.0
      %2345 = vmatpush1.msra.mxu0 0.0
      %2346 = vmatprep.subr.mxu0 0.0
      %2347 = vmatpush1.msra.mxu0 0.0
      %2348 = vmatprep.subr.mxu0 0.0
      %2349 = vmatpush1.msra.mxu0 0.0
      %2350 = vmatprep.subr.mxu0 0.0
      %2351 = vmatpush1.msra.mxu0 0.0
      %2352 = vmatprep.subr.mxu0 0.0
      %2353 = vmatpush1.msra.mxu0 0.0
      %2354 = vmatprep.subr.mxu0 0.0
      %2355 = vmatpush1.msra.mxu0 0.0
      %2356 = vmatprep.subr.mxu0 0.0
      %2357 = vmatpush1.msra.mxu0 0.0
      %2358 = vmatprep.subr.mxu0 0.0
      %2359 = vmatpush1.msra.mxu0 0.0
      %2360 = vmatprep.subr.mxu0 0.0
      %2361 = vmatpush1.msra.mxu0 0.0
      %2362 = vmatprep.subr.mxu0 0.0
      %2363 = vmatpush1.msra.mxu0 0.0
      %2364 = vmatprep.subr.mxu0 0.0
      %2365 = vmatpush1.msra.mxu0 0.0
      %2366 = vmatprep.subr.mxu0 0.0
      %2367 = vmatpush1.msra.mxu0 0.0
      %2368 = vmatprep.subr.mxu0 0.0
      %2369 = vmatpush1.msra.mxu0 0.0
      %2370 = vmatprep.subr.mxu0 0.0
      %2371 = vmatpush1.msra.mxu0 0.0
      %2372 = vmatprep.subr.mxu0 0.0
      %2373 = vmatpush1.msra.mxu0 0.0
      %2374 = vmatprep.subr.mxu0 0.0
      %2375 = vmatpush1.msra.mxu0 0.0
      %2376 = vmatprep.subr.mxu0 0.0
      %2377 = vmatpush1.msra.mxu0 0.0
      %2378 = vmatprep.subr.mxu0 0.0
      %2379 = vmatpush1.msra.mxu0 0.0
      %2380 = vmatprep.subr.mxu0 0.0
      %2381 = vmatpush1.msra.mxu0 0.0
      %2382 = vmatprep.subr.mxu0 0.0
      %2383 = vmatpush1.msra.mxu0 0.0
      %2384 = vmatprep.subr.mxu0 0.0
      %2385 = vmatpush1.msra.mxu0 0.0
      %2386 = vmatprep.subr.mxu0 0.0
      %2387 = vmatpush1.msra.mxu0 0.0
      %2388 = vmatprep.subr.mxu0 0.0
      %2389 = vmatpush1.msra.mxu0 0.0
      %2390 = vmatprep.mubr.f32.mxu0 0.0
      %2391 = vmatmul.mubr.f32.gmra.mrb[0].mxu0 %v2324
      %v2392 = vpop.f32.mrb[0].mxu0
      %v2393 = vadd.f32 %v2321, %v2392
      %v2394 = vpop.f32.mrb[0].mxu0
      %2395 = vdwg.mxu0
      %2397 = vrot.lane.b32.xlu0 %v2393, 96
      %v2398 = vpop.permute.xlu0 %2397
      %vm2399 = vcmask 64512
      %v2400 = vsel %vm2399, %v2393, 0
      %v2402 = vsel %vm2399, %v2398, 0
      %2404 = vmatprep.subr.mxu0 0.0
      %2405 = vmatpush1.xpose.msra.mxu0 %v2402
      %2406 = vmatprep.subr.mxu0 0.0
      %2407 = vmatpush1.xpose.msra.mxu0 0.0
      %2408 = vmatprep.subr.mxu0 0.0
      %2409 = vmatpush1.xpose.msra.mxu0 0.0
      %2410 = vmatprep.subr.mxu0 0.0
      %2411 = vmatpush1.xpose.msra.mxu0 0.0
      %2412 = vmatprep.subr.mxu0 0.0
      %2413 = vmatpush1.xpose.msra.mxu0 0.0
      %2414 = vmatprep.subr.mxu0 0.0
      %2415 = vmatpush1.xpose.msra.mxu0 0.0
      %2416 = vmatprep.subr.mxu0 0.0
      %2417 = vmatpush1.xpose.msra.mxu0 0.0
      %2418 = vmatprep.subr.mxu0 0.0
      %2419 = vmatpush1.xpose.msra.mxu0 0.0
      %2420 = vmatprep.subr.mxu0 0.0
      %2421 = vmatpush1.xpose.msra.mxu0 0.0
      %2422 = vmatprep.subr.mxu0 0.0
      %2423 = vmatpush1.xpose.msra.mxu0 0.0
      %2424 = vmatprep.subr.mxu0 0.0
      %2425 = vmatpush1.xpose.msra.mxu0 0.0
      %2426 = vmatprep.subr.mxu0 0.0
      %2427 = vmatpush1.xpose.msra.mxu0 0.0
      %2428 = vmatprep.subr.mxu0 0.0
      %2429 = vmatpush1.xpose.msra.mxu0 0.0
      %2430 = vmatprep.subr.mxu0 0.0
      %2431 = vmatpush1.xpose.msra.mxu0 0.0
      %2432 = vmatprep.subr.mxu0 0.0
      %2433 = vmatpush1.xpose.msra.mxu0 0.0
      %2434 = vmatprep.subr.mxu0 0.0
      %2435 = vmatpush1.xpose.msra.mxu0 0.0
      %2436 = vmatprep.subr.mxu0 0.0
      %2437 = vmatpush1.xpose.msra.mxu0 0.0
      %2438 = vmatprep.subr.mxu0 0.0
      %2439 = vmatpush1.xpose.msra.mxu0 0.0
      %2440 = vmatprep.subr.mxu0 0.0
      %2441 = vmatpush1.xpose.msra.mxu0 0.0
      %2442 = vmatprep.subr.mxu0 0.0
      %2443 = vmatpush1.xpose.msra.mxu0 0.0
      %2444 = vmatprep.subr.mxu0 0.0
      %2445 = vmatpush1.xpose.msra.mxu0 0.0
      %2446 = vmatprep.subr.mxu0 0.0
      %2447 = vmatpush1.xpose.msra.mxu0 0.0
      %2448 = vmatprep.subr.mxu0 0.0
      %2449 = vmatpush1.xpose.msra.mxu0 0.0
      %2450 = vmatprep.subr.mxu0 0.0
      %2451 = vmatpush1.xpose.msra.mxu0 0.0
      %2452 = vmatprep.subr.mxu0 0.0
      %2453 = vmatpush1.xpose.msra.mxu0 0.0
      %2454 = vmatprep.subr.mxu0 0.0
      %2455 = vmatpush1.xpose.msra.mxu0 0.0
      %2456 = vmatprep.subr.mxu0 0.0
      %2457 = vmatpush1.xpose.msra.mxu0 0.0
      %2458 = vmatprep.subr.mxu0 0.0
      %2459 = vmatpush1.xpose.msra.mxu0 0.0
      %2460 = vmatprep.subr.mxu0 0.0
      %2461 = vmatpush1.xpose.msra.mxu0 0.0
      %2462 = vmatprep.subr.mxu0 0.0
      %2463 = vmatpush1.xpose.msra.mxu0 0.0
      %2464 = vmatprep.subr.mxu0 0.0
      %2465 = vmatpush1.xpose.msra.mxu0 0.0
      %2466 = vmatprep.subr.mxu0 0.0
      %2467 = vmatpush1.xpose.msra.mxu0 0.0
      %2468 = vmatprep.mubr.f32.mxu0 0.0
      %2469 = vmatmul.mubr.f32.gmra.mrb[0].mxu0 %v2400
      %v2470 = vpop.f32.mrb[0].mxu0
      %v2471 = vadd.f32 0.0, %v2470
      %v2472 = vpop.f32.mrb[0].mxu0
      %2473 = vdwg.mxu0
      %v2474 = vmul.f32 %v2471, 0.35355338
      %v2475 = vsel %vm2399, %v2474, -inf
      %2476 = vmax.xlane.f32.xlu0 %v2475
      %v2477 = vpop.xlane.xlu0 %2476
      %v2478 = vsub.f32 %v2474, %v2477
      %v2479 = vmul.f32 %v2478, 1.442695
      %v2480 = vpow.pop %v2479
      %v2481 = vsel %vm2399, %v2480, 0.0
      %2482 = vadd.xlane.f32.xlu0 %v2481
      %v2483 = vpop.xlane.xlu0 %2482
      %v2484 = vrcp.pop %v2483
      %v2485 = vmul.f32 %v2480, %v2484
      %2486 = vrot.lane.b32.xlu0 %v2393, 64
      %v2487 = vpop.permute.xlu0 %2486
      %v2490 = vsel %vm2399, %v2485, 0
      %2492 = vmatprep.subr.mxu0 0.0
      %2493 = vmatpush1.msra.mxu0 %v2487
      %2494 = vmatprep.subr.mxu0 0.0
      %2495 = vmatpush1.msra.mxu0 0.0
      %2496 = vmatprep.subr.mxu0 0.0
      %2497 = vmatpush1.msra.mxu0 0.0
      %2498 = vmatprep.subr.mxu0 0.0
      %2499 = vmatpush1.msra.mxu0 0.0
      %2500 = vmatprep.subr.mxu0 0.0
      %2501 = vmatpush1.msra.mxu0 0.0
      %2502 = vmatprep.subr.mxu0 0.0
      %2503 = vmatpush1.msra.mxu0 0.0
      %2504 = vmatprep.subr.mxu0 0.0
      %2505 = vmatpush1.msra.mxu0 0.0
      %2506 = vmatprep.subr.mxu0 0.0
      %2507 = vmatpush1.msra.mxu0 0.0
      %2508 = vmatprep.subr.mxu0 0.0
      %2509 = vmatpush1.msra.mxu0 0.0
      %2510 = vmatprep.subr.mxu0 0.0
      %2511 = vmatpush1.msra.mxu0 0.0
      %2512 = vmatprep.subr.mxu0 0.0
      %2513 = vmatpush1.msra.mxu0 0.0
      %2514 = vmatprep.subr.mxu0 0.0
      %2515 = vmatpush1.msra.mxu0 0.0
      %2516 = vmatprep.subr.mxu0 0.0
      %2517 = vmatpush1.msra.mxu0 0.0
      %2518 = vmatprep.subr.mxu0 0.0
      %2519 = vmatpush1.msra.mxu0 0.0
      %2520 = vmatprep.subr.mxu0 0.0
      %2521 = vmatpush1.msra.mxu0 0.0
      %2522 = vmatprep.subr.mxu0 0.0
      %2523 = vmatpush1.msra.mxu0 0.0
      %2524 = vmatprep.subr.mxu0 0.0
      %2525 = vmatpush1.msra.mxu0 0.0
      %2526 = vmatprep.subr.mxu0 0.0
      %2527 = vmatpush1.msra.mxu0 0.0
      %2528 = vmatprep.subr.mxu0 0.0
      %2529 = vmatpush1.msra.mxu0 0.0
      %2530 = vmatprep.subr.mxu0 0.0
      %2531 = vmatpush1.msra.mxu0 0.0
      %2532 = vmatprep.subr.mxu0 0.0
      %2533 = vmatpush1.msra.mxu0 0.0
      %2534 = vmatprep.subr.mxu0 0.0
      %2535 = vmatpush1.msra.mxu0 0.0
      %2536 = vmatprep.subr.mxu0 0.0
      %2537 = vmatpush1.msra.mxu0 0.0
      %2538 = vmatprep.subr.mxu0 0.0
      %2539 = vmatpush1.msra.mxu0 0.0
      %2540 = vmatprep.subr.mxu0 0.0
      %2541 = vmatpush1.msra.mxu0 0.0
      %2542 = vmatprep.subr.mxu0 0.0
      %2543 = vmatpush1.msra.mxu0 0.0
      %2544 = vmatprep.subr.mxu0 0.0
      %2545 = vmatpush1.msra.mxu0 0.0
      %2546 = vmatprep.subr.mxu0 0.0
      %2547 = vmatpush1.msra.mxu0 0.0
      %2548 = vmatprep.subr.mxu0 0.0
      %2549 = vmatpush1.msra.mxu0 0.0
      %2550 = vmatprep.subr.mxu0 0.0
      %2551 = vmatpush1.msra.mxu0 0.0
      %2552 = vmatprep.subr.mxu0 0.0
      %2553 = vmatpush1.msra.mxu0 0.0
      %2554 = vmatprep.subr.mxu0 0.0
      %2555 = vmatpush1.msra.mxu0 0.0
      %2556 = vmatprep.mubr.f32.mxu0 0.0
      %2557 = vmatmul.mubr.f32.gmra.mrb[0].mxu0 %v2490
      %v2558 = vpop.f32.mrb[0].mxu0
      %v2559 = vadd.f32 0.0, %v2558
      %v2560 = vpop.f32.mrb[0].mxu0
      %2561 = vdwg.mxu0
      %2562 = vst.msk [vmem:[#allocation4] sm:$0xff] %vm2399, %v2559
      %2563 = vrot.lane.b32.xlu0 %v2393, 120
      %v2564 = vpop.permute.xlu0 %2563
      %2565 = vrot.lane.b32.xlu0 %v2393, 88
      %v2566 = vpop.permute.xlu0 %2565
      %v2567 = vsel %vm2399, %v2564, 0
      %v2569 = vsel %vm2399, %v2566, 0
      %2571 = vmatprep.subr.mxu0 0.0
      %2572 = vmatpush1.xpose.msra.mxu0 %v2569
      %2573 = vmatprep.subr.mxu0 0.0
      %2574 = vmatpush1.xpose.msra.mxu0 0.0
      %2575 = vmatprep.subr.mxu0 0.0
      %2576 = vmatpush1.xpose.msra.mxu0 0.0
      %2577 = vmatprep.subr.mxu0 0.0
      %2578 = vmatpush1.xpose.msra.mxu0 0.0
      %2579 = vmatprep.subr.mxu0 0.0
      %2580 = vmatpush1.xpose.msra.mxu0 0.0
      %2581 = vmatprep.subr.mxu0 0.0
      %2582 = vmatpush1.xpose.msra.mxu0 0.0
      %2583 = vmatprep.subr.mxu0 0.0
      %2584 = vmatpush1.xpose.msra.mxu0 0.0
      %2585 = vmatprep.subr.mxu0 0.0
      %2586 = vmatpush1.xpose.msra.mxu0 0.0
      %2587 = vmatprep.subr.mxu0 0.0
      %2588 = vmatpush1.xpose.msra.mxu0 0.0
      %2589 = vmatprep.subr.mxu0 0.0
      %2590 = vmatpush1.xpose.msra.mxu0 0.0
      %2591 = vmatprep.subr.mxu0 0.0
      %2592 = vmatpush1.xpose.msra.mxu0 0.0
      %2593 = vmatprep.subr.mxu0 0.0
      %2594 = vmatpush1.xpose.msra.mxu0 0.0
      %2595 = vmatprep.subr.mxu0 0.0
      %2596 = vmatpush1.xpose.msra.mxu0 0.0
      %2597 = vmatprep.subr.mxu0 0.0
      %2598 = vmatpush1.xpose.msra.mxu0 0.0
      %2599 = vmatprep.subr.mxu0 0.0
      %2600 = vmatpush1.xpose.msra.mxu0 0.0
      %2601 = vmatprep.subr.mxu0 0.0
      %2602 = vmatpush1.xpose.msra.mxu0 0.0
      %2603 = vmatprep.subr.mxu0 0.0
      %2604 = vmatpush1.xpose.msra.mxu0 0.0
      %2605 = vmatprep.subr.mxu0 0.0
      %2606 = vmatpush1.xpose.msra.mxu0 0.0
      %2607 = vmatprep.subr.mxu0 0.0
      %2608 = vmatpush1.xpose.msra.mxu0 0.0
      %2609 = vmatprep.subr.mxu0 0.0
      %2610 = vmatpush1.xpose.msra.mxu0 0.0
      %2611 = vmatprep.subr.mxu0 0.0
      %2612 = vmatpush1.xpose.msra.mxu0 0.0
      %2613 = vmatprep.subr.mxu0 0.0
      %2614 = vmatpush1.xpose.msra.mxu0 0.0
      %2615 = vmatprep.subr.mxu0 0.0
      %2616 = vmatpush1.xpose.msra.mxu0 0.0
      %2617 = vmatprep.subr.mxu0 0.0
      %2618 = vmatpush1.xpose.msra.mxu0 0.0
      %2619 = vmatprep.subr.mxu0 0.0
      %2620 = vmatpush1.xpose.msra.mxu0 0.0
      %2621 = vmatprep.subr.mxu0 0.0
      %2622 = vmatpush1.xpose.msra.mxu0 0.0
      %2623 = vmatprep.subr.mxu0 0.0
      %2624 = vmatpush1.xpose.msra.mxu0 0.0
      %2625 = vmatprep.subr.mxu0 0.0
      %2626 = vmatpush1.xpose.msra.mxu0 0.0
      %2627 = vmatprep.subr.mxu0 0.0
      %2628 = vmatpush1.xpose.msra.mxu0 0.0
      %2629 = vmatprep.subr.mxu0 0.0
      %2630 = vmatpush1.xpose.msra.mxu0 0.0
      %2631 = vmatprep.subr.mxu0 0.0
      %2632 = vmatpush1.xpose.msra.mxu0 0.0
      %2633 = vmatprep.subr.mxu0 0.0
      %2634 = vmatpush1.xpose.msra.mxu0 0.0
      %2635 = vmatprep.mubr.f32.mxu0 0.0
      %2636 = vmatmul.mubr.f32.gmra.mrb[0].mxu0 %v2567
      %v2637 = vpop.f32.mrb[0].mxu0
      %v2638 = vadd.f32 0.0, %v2637
      %v2639 = vpop.f32.mrb[0].mxu0
      %2640 = vdwg.mxu0
      %v2641 = vmul.f32 %v2638, 0.35355338
      %v2642 = vsel %vm2399, %v2641, -inf
      %2643 = vmax.xlane.f32.xlu0 %v2642
      %v2644 = vpop.xlane.xlu0 %2643
      %v2645 = vsub.f32 %v2641, %v2644
      %v2646 = vmul.f32 %v2645, 1.442695
      %v2647 = vpow.pop %v2646
      %v2648 = vsel %vm2399, %v2647, 0.0
      %2649 = vadd.xlane.f32.xlu0 %v2648
      %v2650 = vpop.xlane.xlu0 %2649
      %v2651 = vrcp.pop %v2650
      %v2652 = vmul.f32 %v2647, %v2651
      %2653 = vrot.lane.b32.xlu0 %v2393, 56
      %v2654 = vpop.permute.xlu0 %2653
      %v2657 = vsel %vm2399, %v2652, 0
      %2659 = vmatprep.subr.mxu0 0.0
      %2660 = vmatpush1.msra.mxu0 %v2654
      %2661 = vmatprep.subr.mxu0 0.0
      %2662 = vmatpush1.msra.mxu0 0.0
      %2663 = vmatprep.subr.mxu0 0.0
      %2664 = vmatpush1.msra.mxu0 0.0
      %2665 = vmatprep.subr.mxu0 0.0
      %2666 = vmatpush1.msra.mxu0 0.0
      %2667 = vmatprep.subr.mxu0 0.0
      %2668 = vmatpush1.msra.mxu0 0.0
      %2669 = vmatprep.subr.mxu0 0.0
      %2670 = vmatpush1.msra.mxu0 0.0
      %2671 = vmatprep.subr.mxu0 0.0
      %2672 = vmatpush1.msra.mxu0 0.0
      %2673 = vmatprep.subr.mxu0 0.0
      %2674 = vmatpush1.msra.mxu0 0.0
      %2675 = vmatprep.subr.mxu0 0.0
      %2676 = vmatpush1.msra.mxu0 0.0
      %2677 = vmatprep.subr.mxu0 0.0
      %2678 = vmatpush1.msra.mxu0 0.0
      %2679 = vmatprep.subr.mxu0 0.0
      %2680 = vmatpush1.msra.mxu0 0.0
      %2681 = vmatprep.subr.mxu0 0.0
      %2682 = vmatpush1.msra.mxu0 0.0
      %2683 = vmatprep.subr.mxu0 0.0
      %2684 = vmatpush1.msra.mxu0 0.0
      %2685 = vmatprep.subr.mxu0 0.0
      %2686 = vmatpush1.msra.mxu0 0.0
      %2687 = vmatprep.subr.mxu0 0.0
      %2688 = vmatpush1.msra.mxu0 0.0
      %2689 = vmatprep.subr.mxu0 0.0
      %2690 = vmatpush1.msra.mxu0 0.0
      %2691 = vmatprep.subr.mxu0 0.0
      %2692 = vmatpush1.msra.mxu0 0.0
      %2693 = vmatprep.subr.mxu0 0.0
      %2694 = vmatpush1.msra.mxu0 0.0
      %2695 = vmatprep.subr.mxu0 0.0
      %2696 = vmatpush1.msra.mxu0 0.0
      %2697 = vmatprep.subr.mxu0 0.0
      %2698 = vmatpush1.msra.mxu0 0.0
      %2699 = vmatprep.subr.mxu0 0.0
      %2700 = vmatpush1.msra.mxu0 0.0
      %2701 = vmatprep.subr.mxu0 0.0
      %2702 = vmatpush1.msra.mxu0 0.0
      %2703 = vmatprep.subr.mxu0 0.0
      %2704 = vmatpush1.msra.mxu0 0.0
      %2705 = vmatprep.subr.mxu0 0.0
      %2706 = vmatpush1.msra.mxu0 0.0
      %2707 = vmatprep.subr.mxu0 0.0
      %2708 = vmatpush1.msra.mxu0 0.0
      %2709 = vmatprep.subr.mxu0 0.0
      %2710 = vmatpush1.msra.mxu0 0.0
      %2711 = vmatprep.subr.mxu0 0.0
      %2712 = vmatpush1.msra.mxu0 0.0
      %2713 = vmatprep.subr.mxu0 0.0
      %2714 = vmatpush1.msra.mxu0 0.0
      %2715 = vmatprep.subr.mxu0 0.0
      %2716 = vmatpush1.msra.mxu0 0.0
      %2717 = vmatprep.subr.mxu0 0.0
      %2718 = vmatpush1.msra.mxu0 0.0
      %2719 = vmatprep.subr.mxu0 0.0
      %2720 = vmatpush1.msra.mxu0 0.0
      %2721 = vmatprep.subr.mxu0 0.0
      %2722 = vmatpush1.msra.mxu0 0.0
      %2723 = vmatprep.mubr.f32.mxu0 0.0
      %2724 = vmatmul.mubr.f32.gmra.mrb[0].mxu0 %v2657
      %v2725 = vpop.f32.mrb[0].mxu0
      %v2726 = vadd.f32 0.0, %v2725
      %v2727 = vpop.f32.mrb[0].mxu0
      %2728 = vdwg.mxu0
      %2730 = vrot.lane.b32.xlu0 %v2726, 8
      %v2731 = vpop.permute.xlu0 %2730
      %vm2733 = vcmask 130112
      %2734 = vst.msk [vmem:[#allocation4] sm:$0xff] %vm2733, %v2731
      %2735 = vrot.lane.b32.xlu0 %v2393, 112
      %v2736 = vpop.permute.xlu0 %2735
      %2737 = vrot.lane.b32.xlu0 %v2393, 80
      %v2738 = vpop.permute.xlu0 %2737
      %v2739 = vsel %vm2399, %v2736, 0
      %v2741 = vsel %vm2399, %v2738, 0
      %2743 = vmatprep.subr.mxu0 0.0
      %2744 = vmatpush1.xpose.msra.mxu0 %v2741
      %2745 = vmatprep.subr.mxu0 0.0
      %2746 = vmatpush1.xpose.msra.mxu0 0.0
      %2747 = vmatprep.subr.mxu0 0.0
      %2748 = vmatpush1.xpose.msra.mxu0 0.0
      %2749 = vmatprep.subr.mxu0 0.0
      %2750 = vmatpush1.xpose.msra.mxu0 0.0
      %2751 = vmatprep.subr.mxu0 0.0
      %2752 = vmatpush1.xpose.msra.mxu0 0.0
      %2753 = vmatprep.subr.mxu0 0.0
      %2754 = vmatpush1.xpose.msra.mxu0 0.0
      %2755 = vmatprep.subr.mxu0 0.0
      %2756 = vmatpush1.xpose.msra.mxu0 0.0
      %2757 = vmatprep.subr.mxu0 0.0
      %2758 = vmatpush1.xpose.msra.mxu0 0.0
      %2759 = vmatprep.subr.mxu0 0.0
      %2760 = vmatpush1.xpose.msra.mxu0 0.0
      %2761 = vmatprep.subr.mxu0 0.0
      %2762 = vmatpush1.xpose.msra.mxu0 0.0
      %2763 = vmatprep.subr.mxu0 0.0
      %2764 = vmatpush1.xpose.msra.mxu0 0.0
      %2765 = vmatprep.subr.mxu0 0.0
      %2766 = vmatpush1.xpose.msra.mxu0 0.0
      %2767 = vmatprep.subr.mxu0 0.0
      %2768 = vmatpush1.xpose.msra.mxu0 0.0
      %2769 = vmatprep.subr.mxu0 0.0
      %2770 = vmatpush1.xpose.msra.mxu0 0.0
      %2771 = vmatprep.subr.mxu0 0.0
      %2772 = vmatpush1.xpose.msra.mxu0 0.0
      %2773 = vmatprep.subr.mxu0 0.0
      %2774 = vmatpush1.xpose.msra.mxu0 0.0
      %2775 = vmatprep.subr.mxu0 0.0
      %2776 = vmatpush1.xpose.msra.mxu0 0.0
      %2777 = vmatprep.subr.mxu0 0.0
      %2778 = vmatpush1.xpose.msra.mxu0 0.0
      %2779 = vmatprep.subr.mxu0 0.0
      %2780 = vmatpush1.xpose.msra.mxu0 0.0
      %2781 = vmatprep.subr.mxu0 0.0
      %2782 = vmatpush1.xpose.msra.mxu0 0.0
      %2783 = vmatprep.subr.mxu0 0.0
      %2784 = vmatpush1.xpose.msra.mxu0 0.0
      %2785 = vmatprep.subr.mxu0 0.0
      %2786 = vmatpush1.xpose.msra.mxu0 0.0
      %2787 = vmatprep.subr.mxu0 0.0
      %2788 = vmatpush1.xpose.msra.mxu0 0.0
      %2789 = vmatprep.subr.mxu0 0.0
      %2790 = vmatpush1.xpose.msra.mxu0 0.0
      %2791 = vmatprep.subr.mxu0 0.0
      %2792 = vmatpush1.xpose.msra.mxu0 0.0
      %2793 = vmatprep.subr.mxu0 0.0
      %2794 = vmatpush1.xpose.msra.mxu0 0.0
      %2795 = vmatprep.subr.mxu0 0.0
      %2796 = vmatpush1.xpose.msra.mxu0 0.0
      %2797 = vmatprep.subr.mxu0 0.0
      %2798 = vmatpush1.xpose.msra.mxu0 0.0
      %2799 = vmatprep.subr.mxu0 0.0
      %2800 = vmatpush1.xpose.msra.mxu0 0.0
      %2801 = vmatprep.subr.mxu0 0.0
      %2802 = vmatpush1.xpose.msra.mxu0 0.0
      %2803 = vmatprep.subr.mxu0 0.0
      %2804 = vmatpush1.xpose.msra.mxu0 0.0
      %2805 = vmatprep.subr.mxu0 0.0
      %2806 = vmatpush1.xpose.msra.mxu0 0.0
      %2807 = vmatprep.mubr.f32.mxu0 0.0
      %2808 = vmatmul.mubr.f32.gmra.mrb[0].mxu0 %v2739
      %v2809 = vpop.f32.mrb[0].mxu0
      %v2810 = vadd.f32 0.0, %v2809
      %v2811 = vpop.f32.mrb[0].mxu0
      %2812 = vdwg.mxu0
      %v2813 = vmul.f32 %v2810, 0.35355338
      %v2814 = vsel %vm2399, %v2813, -inf
      %2815 = vmax.xlane.f32.xlu0 %v2814
      %v2816 = vpop.xlane.xlu0 %2815
      %v2817 = vsub.f32 %v2813, %v2816
      %v2818 = vmul.f32 %v2817, 1.442695
      %v2819 = vpow.pop %v2818
      %v2820 = vsel %vm2399, %v2819, 0.0
      %2821 = vadd.xlane.f32.xlu0 %v2820
      %v2822 = vpop.xlane.xlu0 %2821
      %v2823 = vrcp.pop %v2822
      %v2824 = vmul.f32 %v2819, %v2823
      %2825 = vrot.lane.b32.xlu0 %v2393, 48
      %v2826 = vpop.permute.xlu0 %2825
      %v2829 = vsel %vm2399, %v2824, 0
      %2831 = vmatprep.subr.mxu0 0.0
      %2832 = vmatpush1.msra.mxu0 %v2826
      %2833 = vmatprep.subr.mxu0 0.0
      %2834 = vmatpush1.msra.mxu0 0.0
      %2835 = vmatprep.subr.mxu0 0.0
      %2836 = vmatpush1.msra.mxu0 0.0
      %2837 = vmatprep.subr.mxu0 0.0
      %2838 = vmatpush1.msra.mxu0 0.0
      %2839 = vmatprep.subr.mxu0 0.0
      %2840 = vmatpush1.msra.mxu0 0.0
      %2841 = vmatprep.subr.mxu0 0.0
      %2842 = vmatpush1.msra.mxu0 0.0
      %2843 = vmatprep.subr.mxu0 0.0
      %2844 = vmatpush1.msra.mxu0 0.0
      %2845 = vmatprep.subr.mxu0 0.0
      %2846 = vmatpush1.msra.mxu0 0.0
      %2847 = vmatprep.subr.mxu0 0.0
      %2848 = vmatpush1.msra.mxu0 0.0
      %2849 = vmatprep.subr.mxu0 0.0
      %2850 = vmatpush1.msra.mxu0 0.0
      %2851 = vmatprep.subr.mxu0 0.0
      %2852 = vmatpush1.msra.mxu0 0.0
      %2853 = vmatprep.subr.mxu0 0.0
      %2854 = vmatpush1.msra.mxu0 0.0
      %2855 = vmatprep.subr.mxu0 0.0
      %2856 = vmatpush1.msra.mxu0 0.0
      %2857 = vmatprep.subr.mxu0 0.0
      %2858 = vmatpush1.msra.mxu0 0.0
      %2859 = vmatprep.subr.mxu0 0.0
      %2860 = vmatpush1.msra.mxu0 0.0
      %2861 = vmatprep.subr.mxu0 0.0
      %2862 = vmatpush1.msra.mxu0 0.0
      %2863 = vmatprep.subr.mxu0 0.0
      %2864 = vmatpush1.msra.mxu0 0.0
      %2865 = vmatprep.subr.mxu0 0.0
      %2866 = vmatpush1.msra.mxu0 0.0
      %2867 = vmatprep.subr.mxu0 0.0
      %2868 = vmatpush1.msra.mxu0 0.0
      %2869 = vmatprep.subr.mxu0 0.0
      %2870 = vmatpush1.msra.mxu0 0.0
      %2871 = vmatprep.subr.mxu0 0.0
      %2872 = vmatpush1.msra.mxu0 0.0
      %2873 = vmatprep.subr.mxu0 0.0
      %2874 = vmatpush1.msra.mxu0 0.0
      %2875 = vmatprep.subr.mxu0 0.0
      %2876 = vmatpush1.msra.mxu0 0.0
      %2877 = vmatprep.subr.mxu0 0.0
      %2878 = vmatpush1.msra.mxu0 0.0
      %2879 = vmatprep.subr.mxu0 0.0
      %2880 = vmatpush1.msra.mxu0 0.0
      %2881 = vmatprep.subr.mxu0 0.0
      %2882 = vmatpush1.msra.mxu0 0.0
      %2883 = vmatprep.subr.mxu0 0.0
      %2884 = vmatpush1.msra.mxu0 0.0
      %2885 = vmatprep.subr.mxu0 0.0
      %2886 = vmatpush1.msra.mxu0 0.0
      %2887 = vmatprep.subr.mxu0 0.0
      %2888 = vmatpush1.msra.mxu0 0.0
      %2889 = vmatprep.subr.mxu0 0.0
      %2890 = vmatpush1.msra.mxu0 0.0
      %2891 = vmatprep.subr.mxu0 0.0
      %2892 = vmatpush1.msra.mxu0 0.0
      %2893 = vmatprep.subr.mxu0 0.0
      %2894 = vmatpush1.msra.mxu0 0.0
      %2895 = vmatprep.mubr.f32.mxu0 0.0
      %2896 = vmatmul.mubr.f32.gmra.mrb[0].mxu0 %v2829
      %v2897 = vpop.f32.mrb[0].mxu0
      %v2898 = vadd.f32 0.0, %v2897
      %v2899 = vpop.f32.mrb[0].mxu0
      %2900 = vdwg.mxu0
      %2902 = vrot.lane.b32.xlu0 %v2898, 16
      %v2903 = vpop.permute.xlu0 %2902
      %vm2905 = vcmask 195712
      %2906 = vst.msk [vmem:[#allocation4] sm:$0xff] %vm2905, %v2903
      %2907 = vrot.lane.b32.xlu0 %v2393, 104
      %v2908 = vpop.permute.xlu0 %2907
      %2909 = vrot.lane.b32.xlu0 %v2393, 72
      %v2910 = vpop.permute.xlu0 %2909
      %v2911 = vsel %vm2399, %v2908, 0
      %v2913 = vsel %vm2399, %v2910, 0
      %2915 = vmatprep.subr.mxu0 0.0
      %2916 = vmatpush1.xpose.msra.mxu0 %v2913
      %2917 = vmatprep.subr.mxu0 0.0
      %2918 = vmatpush1.xpose.msra.mxu0 0.0
      %2919 = vmatprep.subr.mxu0 0.0
      %2920 = vmatpush1.xpose.msra.mxu0 0.0
      %2921 = vmatprep.subr.mxu0 0.0
      %2922 = vmatpush1.xpose.msra.mxu0 0.0
      %2923 = vmatprep.subr.mxu0 0.0
      %2924 = vmatpush1.xpose.msra.mxu0 0.0
      %2925 = vmatprep.subr.mxu0 0.0
      %2926 = vmatpush1.xpose.msra.mxu0 0.0
      %2927 = vmatprep.subr.mxu0 0.0
      %2928 = vmatpush1.xpose.msra.mxu0 0.0
      %2929 = vmatprep.subr.mxu0 0.0
      %2930 = vmatpush1.xpose.msra.mxu0 0.0
      %2931 = vmatprep.subr.mxu0 0.0
      %2932 = vmatpush1.xpose.msra.mxu0 0.0
      %2933 = vmatprep.subr.mxu0 0.0
      %2934 = vmatpush1.xpose.msra.mxu0 0.0
      %2935 = vmatprep.subr.mxu0 0.0
      %2936 = vmatpush1.xpose.msra.mxu0 0.0
      %2937 = vmatprep.subr.mxu0 0.0
      %2938 = vmatpush1.xpose.msra.mxu0 0.0
      %2939 = vmatprep.subr.mxu0 0.0
      %2940 = vmatpush1.xpose.msra.mxu0 0.0
      %2941 = vmatprep.subr.mxu0 0.0
      %2942 = vmatpush1.xpose.msra.mxu0 0.0
      %2943 = vmatprep.subr.mxu0 0.0
      %2944 = vmatpush1.xpose.msra.mxu0 0.0
      %2945 = vmatprep.subr.mxu0 0.0
      %2946 = vmatpush1.xpose.msra.mxu0 0.0
      %2947 = vmatprep.subr.mxu0 0.0
      %2948 = vmatpush1.xpose.msra.mxu0 0.0
      %2949 = vmatprep.subr.mxu0 0.0
      %2950 = vmatpush1.xpose.msra.mxu0 0.0
      %2951 = vmatprep.subr.mxu0 0.0
      %2952 = vmatpush1.xpose.msra.mxu0 0.0
      %2953 = vmatprep.subr.mxu0 0.0
      %2954 = vmatpush1.xpose.msra.mxu0 0.0
      %2955 = vmatprep.subr.mxu0 0.0
      %2956 = vmatpush1.xpose.msra.mxu0 0.0
      %2957 = vmatprep.subr.mxu0 0.0
      %2958 = vmatpush1.xpose.msra.mxu0 0.0
      %2959 = vmatprep.subr.mxu0 0.0
      %2960 = vmatpush1.xpose.msra.mxu0 0.0
      %2961 = vmatprep.subr.mxu0 0.0
      %2962 = vmatpush1.xpose.msra.mxu0 0.0
      %2963 = vmatprep.subr.mxu0 0.0
      %2964 = vmatpush1.xpose.msra.mxu0 0.0
      %2965 = vmatprep.subr.mxu0 0.0
      %2966 = vmatpush1.xpose.msra.mxu0 0.0
      %2967 = vmatprep.subr.mxu0 0.0
      %2968 = vmatpush1.xpose.msra.mxu0 0.0
      %2969 = vmatprep.subr.mxu0 0.0
      %2970 = vmatpush1.xpose.msra.mxu0 0.0
      %2971 = vmatprep.subr.mxu0 0.0
      %2972 = vmatpush1.xpose.msra.mxu0 0.0
      %2973 = vmatprep.subr.mxu0 0.0
      %2974 = vmatpush1.xpose.msra.mxu0 0.0
      %2975 = vmatprep.subr.mxu0 0.0
      %2976 = vmatpush1.xpose.msra.mxu0 0.0
      %2977 = vmatprep.subr.mxu0 0.0
      %2978 = vmatpush1.xpose.msra.mxu0 0.0
      %2979 = vmatprep.mubr.f32.mxu0 0.0
      %2980 = vmatmul.mubr.f32.gmra.mrb[0].mxu0 %v2911
      %v2981 = vpop.f32.mrb[0].mxu0
      %v2982 = vadd.f32 0.0, %v2981
      %v2983 = vpop.f32.mrb[0].mxu0
      %2984 = vdwg.mxu0
      %v2985 = vmul.f32 %v2982, 0.35355338
      %v2986 = vsel %vm2399, %v2985, -inf
      %2987 = vmax.xlane.f32.xlu0 %v2986
      %v2988 = vpop.xlane.xlu0 %2987
      %v2989 = vsub.f32 %v2985, %v2988
      %v2990 = vmul.f32 %v2989, 1.442695
      %v2991 = vpow.pop %v2990
      %v2992 = vsel %vm2399, %v2991, 0.0
      %2993 = vadd.xlane.f32.xlu0 %v2992
      %v2994 = vpop.xlane.xlu0 %2993
      %v2995 = vrcp.pop %v2994
      %v2996 = vmul.f32 %v2991, %v2995
      %2997 = vrot.lane.b32.xlu0 %v2393, 40
      %v2998 = vpop.permute.xlu0 %2997
      %v3001 = vsel %vm2399, %v2996, 0
      %3003 = vmatprep.subr.mxu0 0.0
      %3004 = vmatpush1.msra.mxu0 %v2998
      %3005 = vmatprep.subr.mxu0 0.0
      %3006 = vmatpush1.msra.mxu0 0.0
      %3007 = vmatprep.subr.mxu0 0.0
      %3008 = vmatpush1.msra.mxu0 0.0
      %3009 = vmatprep.subr.mxu0 0.0
      %3010 = vmatpush1.msra.mxu0 0.0
      %3011 = vmatprep.subr.mxu0 0.0
      %3012 = vmatpush1.msra.mxu0 0.0
      %3013 = vmatprep.subr.mxu0 0.0
      %3014 = vmatpush1.msra.mxu0 0.0
      %3015 = vmatprep.subr.mxu0 0.0
      %3016 = vmatpush1.msra.mxu0 0.0
      %3017 = vmatprep.subr.mxu0 0.0
      %3018 = vmatpush1.msra.mxu0 0.0
      %3019 = vmatprep.subr.mxu0 0.0
      %3020 = vmatpush1.msra.mxu0 0.0
      %3021 = vmatprep.subr.mxu0 0.0
      %3022 = vmatpush1.msra.mxu0 0.0
      %3023 = vmatprep.subr.mxu0 0.0
      %3024 = vmatpush1.msra.mxu0 0.0
      %3025 = vmatprep.subr.mxu0 0.0
      %3026 = vmatpush1.msra.mxu0 0.0
      %3027 = vmatprep.subr.mxu0 0.0
      %3028 = vmatpush1.msra.mxu0 0.0
      %3029 = vmatprep.subr.mxu0 0.0
      %3030 = vmatpush1.msra.mxu0 0.0
      %3031 = vmatprep.subr.mxu0 0.0
      %3032 = vmatpush1.msra.mxu0 0.0
      %3033 = vmatprep.subr.mxu0 0.0
      %3034 = vmatpush1.msra.mxu0 0.0
      %3035 = vmatprep.subr.mxu0 0.0
      %3036 = vmatpush1.msra.mxu0 0.0
      %3037 = vmatprep.subr.mxu0 0.0
      %3038 = vmatpush1.msra.mxu0 0.0
      %3039 = vmatprep.subr.mxu0 0.0
      %3040 = vmatpush1.msra.mxu0 0.0
      %3041 = vmatprep.subr.mxu0 0.0
      %3042 = vmatpush1.msra.mxu0 0.0
      %3043 = vmatprep.subr.mxu0 0.0
      %3044 = vmatpush1.msra.mxu0 0.0
      %3045 = vmatprep.subr.mxu0 0.0
      %3046 = vmatpush1.msra.mxu0 0.0
      %3047 = vmatprep.subr.mxu0 0.0
      %3048 = vmatpush1.msra.mxu0 0.0
      %3049 = vmatprep.subr.mxu0 0.0
      %3050 = vmatpush1.msra.mxu0 0.0
      %3051 = vmatprep.subr.mxu0 0.0
      %3052 = vmatpush1.msra.mxu0 0.0
      %3053 = vmatprep.subr.mxu0 0.0
      %3054 = vmatpush1.msra.mxu0 0.0
      %3055 = vmatprep.subr.mxu0 0.0
      %3056 = vmatpush1.msra.mxu0 0.0
      %3057 = vmatprep.subr.mxu0 0.0
      %3058 = vmatpush1.msra.mxu0 0.0
      %3059 = vmatprep.subr.mxu0 0.0
      %3060 = vmatpush1.msra.mxu0 0.0
      %3061 = vmatprep.subr.mxu0 0.0
      %3062 = vmatpush1.msra.mxu0 0.0
      %3063 = vmatprep.subr.mxu0 0.0
      %3064 = vmatpush1.msra.mxu0 0.0
      %3065 = vmatprep.subr.mxu0 0.0
      %3066 = vmatpush1.msra.mxu0 0.0
      %3067 = vmatprep.mubr.f32.mxu0 0.0
      %3068 = vmatmul.mubr.f32.gmra.mrb[0].mxu0 %v3001
      %v3069 = vpop.f32.mrb[0].mxu0
      %v3070 = vadd.f32 0.0, %v3069
      %v3071 = vpop.f32.mrb[0].mxu0
      %3072 = vdwg.mxu0
      %3074 = vrot.lane.b32.xlu0 %v3070, 24
      %v3075 = vpop.permute.xlu0 %3074
      %vm3077 = vcmask 261312
      %3078 = vst.msk [vmem:[#allocation4] sm:$0xff] %vm3077, %v3075
      %v3079 = vld [vmem:[#allocation4] sm:$0xff]
      %v3081 = vlaneseq
      %v3082 = vshrl.u32 %v3081, 7
      %v3083 = vsub.s32 0, %v3082
      %v3084 = vrot.slane %v2316, %v3083
      %v3087 = vsel %vm2284, %v3079, 0
      %3089 = vmatprep.subr.mxu0 0.0
      %3090 = vmatpush1.msra.mxu0 %v2312
      %3091 = vmatprep.subr.mxu0 0.0
      %3092 = vmatpush1.msra.mxu0 %v2313
      %3093 = vmatprep.subr.mxu0 0.0
      %3094 = vmatpush1.msra.mxu0 %v2314
      %3095 = vmatprep.subr.mxu0 0.0
      %3096 = vmatpush1.msra.mxu0 %v2315
      %3097 = vmatprep.subr.mxu0 0.0
      %3098 = vmatpush1.msra.mxu0 0.0
      %3099 = vmatprep.subr.mxu0 0.0
      %3100 = vmatpush1.msra.mxu0 0.0
      %3101 = vmatprep.subr.mxu0 0.0
      %3102 = vmatpush1.msra.mxu0 0.0
      %3103 = vmatprep.subr.mxu0 0.0
      %3104 = vmatpush1.msra.mxu0 0.0
      %3105 = vmatprep.subr.mxu0 0.0
      %3106 = vmatpush1.msra.mxu0 0.0
      %3107 = vmatprep.subr.mxu0 0.0
      %3108 = vmatpush1.msra.mxu0 0.0
      %3109 = vmatprep.subr.mxu0 0.0
      %3110 = vmatpush1.msra.mxu0 0.0
      %3111 = vmatprep.subr.mxu0 0.0
      %3112 = vmatpush1.msra.mxu0 0.0
      %3113 = vmatprep.subr.mxu0 0.0
      %3114 = vmatpush1.msra.mxu0 0.0
      %3115 = vmatprep.subr.mxu0 0.0
      %3116 = vmatpush1.msra.mxu0 0.0
      %3117 = vmatprep.subr.mxu0 0.0
      %3118 = vmatpush1.msra.mxu0 0.0
      %3119 = vmatprep.subr.mxu0 0.0
      %3120 = vmatpush1.msra.mxu0 0.0
      %3121 = vmatprep.subr.mxu0 0.0
      %3122 = vmatpush1.msra.mxu0 0.0
      %3123 = vmatprep.subr.mxu0 0.0
      %3124 = vmatpush1.msra.mxu0 0.0
      %3125 = vmatprep.subr.mxu0 0.0
      %3126 = vmatpush1.msra.mxu0 0.0
      %3127 = vmatprep.subr.mxu0 0.0
      %3128 = vmatpush1.msra.mxu0 0.0
      %3129 = vmatprep.subr.mxu0 0.0
      %3130 = vmatpush1.msra.mxu0 0.0
      %3131 = vmatprep.subr.mxu0 0.0
      %3132 = vmatpush1.msra.mxu0 0.0
      %3133 = vmatprep.subr.mxu0 0.0
      %3134 = vmatpush1.msra.mxu0 0.0
      %3135 = vmatprep.subr.mxu0 0.0
      %3136 = vmatpush1.msra.mxu0 0.0
      %3137 = vmatprep.subr.mxu0 0.0
      %3138 = vmatpush1.msra.mxu0 0.0
      %3139 = vmatprep.subr.mxu0 0.0
      %3140 = vmatpush1.msra.mxu0 0.0
      %3141 = vmatprep.subr.mxu0 0.0
      %3142 = vmatpush1.msra.mxu0 0.0
      %3143 = vmatprep.subr.mxu0 0.0
      %3144 = vmatpush1.msra.mxu0 0.0
      %3145 = vmatprep.subr.mxu0 0.0
      %3146 = vmatpush1.msra.mxu0 0.0
      %3147 = vmatprep.subr.mxu0 0.0
      %3148 = vmatpush1.msra.mxu0 0.0
      %3149 = vmatprep.subr.mxu0 0.0
      %3150 = vmatpush1.msra.mxu0 0.0
      %3151 = vmatprep.subr.mxu0 0.0
      %3152 = vmatpush1.msra.mxu0 0.0
      %3153 = vmatprep.mubr.f32.mxu0 0.0
      %3154 = vmatmul.mubr.f32.gmra.mrb[0].mxu0 %v3087
      %v3155 = vpop.f32.mrb[0].mxu0
      %v3156 = vadd.f32 %v3084, %v3155
      %v3157 = vpop.f32.mrb[0].mxu0
      %3158 = vdwg.mxu0
      %v3159 = vadd.f32 %v2282, %v3156
      %v3160 = vsel %vm2284, %v3159, 0.0
      %3161 = vadd.xlane.f32.xlu0 %v3160
      %v3162 = vpop.xlane.xlu0 %3161
      %v3163 = vmul.f32 %v3162, %v2288
      %v3164 = vsub.f32 %v3159, %v3163
      %v3165 = vmul.f32 %v3164, %v3164
      %v3166 = vsel %vm2284, %v3165, 0.0
      %3167 = vadd.xlane.f32.xlu0 %v3166
      %v3168 = vpop.xlane.xlu0 %3167
      %v3169 = vmul.f32 %v3168, %v2295
      %v3170 = vrsqrt.pop %v3169
      %v3171 = vmul.f32 %v3169, %v3170
      %vm3172 = vcmp.eq.f32.partialorder %v3169, inf
      %v3173 = vsel %vm3172, %v3169, %v3171
      %vm3174 = vcmp.eq.f32.partialorder %v3169, 0.0
      %v3175 = vand.u32 %v3169, 2147483648
      %v3176 = vsel %vm3174, %v3175, %v3173
      %v3177 = vadd.f32 %v3176, 1e-06
      %v3178 = vrcp.pop %v3177
      %v3179 = vmul.f32 %v3164, %v3178
      %v3180 = vld [vmem:[%s1051] sm:$0xff]
      %v3181 = vld [vmem:[%s1051 + $0x8] sm:$0xff]
      %v3182 = vld [vmem:[%s1051 + $0x10] sm:$0xff]
      %v3183 = vld [vmem:[%s1051 + $0x18] sm:$0xff]
      %v3184 = vld [vmem:[%s1054] sm:$0x1]
      %v3185 = vld [vmem:[%s1059] sm:$0xff]
      %v3186 = vld [vmem:[%s1059 + $0x8] sm:$0xff]
      %v3187 = vld [vmem:[%s1059 + $0x10] sm:$0xff]
      %v3188 = vld [vmem:[%s1059 + $0x18] sm:$0xff]
      %v3189 = vld [vmem:[%s1062] sm:$0x1]
      %v3190 = vld [vmem:[%s1067] sm:$0xff]
      %v3191 = vld [vmem:[%s1067 + $0x8] sm:$0xff]
      %v3192 = vld [vmem:[%s1067 + $0x10] sm:$0xff]
      %v3193 = vld [vmem:[%s1067 + $0x18] sm:$0xff]
      %v3194 = vld [vmem:[%s1070] sm:$0x1]
      %v3196 = vlaneseq
      %v3197 = vshrl.u32 %v3196, 7
      %v3198 = vsub.s32 0, %v3197
      %v3199 = vrot.slane %v3184, %v3198
      %v3202 = vsel %vm2284, %v3179, 0
      %3204 = vmatprep.subr.mxu0 0.0
      %3205 = vmatpush1.msra.mxu0 %v3180
      %3206 = vmatprep.subr.mxu0 0.0
      %3207 = vmatpush1.msra.mxu0 %v3181
      %3208 = vmatprep.subr.mxu0 0.0
      %3209 = vmatpush1.msra.mxu0 %v3182
      %3210 = vmatprep.subr.mxu0 0.0
      %3211 = vmatpush1.msra.mxu0 %v3183
      %3212 = vmatprep.subr.mxu0 0.0
      %3213 = vmatpush1.msra.mxu0 0.0
      %3214 = vmatprep.subr.mxu0 0.0
      %3215 = vmatpush1.msra.mxu0 0.0
      %3216 = vmatprep.subr.mxu0 0.0
      %3217 = vmatpush1.msra.mxu0 0.0
      %3218 = vmatprep.subr.mxu0 0.0
      %3219 = vmatpush1.msra.mxu0 0.0
      %3220 = vmatprep.subr.mxu0 0.0
      %3221 = vmatpush1.msra.mxu0 0.0
      %3222 = vmatprep.subr.mxu0 0.0
      %3223 = vmatpush1.msra.mxu0 0.0
      %3224 = vmatprep.subr.mxu0 0.0
      %3225 = vmatpush1.msra.mxu0 0.0
      %3226 = vmatprep.subr.mxu0 0.0
      %3227 = vmatpush1.msra.mxu0 0.0
      %3228 = vmatprep.subr.mxu0 0.0
      %3229 = vmatpush1.msra.mxu0 0.0
      %3230 = vmatprep.subr.mxu0 0.0
      %3231 = vmatpush1.msra.mxu0 0.0
      %3232 = vmatprep.subr.mxu0 0.0
      %3233 = vmatpush1.msra.mxu0 0.0
      %3234 = vmatprep.subr.mxu0 0.0
      %3235 = vmatpush1.msra.mxu0 0.0
      %3236 = vmatprep.subr.mxu0 0.0
      %3237 = vmatpush1.msra.mxu0 0.0
      %3238 = vmatprep.subr.mxu0 0.0
      %3239 = vmatpush1.msra.mxu0 0.0
      %3240 = vmatprep.subr.mxu0 0.0
      %3241 = vmatpush1.msra.mxu0 0.0
      %3242 = vmatprep.subr.mxu0 0.0
      %3243 = vmatpush1.msra.mxu0 0.0
      %3244 = vmatprep.subr.mxu0 0.0
      %3245 = vmatpush1.msra.mxu0 0.0
      %3246 = vmatprep.subr.mxu0 0.0
      %3247 = vmatpush1.msra.mxu0 0.0
      %3248 = vmatprep.subr.mxu0 0.0
      %3249 = vmatpush1.msra.mxu0 0.0
      %3250 = vmatprep.subr.mxu0 0.0
      %3251 = vmatpush1.msra.mxu0 0.0
      %3252 = vmatprep.subr.mxu0 0.0
      %3253 = vmatpush1.msra.mxu0 0.0
      %3254 = vmatprep.subr.mxu0 0.0
      %3255 = vmatpush1.msra.mxu0 0.0
      %3256 = vmatprep.subr.mxu0 0.0
      %3257 = vmatpush1.msra.mxu0 0.0
      %3258 = vmatprep.subr.mxu0 0.0
      %3259 = vmatpush1.msra.mxu0 0.0
      %3260 = vmatprep.subr.mxu0 0.0
      %3261 = vmatpush1.msra.mxu0 0.0
      %3262 = vmatprep.subr.mxu0 0.0
      %3263 = vmatpush1.msra.mxu0 0.0
      %3264 = vmatprep.subr.mxu0 0.0
      %3265 = vmatpush1.msra.mxu0 0.0
      %3266 = vmatprep.subr.mxu0 0.0
      %3267 = vmatpush1.msra.mxu0 0.0
      %3268 = vmatprep.mubr.f32.mxu0 0.0
      %3269 = vmatmul.mubr.f32.gmra.mrb[0].mxu0 %v3202
      %v3270 = vpop.f32.mrb[0].mxu0
      %v3271 = vadd.f32 %v3199, %v3270
      %v3272 = vpop.f32.mrb[0].mxu0
      %3273 = vdwg.mxu0
      %v3275 = vlaneseq
      %v3276 = vshrl.u32 %v3275, 7
      %v3277 = vsub.s32 0, %v3276
      %v3278 = vrot.slane %v3189, %v3277
      %v3281 = vsel %vm2284, %v2283, 0
      %3283 = vmatprep.subr.mxu0 0.0
      %3284 = vmatpush1.msra.mxu0 %v3185
      %3285 = vmatprep.subr.mxu0 0.0
      %3286 = vmatpush1.msra.mxu0 %v3186
      %3287 = vmatprep.subr.mxu0 0.0
      %3288 = vmatpush1.msra.mxu0 %v3187
      %3289 = vmatprep.subr.mxu0 0.0
      %3290 = vmatpush1.msra.mxu0 %v3188
      %3291 = vmatprep.subr.mxu0 0.0
      %3292 = vmatpush1.msra.mxu0 0.0
      %3293 = vmatprep.subr.mxu0 0.0
      %3294 = vmatpush1.msra.mxu0 0.0
      %3295 = vmatprep.subr.mxu0 0.0
      %3296 = vmatpush1.msra.mxu0 0.0
      %3297 = vmatprep.subr.mxu0 0.0
      %3298 = vmatpush1.msra.mxu0 0.0
      %3299 = vmatprep.subr.mxu0 0.0
      %3300 = vmatpush1.msra.mxu0 0.0
      %3301 = vmatprep.subr.mxu0 0.0
      %3302 = vmatpush1.msra.mxu0 0.0
      %3303 = vmatprep.subr.mxu0 0.0
      %3304 = vmatpush1.msra.mxu0 0.0
      %3305 = vmatprep.subr.mxu0 0.0
      %3306 = vmatpush1.msra.mxu0 0.0
      %3307 = vmatprep.subr.mxu0 0.0
      %3308 = vmatpush1.msra.mxu0 0.0
      %3309 = vmatprep.subr.mxu0 0.0
      %3310 = vmatpush1.msra.mxu0 0.0
      %3311 = vmatprep.subr.mxu0 0.0
      %3312 = vmatpush1.msra.mxu0 0.0
      %3313 = vmatprep.subr.mxu0 0.0
      %3314 = vmatpush1.msra.mxu0 0.0
      %3315 = vmatprep.subr.mxu0 0.0
      %3316 = vmatpush1.msra.mxu0 0.0
      %3317 = vmatprep.subr.mxu0 0.0
      %3318 = vmatpush1.msra.mxu0 0.0
      %3319 = vmatprep.subr.mxu0 0.0
      %3320 = vmatpush1.msra.mxu0 0.0
      %3321 = vmatprep.subr.mxu0 0.0
      %3322 = vmatpush1.msra.mxu0 0.0
      %3323 = vmatprep.subr.mxu0 0.0
      %3324 = vmatpush1.msra.mxu0 0.0
      %3325 = vmatprep.subr.mxu0 0.0
      %3326 = vmatpush1.msra.mxu0 0.0
      %3327 = vmatprep.subr.mxu0 0.0
      %3328 = vmatpush1.msra.mxu0 0.0
      %3329 = vmatprep.subr.mxu0 0.0
      %3330 = vmatpush1.msra.mxu0 0.0
      %3331 = vmatprep.subr.mxu0 0.0
      %3332 = vmatpush1.msra.mxu0 0.0
      %3333 = vmatprep.subr.mxu0 0.0
      %3334 = vmatpush1.msra.mxu0 0.0
      %3335 = vmatprep.subr.mxu0 0.0
      %3336 = vmatpush1.msra.mxu0 0.0
      %3337 = vmatprep.subr.mxu0 0.0
      %3338 = vmatpush1.msra.mxu0 0.0
      %3339 = vmatprep.subr.mxu0 0.0
      %3340 = vmatpush1.msra.mxu0 0.0
      %3341 = vmatprep.subr.mxu0 0.0
      %3342 = vmatpush1.msra.mxu0 0.0
      %3343 = vmatprep.subr.mxu0 0.0
      %3344 = vmatpush1.msra.mxu0 0.0
      %3345 = vmatprep.subr.mxu0 0.0
      %3346 = vmatpush1.msra.mxu0 0.0
      %3347 = vmatprep.mubr.f32.mxu0 0.0
      %3348 = vmatmul.mubr.f32.gmra.mrb[0].mxu0 %v3281
      %v3349 = vpop.f32.mrb[0].mxu0
      %v3350 = vadd.f32 %v3278, %v3349
      %v3351 = vpop.f32.mrb[0].mxu0
      %3352 = vdwg.mxu0
      %v3354 = vsel %vm2399, %v3271, 0
      %v3357 = vsel %vm2399, %v3350, 0
      %3359 = vmatprep.subr.mxu0 0.0
      %3360 = vmatpush1.xpose.msra.mxu0 %v3357
      %3361 = vmatprep.subr.mxu0 0.0
      %3362 = vmatpush1.xpose.msra.mxu0 0.0
      %3363 = vmatprep.subr.mxu0 0.0
      %3364 = vmatpush1.xpose.msra.mxu0 0.0
      %3365 = vmatprep.subr.mxu0 0.0
      %3366 = vmatpush1.xpose.msra.mxu0 0.0
      %3367 = vmatprep.subr.mxu0 0.0
      %3368 = vmatpush1.xpose.msra.mxu0 0.0
      %3369 = vmatprep.subr.mxu0 0.0
      %3370 = vmatpush1.xpose.msra.mxu0 0.0
      %3371 = vmatprep.subr.mxu0 0.0
      %3372 = vmatpush1.xpose.msra.mxu0 0.0
      %3373 = vmatprep.subr.mxu0 0.0
      %3374 = vmatpush1.xpose.msra.mxu0 0.0
      %3375 = vmatprep.subr.mxu0 0.0
      %3376 = vmatpush1.xpose.msra.mxu0 0.0
      %3377 = vmatprep.subr.mxu0 0.0
      %3378 = vmatpush1.xpose.msra.mxu0 0.0
      %3379 = vmatprep.subr.mxu0 0.0
      %3380 = vmatpush1.xpose.msra.mxu0 0.0
      %3381 = vmatprep.subr.mxu0 0.0
      %3382 = vmatpush1.xpose.msra.mxu0 0.0
      %3383 = vmatprep.subr.mxu0 0.0
      %3384 = vmatpush1.xpose.msra.mxu0 0.0
      %3385 = vmatprep.subr.mxu0 0.0
      %3386 = vmatpush1.xpose.msra.mxu0 0.0
      %3387 = vmatprep.subr.mxu0 0.0
      %3388 = vmatpush1.xpose.msra.mxu0 0.0
      %3389 = vmatprep.subr.mxu0 0.0
      %3390 = vmatpush1.xpose.msra.mxu0 0.0
      %3391 = vmatprep.subr.mxu0 0.0
      %3392 = vmatpush1.xpose.msra.mxu0 0.0
      %3393 = vmatprep.subr.mxu0 0.0
      %3394 = vmatpush1.xpose.msra.mxu0 0.0
      %3395 = vmatprep.subr.mxu0 0.0
      %3396 = vmatpush1.xpose.msra.mxu0 0.0
      %3397 = vmatprep.subr.mxu0 0.0
      %3398 = vmatpush1.xpose.msra.mxu0 0.0
      %3399 = vmatprep.subr.mxu0 0.0
      %3400 = vmatpush1.xpose.msra.mxu0 0.0
      %3401 = vmatprep.subr.mxu0 0.0
      %3402 = vmatpush1.xpose.msra.mxu0 0.0
      %3403 = vmatprep.subr.mxu0 0.0
      %3404 = vmatpush1.xpose.msra.mxu0 0.0
      %3405 = vmatprep.subr.mxu0 0.0
      %3406 = vmatpush1.xpose.msra.mxu0 0.0
      %3407 = vmatprep.subr.mxu0 0.0
      %3408 = vmatpush1.xpose.msra.mxu0 0.0
      %3409 = vmatprep.subr.mxu0 0.0
      %3410 = vmatpush1.xpose.msra.mxu0 0.0
      %3411 = vmatprep.subr.mxu0 0.0
      %3412 = vmatpush1.xpose.msra.mxu0 0.0
      %3413 = vmatprep.subr.mxu0 0.0
      %3414 = vmatpush1.xpose.msra.mxu0 0.0
      %3415 = vmatprep.subr.mxu0 0.0
      %3416 = vmatpush1.xpose.msra.mxu0 0.0
      %3417 = vmatprep.subr.mxu0 0.0
      %3418 = vmatpush1.xpose.msra.mxu0 0.0
      %3419 = vmatprep.subr.mxu0 0.0
      %3420 = vmatpush1.xpose.msra.mxu0 0.0
      %3421 = vmatprep.subr.mxu0 0.0
      %3422 = vmatpush1.xpose.msra.mxu0 0.0
      %3423 = vmatprep.mubr.f32.mxu0 0.0
      %3424 = vmatmul.mubr.f32.gmra.mrb[0].mxu0 %v3354
      %v3425 = vpop.f32.mrb[0].mxu0
      %v3426 = vadd.f32 0.0, %v3425
      %v3427 = vpop.f32.mrb[0].mxu0
      %3428 = vdwg.mxu0
      %v3429 = vmul.f32 %v3426, 0.35355338
      %v3430 = vsel %vm2399, %v3429, -inf
      %3431 = vmax.xlane.f32.xlu0 %v3430
      %v3432 = vpop.xlane.xlu0 %3431
      %v3433 = vsub.f32 %v3429, %v3432
      %v3434 = vmul.f32 %v3433, 1.442695
      %v3435 = vpow.pop %v3434
      %v3436 = vsel %vm2399, %v3435, 0.0
      %3437 = vadd.xlane.f32.xlu0 %v3436
      %v3438 = vpop.xlane.xlu0 %3437
      %v3439 = vrcp.pop %v3438
      %v3440 = vmul.f32 %v3435, %v3439
      %3441 = vrot.lane.b32.xlu0 %v3350, 96
      %v3442 = vpop.permute.xlu0 %3441
      %v3445 = vsel %vm2399, %v3440, 0
      %3447 = vmatprep.subr.mxu0 0.0
      %3448 = vmatpush1.msra.mxu0 %v3442
      %3449 = vmatprep.subr.mxu0 0.0
      %3450 = vmatpush1.msra.mxu0 0.0
      %3451 = vmatprep.subr.mxu0 0.0
      %3452 = vmatpush1.msra.mxu0 0.0
      %3453 = vmatprep.subr.mxu0 0.0
      %3454 = vmatpush1.msra.mxu0 0.0
      %3455 = vmatprep.subr.mxu0 0.0
      %3456 = vmatpush1.msra.mxu0 0.0
      %3457 = vmatprep.subr.mxu0 0.0
      %3458 = vmatpush1.msra.mxu0 0.0
      %3459 = vmatprep.subr.mxu0 0.0
      %3460 = vmatpush1.msra.mxu0 0.0
      %3461 = vmatprep.subr.mxu0 0.0
      %3462 = vmatpush1.msra.mxu0 0.0
      %3463 = vmatprep.subr.mxu0 0.0
      %3464 = vmatpush1.msra.mxu0 0.0
      %3465 = vmatprep.subr.mxu0 0.0
      %3466 = vmatpush1.msra.mxu0 0.0
      %3467 = vmatprep.subr.mxu0 0.0
      %3468 = vmatpush1.msra.mxu0 0.0
      %3469 = vmatprep.subr.mxu0 0.0
      %3470 = vmatpush1.msra.mxu0 0.0
      %3471 = vmatprep.subr.mxu0 0.0
      %3472 = vmatpush1.msra.mxu0 0.0
      %3473 = vmatprep.subr.mxu0 0.0
      %3474 = vmatpush1.msra.mxu0 0.0
      %3475 = vmatprep.subr.mxu0 0.0
      %3476 = vmatpush1.msra.mxu0 0.0
      %3477 = vmatprep.subr.mxu0 0.0
      %3478 = vmatpush1.msra.mxu0 0.0
      %3479 = vmatprep.subr.mxu0 0.0
      %3480 = vmatpush1.msra.mxu0 0.0
      %3481 = vmatprep.subr.mxu0 0.0
      %3482 = vmatpush1.msra.mxu0 0.0
      %3483 = vmatprep.subr.mxu0 0.0
      %3484 = vmatpush1.msra.mxu0 0.0
      %3485 = vmatprep.subr.mxu0 0.0
      %3486 = vmatpush1.msra.mxu0 0.0
      %3487 = vmatprep.subr.mxu0 0.0
      %3488 = vmatpush1.msra.mxu0 0.0
      %3489 = vmatprep.subr.mxu0 0.0
      %3490 = vmatpush1.msra.mxu0 0.0
      %3491 = vmatprep.subr.mxu0 0.0
      %3492 = vmatpush1.msra.mxu0 0.0
      %3493 = vmatprep.subr.mxu0 0.0
      %3494 = vmatpush1.msra.mxu0 0.0
      %3495 = vmatprep.subr.mxu0 0.0
      %3496 = vmatpush1.msra.mxu0 0.0
      %3497 = vmatprep.subr.mxu0 0.0
      %3498 = vmatpush1.msra.mxu0 0.0
      %3499 = vmatprep.subr.mxu0 0.0
      %3500 = vmatpush1.msra.mxu0 0.0
      %3501 = vmatprep.subr.mxu0 0.0
      %3502 = vmatpush1.msra.mxu0 0.0
      %3503 = vmatprep.subr.mxu0 0.0
      %3504 = vmatpush1.msra.mxu0 0.0
      %3505 = vmatprep.subr.mxu0 0.0
      %3506 = vmatpush1.msra.mxu0 0.0
      %3507 = vmatprep.subr.mxu0 0.0
      %3508 = vmatpush1.msra.mxu0 0.0
      %3509 = vmatprep.subr.mxu0 0.0
      %3510 = vmatpush1.msra.mxu0 0.0
      %3511 = vmatprep.mubr.f32.mxu0 0.0
      %3512 = vmatmul.mubr.f32.gmra.mrb[0].mxu0 %v3445
      %v3513 = vpop.f32.mrb[0].mxu0
      %v3514 = vadd.f32 0.0, %v3513
      %v3515 = vpop.f32.mrb[0].mxu0
      %3516 = vdwg.mxu0
      %3517 = vst.msk [vmem:[#allocation4] sm:$0xff] %vm2399, %v3514
      %3518 = vrot.lane.b32.xlu0 %v3271, 120
      %v3519 = vpop.permute.xlu0 %3518
      %3520 = vrot.lane.b32.xlu0 %v3350, 120
      %v3521 = vpop.permute.xlu0 %3520
      %v3522 = vsel %vm2399, %v3519, 0
      %v3524 = vsel %vm2399, %v3521, 0
      %3526 = vmatprep.subr.mxu0 0.0
      %3527 = vmatpush1.xpose.msra.mxu0 %v3524
      %3528 = vmatprep.subr.mxu0 0.0
      %3529 = vmatpush1.xpose.msra.mxu0 0.0
      %3530 = vmatprep.subr.mxu0 0.0
      %3531 = vmatpush1.xpose.msra.mxu0 0.0
      %3532 = vmatprep.subr.mxu0 0.0
      %3533 = vmatpush1.xpose.msra.mxu0 0.0
      %3534 = vmatprep.subr.mxu0 0.0
      %3535 = vmatpush1.xpose.msra.mxu0 0.0
      %3536 = vmatprep.subr.mxu0 0.0
      %3537 = vmatpush1.xpose.msra.mxu0 0.0
      %3538 = vmatprep.subr.mxu0 0.0
      %3539 = vmatpush1.xpose.msra.mxu0 0.0
      %3540 = vmatprep.subr.mxu0 0.0
      %3541 = vmatpush1.xpose.msra.mxu0 0.0
      %3542 = vmatprep.subr.mxu0 0.0
      %3543 = vmatpush1.xpose.msra.mxu0 0.0
      %3544 = vmatprep.subr.mxu0 0.0
      %3545 = vmatpush1.xpose.msra.mxu0 0.0
      %3546 = vmatprep.subr.mxu0 0.0
      %3547 = vmatpush1.xpose.msra.mxu0 0.0
      %3548 = vmatprep.subr.mxu0 0.0
      %3549 = vmatpush1.xpose.msra.mxu0 0.0
      %3550 = vmatprep.subr.mxu0 0.0
      %3551 = vmatpush1.xpose.msra.mxu0 0.0
      %3552 = vmatprep.subr.mxu0 0.0
      %3553 = vmatpush1.xpose.msra.mxu0 0.0
      %3554 = vmatprep.subr.mxu0 0.0
      %3555 = vmatpush1.xpose.msra.mxu0 0.0
      %3556 = vmatprep.subr.mxu0 0.0
      %3557 = vmatpush1.xpose.msra.mxu0 0.0
      %3558 = vmatprep.subr.mxu0 0.0
      %3559 = vmatpush1.xpose.msra.mxu0 0.0
      %3560 = vmatprep.subr.mxu0 0.0
      %3561 = vmatpush1.xpose.msra.mxu0 0.0
      %3562 = vmatprep.subr.mxu0 0.0
      %3563 = vmatpush1.xpose.msra.mxu0 0.0
      %3564 = vmatprep.subr.mxu0 0.0
      %3565 = vmatpush1.xpose.msra.mxu0 0.0
      %3566 = vmatprep.subr.mxu0 0.0
      %3567 = vmatpush1.xpose.msra.mxu0 0.0
      %3568 = vmatprep.subr.mxu0 0.0
      %3569 = vmatpush1.xpose.msra.mxu0 0.0
      %3570 = vmatprep.subr.mxu0 0.0
      %3571 = vmatpush1.xpose.msra.mxu0 0.0
      %3572 = vmatprep.subr.mxu0 0.0
      %3573 = vmatpush1.xpose.msra.mxu0 0.0
      %3574 = vmatprep.subr.mxu0 0.0
      %3575 = vmatpush1.xpose.msra.mxu0 0.0
      %3576 = vmatprep.subr.mxu0 0.0
      %3577 = vmatpush1.xpose.msra.mxu0 0.0
      %3578 = vmatprep.subr.mxu0 0.0
      %3579 = vmatpush1.xpose.msra.mxu0 0.0
      %3580 = vmatprep.subr.mxu0 0.0
      %3581 = vmatpush1.xpose.msra.mxu0 0.0
      %3582 = vmatprep.subr.mxu0 0.0
      %3583 = vmatpush1.xpose.msra.mxu0 0.0
      %3584 = vmatprep.subr.mxu0 0.0
      %3585 = vmatpush1.xpose.msra.mxu0 0.0
      %3586 = vmatprep.subr.mxu0 0.0
      %3587 = vmatpush1.xpose.msra.mxu0 0.0
      %3588 = vmatprep.subr.mxu0 0.0
      %3589 = vmatpush1.xpose.msra.mxu0 0.0
      %3590 = vmatprep.mubr.f32.mxu0 0.0
      %3591 = vmatmul.mubr.f32.gmra.mrb[0].mxu0 %v3522
      %v3592 = vpop.f32.mrb[0].mxu0
      %v3593 = vadd.f32 0.0, %v3592
      %v3594 = vpop.f32.mrb[0].mxu0
      %3595 = vdwg.mxu0
      %v3596 = vmul.f32 %v3593, 0.35355338
      %v3597 = vsel %vm2399, %v3596, -inf
      %3598 = vmax.xlane.f32.xlu0 %v3597
      %v3599 = vpop.xlane.xlu0 %3598
      %v3600 = vsub.f32 %v3596, %v3599
      %v3601 = vmul.f32 %v3600, 1.442695
      %v3602 = vpow.pop %v3601
      %v3603 = vsel %vm2399, %v3602, 0.0
      %3604 = vadd.xlane.f32.xlu0 %v3603
      %v3605 = vpop.xlane.xlu0 %3604
      %v3606 = vrcp.pop %v3605
      %v3607 = vmul.f32 %v3602, %v3606
      %3608 = vrot.lane.b32.xlu0 %v3350, 88
      %v3609 = vpop.permute.xlu0 %3608
      %v3612 = vsel %vm2399, %v3607, 0
      %3614 = vmatprep.subr.mxu0 0.0
      %3615 = vmatpush1.msra.mxu0 %v3609
      %3616 = vmatprep.subr.mxu0 0.0
      %3617 = vmatpush1.msra.mxu0 0.0
      %3618 = vmatprep.subr.mxu0 0.0
      %3619 = vmatpush1.msra.mxu0 0.0
      %3620 = vmatprep.subr.mxu0 0.0
      %3621 = vmatpush1.msra.mxu0 0.0
      %3622 = vmatprep.subr.mxu0 0.0
      %3623 = vmatpush1.msra.mxu0 0.0
      %3624 = vmatprep.subr.mxu0 0.0
      %3625 = vmatpush1.msra.mxu0 0.0
      %3626 = vmatprep.subr.mxu0 0.0
      %3627 = vmatpush1.msra.mxu0 0.0
      %3628 = vmatprep.subr.mxu0 0.0
      %3629 = vmatpush1.msra.mxu0 0.0
      %3630 = vmatprep.subr.mxu0 0.0
      %3631 = vmatpush1.msra.mxu0 0.0
      %3632 = vmatprep.subr.mxu0 0.0
      %3633 = vmatpush1.msra.mxu0 0.0
      %3634 = vmatprep.subr.mxu0 0.0
      %3635 = vmatpush1.msra.mxu0 0.0
      %3636 = vmatprep.subr.mxu0 0.0
      %3637 = vmatpush1.msra.mxu0 0.0
      %3638 = vmatprep.subr.mxu0 0.0
      %3639 = vmatpush1.msra.mxu0 0.0
      %3640 = vmatprep.subr.mxu0 0.0
      %3641 = vmatpush1.msra.mxu0 0.0
      %3642 = vmatprep.subr.mxu0 0.0
      %3643 = vmatpush1.msra.mxu0 0.0
      %3644 = vmatprep.subr.mxu0 0.0
      %3645 = vmatpush1.msra.mxu0 0.0
      %3646 = vmatprep.subr.mxu0 0.0
      %3647 = vmatpush1.msra.mxu0 0.0
      %3648 = vmatprep.subr.mxu0 0.0
      %3649 = vmatpush1.msra.mxu0 0.0
      %3650 = vmatprep.subr.mxu0 0.0
      %3651 = vmatpush1.msra.mxu0 0.0
      %3652 = vmatprep.subr.mxu0 0.0
      %3653 = vmatpush1.msra.mxu0 0.0
      %3654 = vmatprep.subr.mxu0 0.0
      %3655 = vmatpush1.msra.mxu0 0.0
      %3656 = vmatprep.subr.mxu0 0.0
      %3657 = vmatpush1.msra.mxu0 0.0
      %3658 = vmatprep.subr.mxu0 0.0
      %3659 = vmatpush1.msra.mxu0 0.0
      %3660 = vmatprep.subr.mxu0 0.0
      %3661 = vmatpush1.msra.mxu0 0.0
      %3662 = vmatprep.subr.mxu0 0.0
      %3663 = vmatpush1.msra.mxu0 0.0
      %3664 = vmatprep.subr.mxu0 0.0
      %3665 = vmatpush1.msra.mxu0 0.0
      %3666 = vmatprep.subr.mxu0 0.0
      %3667 = vmatpush1.msra.mxu0 0.0
      %3668 = vmatprep.subr.mxu0 0.0
      %3669 = vmatpush1.msra.mxu0 0.0
      %3670 = vmatprep.subr.mxu0 0.0
      %3671 = vmatpush1.msra.mxu0 0.0
      %3672 = vmatprep.subr.mxu0 0.0
      %3673 = vmatpush1.msra.mxu0 0.0
      %3674 = vmatprep.subr.mxu0 0.0
      %3675 = vmatpush1.msra.mxu0 0.0
      %3676 = vmatprep.subr.mxu0 0.0
      %3677 = vmatpush1.msra.mxu0 0.0
      %3678 = vmatprep.mubr.f32.mxu0 0.0
      %3679 = vmatmul.mubr.f32.gmra.mrb[0].mxu0 %v3612
      %v3680 = vpop.f32.mrb[0].mxu0
      %v3681 = vadd.f32 0.0, %v3680
      %v3682 = vpop.f32.mrb[0].mxu0
      %3683 = vdwg.mxu0
      %3685 = vrot.lane.b32.xlu0 %v3681, 8
      %v3686 = vpop.permute.xlu0 %3685
      %3688 = vst.msk [vmem:[#allocation4] sm:$0xff] %vm2733, %v3686
      %3689 = vrot.lane.b32.xlu0 %v3271, 112
      %v3690 = vpop.permute.xlu0 %3689
      %3691 = vrot.lane.b32.xlu0 %v3350, 112
      %v3692 = vpop.permute.xlu0 %3691
      %v3693 = vsel %vm2399, %v3690, 0
      %v3695 = vsel %vm2399, %v3692, 0
      %3697 = vmatprep.subr.mxu0 0.0
      %3698 = vmatpush1.xpose.msra.mxu0 %v3695
      %3699 = vmatprep.subr.mxu0 0.0
      %3700 = vmatpush1.xpose.msra.mxu0 0.0
      %3701 = vmatprep.subr.mxu0 0.0
      %3702 = vmatpush1.xpose.msra.mxu0 0.0
      %3703 = vmatprep.subr.mxu0 0.0
      %3704 = vmatpush1.xpose.msra.mxu0 0.0
      %3705 = vmatprep.subr.mxu0 0.0
      %3706 = vmatpush1.xpose.msra.mxu0 0.0
      %3707 = vmatprep.subr.mxu0 0.0
      %3708 = vmatpush1.xpose.msra.mxu0 0.0
      %3709 = vmatprep.subr.mxu0 0.0
      %3710 = vmatpush1.xpose.msra.mxu0 0.0
      %3711 = vmatprep.subr.mxu0 0.0
      %3712 = vmatpush1.xpose.msra.mxu0 0.0
      %3713 = vmatprep.subr.mxu0 0.0
      %3714 = vmatpush1.xpose.msra.mxu0 0.0
      %3715 = vmatprep.subr.mxu0 0.0
      %3716 = vmatpush1.xpose.msra.mxu0 0.0
      %3717 = vmatprep.subr.mxu0 0.0
      %3718 = vmatpush1.xpose.msra.mxu0 0.0
      %3719 = vmatprep.subr.mxu0 0.0
      %3720 = vmatpush1.xpose.msra.mxu0 0.0
      %3721 = vmatprep.subr.mxu0 0.0
      %3722 = vmatpush1.xpose.msra.mxu0 0.0
      %3723 = vmatprep.subr.mxu0 0.0
      %3724 = vmatpush1.xpose.msra.mxu0 0.0
      %3725 = vmatprep.subr.mxu0 0.0
      %3726 = vmatpush1.xpose.msra.mxu0 0.0
      %3727 = vmatprep.subr.mxu0 0.0
      %3728 = vmatpush1.xpose.msra.mxu0 0.0
      %3729 = vmatprep.subr.mxu0 0.0
      %3730 = vmatpush1.xpose.msra.mxu0 0.0
      %3731 = vmatprep.subr.mxu0 0.0
      %3732 = vmatpush1.xpose.msra.mxu0 0.0
      %3733 = vmatprep.subr.mxu0 0.0
      %3734 = vmatpush1.xpose.msra.mxu0 0.0
      %3735 = vmatprep.subr.mxu0 0.0
      %3736 = vmatpush1.xpose.msra.mxu0 0.0
      %3737 = vmatprep.subr.mxu0 0.0
      %3738 = vmatpush1.xpose.msra.mxu0 0.0
      %3739 = vmatprep.subr.mxu0 0.0
      %3740 = vmatpush1.xpose.msra.mxu0 0.0
      %3741 = vmatprep.subr.mxu0 0.0
      %3742 = vmatpush1.xpose.msra.mxu0 0.0
      %3743 = vmatprep.subr.mxu0 0.0
      %3744 = vmatpush1.xpose.msra.mxu0 0.0
      %3745 = vmatprep.subr.mxu0 0.0
      %3746 = vmatpush1.xpose.msra.mxu0 0.0
      %3747 = vmatprep.subr.mxu0 0.0
      %3748 = vmatpush1.xpose.msra.mxu0 0.0
      %3749 = vmatprep.subr.mxu0 0.0
      %3750 = vmatpush1.xpose.msra.mxu0 0.0
      %3751 = vmatprep.subr.mxu0 0.0
      %3752 = vmatpush1.xpose.msra.mxu0 0.0
      %3753 = vmatprep.subr.mxu0 0.0
      %3754 = vmatpush1.xpose.msra.mxu0 0.0
      %3755 = vmatprep.subr.mxu0 0.0
      %3756 = vmatpush1.xpose.msra.mxu0 0.0
      %3757 = vmatprep.subr.mxu0 0.0
      %3758 = vmatpush1.xpose.msra.mxu0 0.0
      %3759 = vmatprep.subr.mxu0 0.0
      %3760 = vmatpush1.xpose.msra.mxu0 0.0
      %3761 = vmatprep.mubr.f32.mxu0 0.0
      %3762 = vmatmul.mubr.f32.gmra.mrb[0].mxu0 %v3693
      %v3763 = vpop.f32.mrb[0].mxu0
      %v3764 = vadd.f32 0.0, %v3763
      %v3765 = vpop.f32.mrb[0].mxu0
      %3766 = vdwg.mxu0
      %v3767 = vmul.f32 %v3764, 0.35355338
      %v3768 = vsel %vm2399, %v3767, -inf
      %3769 = vmax.xlane.f32.xlu0 %v3768
      %v3770 = vpop.xlane.xlu0 %3769
      %v3771 = vsub.f32 %v3767, %v3770
      %v3772 = vmul.f32 %v3771, 1.442695
      %v3773 = vpow.pop %v3772
      %v3774 = vsel %vm2399, %v3773, 0.0
      %3775 = vadd.xlane.f32.xlu0 %v3774
      %v3776 = vpop.xlane.xlu0 %3775
      %v3777 = vrcp.pop %v3776
      %v3778 = vmul.f32 %v3773, %v3777
      %3779 = vrot.lane.b32.xlu0 %v3350, 80
      %v3780 = vpop.permute.xlu0 %3779
      %v3783 = vsel %vm2399, %v3778, 0
      %3785 = vmatprep.subr.mxu0 0.0
      %3786 = vmatpush1.msra.mxu0 %v3780
      %3787 = vmatprep.subr.mxu0 0.0
      %3788 = vmatpush1.msra.mxu0 0.0
      %3789 = vmatprep.subr.mxu0 0.0
      %3790 = vmatpush1.msra.mxu0 0.0
      %3791 = vmatprep.subr.mxu0 0.0
      %3792 = vmatpush1.msra.mxu0 0.0
      %3793 = vmatprep.subr.mxu0 0.0
      %3794 = vmatpush1.msra.mxu0 0.0
      %3795 = vmatprep.subr.mxu0 0.0
      %3796 = vmatpush1.msra.mxu0 0.0
      %3797 = vmatprep.subr.mxu0 0.0
      %3798 = vmatpush1.msra.mxu0 0.0
      %3799 = vmatprep.subr.mxu0 0.0
      %3800 = vmatpush1.msra.mxu0 0.0
      %3801 = vmatprep.subr.mxu0 0.0
      %3802 = vmatpush1.msra.mxu0 0.0
      %3803 = vmatprep.subr.mxu0 0.0
      %3804 = vmatpush1.msra.mxu0 0.0
      %3805 = vmatprep.subr.mxu0 0.0
      %3806 = vmatpush1.msra.mxu0 0.0
      %3807 = vmatprep.subr.mxu0 0.0
      %3808 = vmatpush1.msra.mxu0 0.0
      %3809 = vmatprep.subr.mxu0 0.0
      %3810 = vmatpush1.msra.mxu0 0.0
      %3811 = vmatprep.subr.mxu0 0.0
      %3812 = vmatpush1.msra.mxu0 0.0
      %3813 = vmatprep.subr.mxu0 0.0
      %3814 = vmatpush1.msra.mxu0 0.0
      %3815 = vmatprep.subr.mxu0 0.0
      %3816 = vmatpush1.msra.mxu0 0.0
      %3817 = vmatprep.subr.mxu0 0.0
      %3818 = vmatpush1.msra.mxu0 0.0
      %3819 = vmatprep.subr.mxu0 0.0
      %3820 = vmatpush1.msra.mxu0 0.0
      %3821 = vmatprep.subr.mxu0 0.0
      %3822 = vmatpush1.msra.mxu0 0.0
      %3823 = vmatprep.subr.mxu0 0.0
      %3824 = vmatpush1.msra.mxu0 0.0
      %3825 = vmatprep.subr.mxu0 0.0
      %3826 = vmatpush1.msra.mxu0 0.0
      %3827 = vmatprep.subr.mxu0 0.0
      %3828 = vmatpush1.msra.mxu0 0.0
      %3829 = vmatprep.subr.mxu0 0.0
      %3830 = vmatpush1.msra.mxu0 0.0
      %3831 = vmatprep.subr.mxu0 0.0
      %3832 = vmatpush1.msra.mxu0 0.0
      %3833 = vmatprep.subr.mxu0 0.0
      %3834 = vmatpush1.msra.mxu0 0.0
      %3835 = vmatprep.subr.mxu0 0.0
      %3836 = vmatpush1.msra.mxu0 0.0
      %3837 = vmatprep.subr.mxu0 0.0
      %3838 = vmatpush1.msra.mxu0 0.0
      %3839 = vmatprep.subr.mxu0 0.0
      %3840 = vmatpush1.msra.mxu0 0.0
      %3841 = vmatprep.subr.mxu0 0.0
      %3842 = vmatpush1.msra.mxu0 0.0
      %3843 = vmatprep.subr.mxu0 0.0
      %3844 = vmatpush1.msra.mxu0 0.0
      %3845 = vmatprep.subr.mxu0 0.0
      %3846 = vmatpush1.msra.mxu0 0.0
      %3847 = vmatprep.subr.mxu0 0.0
      %3848 = vmatpush1.msra.mxu0 0.0
      %3849 = vmatprep.mubr.f32.mxu0 0.0
      %3850 = vmatmul.mubr.f32.gmra.mrb[0].mxu0 %v3783
      %v3851 = vpop.f32.mrb[0].mxu0
      %v3852 = vadd.f32 0.0, %v3851
      %v3853 = vpop.f32.mrb[0].mxu0
      %3854 = vdwg.mxu0
      %3856 = vrot.lane.b32.xlu0 %v3852, 16
      %v3857 = vpop.permute.xlu0 %3856
      %3859 = vst.msk [vmem:[#allocation4] sm:$0xff] %vm2905, %v3857
      %3860 = vrot.lane.b32.xlu0 %v3271, 104
      %v3861 = vpop.permute.xlu0 %3860
      %3862 = vrot.lane.b32.xlu0 %v3350, 104
      %v3863 = vpop.permute.xlu0 %3862
      %v3864 = vsel %vm2399, %v3861, 0
      %v3866 = vsel %vm2399, %v3863, 0
      %3868 = vmatprep.subr.mxu0 0.0
      %3869 = vmatpush1.xpose.msra.mxu0 %v3866
      %3870 = vmatprep.subr.mxu0 0.0
      %3871 = vmatpush1.xpose.msra.mxu0 0.0
      %3872 = vmatprep.subr.mxu0 0.0
      %3873 = vmatpush1.xpose.msra.mxu0 0.0
      %3874 = vmatprep.subr.mxu0 0.0
      %3875 = vmatpush1.xpose.msra.mxu0 0.0
      %3876 = vmatprep.subr.mxu0 0.0
      %3877 = vmatpush1.xpose.msra.mxu0 0.0
      %3878 = vmatprep.subr.mxu0 0.0
      %3879 = vmatpush1.xpose.msra.mxu0 0.0
      %3880 = vmatprep.subr.mxu0 0.0
      %3881 = vmatpush1.xpose.msra.mxu0 0.0
      %3882 = vmatprep.subr.mxu0 0.0
      %3883 = vmatpush1.xpose.msra.mxu0 0.0
      %3884 = vmatprep.subr.mxu0 0.0
      %3885 = vmatpush1.xpose.msra.mxu0 0.0
      %3886 = vmatprep.subr.mxu0 0.0
      %3887 = vmatpush1.xpose.msra.mxu0 0.0
      %3888 = vmatprep.subr.mxu0 0.0
      %3889 = vmatpush1.xpose.msra.mxu0 0.0
      %3890 = vmatprep.subr.mxu0 0.0
      %3891 = vmatpush1.xpose.msra.mxu0 0.0
      %3892 = vmatprep.subr.mxu0 0.0
      %3893 = vmatpush1.xpose.msra.mxu0 0.0
      %3894 = vmatprep.subr.mxu0 0.0
      %3895 = vmatpush1.xpose.msra.mxu0 0.0
      %3896 = vmatprep.subr.mxu0 0.0
      %3897 = vmatpush1.xpose.msra.mxu0 0.0
      %3898 = vmatprep.subr.mxu0 0.0
      %3899 = vmatpush1.xpose.msra.mxu0 0.0
      %3900 = vmatprep.subr.mxu0 0.0
      %3901 = vmatpush1.xpose.msra.mxu0 0.0
      %3902 = vmatprep.subr.mxu0 0.0
      %3903 = vmatpush1.xpose.msra.mxu0 0.0
      %3904 = vmatprep.subr.mxu0 0.0
      %3905 = vmatpush1.xpose.msra.mxu0 0.0
      %3906 = vmatprep.subr.mxu0 0.0
      %3907 = vmatpush1.xpose.msra.mxu0 0.0
      %3908 = vmatprep.subr.mxu0 0.0
      %3909 = vmatpush1.xpose.msra.mxu0 0.0
      %3910 = vmatprep.subr.mxu0 0.0
      %3911 = vmatpush1.xpose.msra.mxu0 0.0
      %3912 = vmatprep.subr.mxu0 0.0
      %3913 = vmatpush1.xpose.msra.mxu0 0.0
      %3914 = vmatprep.subr.mxu0 0.0
      %3915 = vmatpush1.xpose.msra.mxu0 0.0
      %3916 = vmatprep.subr.mxu0 0.0
      %3917 = vmatpush1.xpose.msra.mxu0 0.0
      %3918 = vmatprep.subr.mxu0 0.0
      %3919 = vmatpush1.xpose.msra.mxu0 0.0
      %3920 = vmatprep.subr.mxu0 0.0
      %3921 = vmatpush1.xpose.msra.mxu0 0.0
      %3922 = vmatprep.subr.mxu0 0.0
      %3923 = vmatpush1.xpose.msra.mxu0 0.0
      %3924 = vmatprep.subr.mxu0 0.0
      %3925 = vmatpush1.xpose.msra.mxu0 0.0
      %3926 = vmatprep.subr.mxu0 0.0
      %3927 = vmatpush1.xpose.msra.mxu0 0.0
      %3928 = vmatprep.subr.mxu0 0.0
      %3929 = vmatpush1.xpose.msra.mxu0 0.0
      %3930 = vmatprep.subr.mxu0 0.0
      %3931 = vmatpush1.xpose.msra.mxu0 0.0
      %3932 = vmatprep.mubr.f32.mxu0 0.0
      %3933 = vmatmul.mubr.f32.gmra.mrb[0].mxu0 %v3864
      %v3934 = vpop.f32.mrb[0].mxu0
      %v3935 = vadd.f32 0.0, %v3934
      %v3936 = vpop.f32.mrb[0].mxu0
      %3937 = vdwg.mxu0
      %v3938 = vmul.f32 %v3935, 0.35355338
      %v3939 = vsel %vm2399, %v3938, -inf
      %3940 = vmax.xlane.f32.xlu0 %v3939
      %v3941 = vpop.xlane.xlu0 %3940
      %v3942 = vsub.f32 %v3938, %v3941
      %v3943 = vmul.f32 %v3942, 1.442695
      %v3944 = vpow.pop %v3943
      %v3945 = vsel %vm2399, %v3944, 0.0
      %3946 = vadd.xlane.f32.xlu0 %v3945
      %v3947 = vpop.xlane.xlu0 %3946
      %v3948 = vrcp.pop %v3947
      %v3949 = vmul.f32 %v3944, %v3948
      %3950 = vrot.lane.b32.xlu0 %v3350, 72
      %v3951 = vpop.permute.xlu0 %3950
      %v3954 = vsel %vm2399, %v3949, 0
      %3956 = vmatprep.subr.mxu0 0.0
      %3957 = vmatpush1.msra.mxu0 %v3951
      %3958 = vmatprep.subr.mxu0 0.0
      %3959 = vmatpush1.msra.mxu0 0.0
      %3960 = vmatprep.subr.mxu0 0.0
      %3961 = vmatpush1.msra.mxu0 0.0
      %3962 = vmatprep.subr.mxu0 0.0
      %3963 = vmatpush1.msra.mxu0 0.0
      %3964 = vmatprep.subr.mxu0 0.0
      %3965 = vmatpush1.msra.mxu0 0.0
      %3966 = vmatprep.subr.mxu0 0.0
      %3967 = vmatpush1.msra.mxu0 0.0
      %3968 = vmatprep.subr.mxu0 0.0
      %3969 = vmatpush1.msra.mxu0 0.0
      %3970 = vmatprep.subr.mxu0 0.0
      %3971 = vmatpush1.msra.mxu0 0.0
      %3972 = vmatprep.subr.mxu0 0.0
      %3973 = vmatpush1.msra.mxu0 0.0
      %3974 = vmatprep.subr.mxu0 0.0
      %3975 = vmatpush1.msra.mxu0 0.0
      %3976 = vmatprep.subr.mxu0 0.0
      %3977 = vmatpush1.msra.mxu0 0.0
      %3978 = vmatprep.subr.mxu0 0.0
      %3979 = vmatpush1.msra.mxu0 0.0
      %3980 = vmatprep.subr.mxu0 0.0
      %3981 = vmatpush1.msra.mxu0 0.0
      %3982 = vmatprep.subr.mxu0 0.0
      %3983 = vmatpush1.msra.mxu0 0.0
      %3984 = vmatprep.subr.mxu0 0.0
      %3985 = vmatpush1.msra.mxu0 0.0
      %3986 = vmatprep.subr.mxu0 0.0
      %3987 = vmatpush1.msra.mxu0 0.0
      %3988 = vmatprep.subr.mxu0 0.0
      %3989 = vmatpush1.msra.mxu0 0.0
      %3990 = vmatprep.subr.mxu0 0.0
      %3991 = vmatpush1.msra.mxu0 0.0
      %3992 = vmatprep.subr.mxu0 0.0
      %3993 = vmatpush1.msra.mxu0 0.0
      %3994 = vmatprep.subr.mxu0 0.0
      %3995 = vmatpush1.msra.mxu0 0.0
      %3996 = vmatprep.subr.mxu0 0.0
      %3997 = vmatpush1.msra.mxu0 0.0
      %3998 = vmatprep.subr.mxu0 0.0
      %3999 = vmatpush1.msra.mxu0 0.0
      %4000 = vmatprep.subr.mxu0 0.0
      %4001 = vmatpush1.msra.mxu0 0.0
      %4002 = vmatprep.subr.mxu0 0.0
      %4003 = vmatpush1.msra.mxu0 0.0
      %4004 = vmatprep.subr.mxu0 0.0
      %4005 = vmatpush1.msra.mxu0 0.0
      %4006 = vmatprep.subr.mxu0 0.0
      %4007 = vmatpush1.msra.mxu0 0.0
      %4008 = vmatprep.subr.mxu0 0.0
      %4009 = vmatpush1.msra.mxu0 0.0
      %4010 = vmatprep.subr.mxu0 0.0
      %4011 = vmatpush1.msra.mxu0 0.0
      %4012 = vmatprep.subr.mxu0 0.0
      %4013 = vmatpush1.msra.mxu0 0.0
      %4014 = vmatprep.subr.mxu0 0.0
      %4015 = vmatpush1.msra.mxu0 0.0
      %4016 = vmatprep.subr.mxu0 0.0
      %4017 = vmatpush1.msra.mxu0 0.0
      %4018 = vmatprep.subr.mxu0 0.0
      %4019 = vmatpush1.msra.mxu0 0.0
      %4020 = vmatprep.mubr.f32.mxu0 0.0
      %4021 = vmatmul.mubr.f32.gmra.mrb[0].mxu0 %v3954
      %v4022 = vpop.f32.mrb[0].mxu0
      %v4023 = vadd.f32 0.0, %v4022
      %v4024 = vpop.f32.mrb[0].mxu0
      %4025 = vdwg.mxu0
      %4027 = vrot.lane.b32.xlu0 %v4023, 24
      %v4028 = vpop.permute.xlu0 %4027
      %4030 = vst.msk [vmem:[#allocation4] sm:$0xff] %vm3077, %v4028
      %v4031 = vld [vmem:[#allocation4] sm:$0xff]
      %v4033 = vlaneseq
      %v4034 = vshrl.u32 %v4033, 7
      %v4035 = vsub.s32 0, %v4034
      %v4036 = vrot.slane %v3194, %v4035
      %v4039 = vsel %vm2284, %v4031, 0
      %4041 = vmatprep.subr.mxu0 0.0
      %4042 = vmatpush1.msra.mxu0 %v3190
      %4043 = vmatprep.subr.mxu0 0.0
      %4044 = vmatpush1.msra.mxu0 %v3191
      %4045 = vmatprep.subr.mxu0 0.0
      %4046 = vmatpush1.msra.mxu0 %v3192
      %4047 = vmatprep.subr.mxu0 0.0
      %4048 = vmatpush1.msra.mxu0 %v3193
      %4049 = vmatprep.subr.mxu0 0.0
      %4050 = vmatpush1.msra.mxu0 0.0
      %4051 = vmatprep.subr.mxu0 0.0
      %4052 = vmatpush1.msra.mxu0 0.0
      %4053 = vmatprep.subr.mxu0 0.0
      %4054 = vmatpush1.msra.mxu0 0.0
      %4055 = vmatprep.subr.mxu0 0.0
      %4056 = vmatpush1.msra.mxu0 0.0
      %4057 = vmatprep.subr.mxu0 0.0
      %4058 = vmatpush1.msra.mxu0 0.0
      %4059 = vmatprep.subr.mxu0 0.0
      %4060 = vmatpush1.msra.mxu0 0.0
      %4061 = vmatprep.subr.mxu0 0.0
      %4062 = vmatpush1.msra.mxu0 0.0
      %4063 = vmatprep.subr.mxu0 0.0
      %4064 = vmatpush1.msra.mxu0 0.0
      %4065 = vmatprep.subr.mxu0 0.0
      %4066 = vmatpush1.msra.mxu0 0.0
      %4067 = vmatprep.subr.mxu0 0.0
      %4068 = vmatpush1.msra.mxu0 0.0
      %4069 = vmatprep.subr.mxu0 0.0
      %4070 = vmatpush1.msra.mxu0 0.0
      %4071 = vmatprep.subr.mxu0 0.0
      %4072 = vmatpush1.msra.mxu0 0.0
      %4073 = vmatprep.subr.mxu0 0.0
      %4074 = vmatpush1.msra.mxu0 0.0
      %4075 = vmatprep.subr.mxu0 0.0
      %4076 = vmatpush1.msra.mxu0 0.0
      %4077 = vmatprep.subr.mxu0 0.0
      %4078 = vmatpush1.msra.mxu0 0.0
      %4079 = vmatprep.subr.mxu0 0.0
      %4080 = vmatpush1.msra.mxu0 0.0
      %4081 = vmatprep.subr.mxu0 0.0
      %4082 = vmatpush1.msra.mxu0 0.0
      %4083 = vmatprep.subr.mxu0 0.0
      %4084 = vmatpush1.msra.mxu0 0.0
      %4085 = vmatprep.subr.mxu0 0.0
      %4086 = vmatpush1.msra.mxu0 0.0
      %4087 = vmatprep.subr.mxu0 0.0
      %4088 = vmatpush1.msra.mxu0 0.0
      %4089 = vmatprep.subr.mxu0 0.0
      %4090 = vmatpush1.msra.mxu0 0.0
      %4091 = vmatprep.subr.mxu0 0.0
      %4092 = vmatpush1.msra.mxu0 0.0
      %4093 = vmatprep.subr.mxu0 0.0
      %4094 = vmatpush1.msra.mxu0 0.0
      %4095 = vmatprep.subr.mxu0 0.0
      %4096 = vmatpush1.msra.mxu0 0.0
      %4097 = vmatprep.subr.mxu0 0.0
      %4098 = vmatpush1.msra.mxu0 0.0
      %4099 = vmatprep.subr.mxu0 0.0
      %4100 = vmatpush1.msra.mxu0 0.0
      %4101 = vmatprep.subr.mxu0 0.0
      %4102 = vmatpush1.msra.mxu0 0.0
      %4103 = vmatprep.subr.mxu0 0.0
      %4104 = vmatpush1.msra.mxu0 0.0
      %4105 = vmatprep.mubr.f32.mxu0 0.0
      %4106 = vmatmul.mubr.f32.gmra.mrb[0].mxu0 %v4039
      %v4107 = vpop.f32.mrb[0].mxu0
      %v4108 = vadd.f32 %v4036, %v4107
      %v4109 = vpop.f32.mrb[0].mxu0
      %4110 = vdwg.mxu0
      %v4111 = vadd.f32 %v3159, %v4108
      %v4112 = vsel %vm2284, %v4111, 0.0
      %4113 = vadd.xlane.f32.xlu0 %v4112
      %v4114 = vpop.xlane.xlu0 %4113
      %v4115 = vmul.f32 %v4114, %v2288
      %v4116 = vsub.f32 %v4111, %v4115
      %v4117 = vmul.f32 %v4116, %v4116
      %v4118 = vsel %vm2284, %v4117, 0.0
      %4119 = vadd.xlane.f32.xlu0 %v4118
      %v4120 = vpop.xlane.xlu0 %4119
      %v4121 = vmul.f32 %v4120, %v2295
      %v4122 = vrsqrt.pop %v4121
      %v4123 = vmul.f32 %v4121, %v4122
      %vm4124 = vcmp.eq.f32.partialorder %v4121, inf
      %v4125 = vsel %vm4124, %v4121, %v4123
      %vm4126 = vcmp.eq.f32.partialorder %v4121, 0.0
      %v4127 = vand.u32 %v4121, 2147483648
      %v4128 = vsel %vm4126, %v4127, %v4125
      %v4129 = vadd.f32 %v4128, 1e-06
      %v4130 = vrcp.pop %v4129
      %v4131 = vmul.f32 %v4116, %v4130
      %v4132 = vld [vmem:[%s1075] sm:$0xff]
      %v4133 = vld [vmem:[%s1075 + $0x8] sm:$0xff]
      %v4134 = vld [vmem:[%s1075 + $0x10] sm:$0xff]
      %v4135 = vld [vmem:[%s1075 + $0x18] sm:$0xff]
      %v4136 = vld [vmem:[%s1078] sm:$0x1]
      %v4137 = vld [vmem:[%s1083] sm:$0xff]
      %v4138 = vld [vmem:[%s1083 + $0x8] sm:$0xff]
      %v4139 = vld [vmem:[%s1083 + $0x10] sm:$0xff]
      %v4140 = vld [vmem:[%s1083 + $0x18] sm:$0xff]
      %v4141 = vld [vmem:[%s1083 + $0x20] sm:$0xff]
      %v4142 = vld [vmem:[%s1083 + $0x28] sm:$0xff]
      %v4143 = vld [vmem:[%s1083 + $0x30] sm:$0xff]
      %v4144 = vld [vmem:[%s1083 + $0x38] sm:$0xff]
      %v4145 = vld [vmem:[%s1086] sm:$0x1]
      %v4147 = vlaneseq
      %v4148 = vshrl.u32 %v4147, 7
      %v4149 = vsub.s32 0, %v4148
      %v4150 = vrot.slane %v4136, %v4149
      %v4153 = vsel %vm2284, %v4131, 0
      %4155 = vmatprep.subr.mxu0 0.0
      %4156 = vmatpush1.msra.mxu0 %v4132
      %4157 = vmatprep.subr.mxu0 0.0
      %4158 = vmatpush1.msra.mxu0 %v4133
      %4159 = vmatprep.subr.mxu0 0.0
      %4160 = vmatpush1.msra.mxu0 %v4134
      %4161 = vmatprep.subr.mxu0 0.0
      %4162 = vmatpush1.msra.mxu0 %v4135
      %4163 = vmatprep.subr.mxu0 0.0
      %4164 = vmatpush1.msra.mxu0 0.0
      %4165 = vmatprep.subr.mxu0 0.0
      %4166 = vmatpush1.msra.mxu0 0.0
      %4167 = vmatprep.subr.mxu0 0.0
      %4168 = vmatpush1.msra.mxu0 0.0
      %4169 = vmatprep.subr.mxu0 0.0
      %4170 = vmatpush1.msra.mxu0 0.0
      %4171 = vmatprep.subr.mxu0 0.0
      %4172 = vmatpush1.msra.mxu0 0.0
      %4173 = vmatprep.subr.mxu0 0.0
      %4174 = vmatpush1.msra.mxu0 0.0
      %4175 = vmatprep.subr.mxu0 0.0
      %4176 = vmatpush1.msra.mxu0 0.0
      %4177 = vmatprep.subr.mxu0 0.0
      %4178 = vmatpush1.msra.mxu0 0.0
      %4179 = vmatprep.subr.mxu0 0.0
      %4180 = vmatpush1.msra.mxu0 0.0
      %4181 = vmatprep.subr.mxu0 0.0
      %4182 = vmatpush1.msra.mxu0 0.0
      %4183 = vmatprep.subr.mxu0 0.0
      %4184 = vmatpush1.msra.mxu0 0.0
      %4185 = vmatprep.subr.mxu0 0.0
      %4186 = vmatpush1.msra.mxu0 0.0
      %4187 = vmatprep.subr.mxu0 0.0
      %4188 = vmatpush1.msra.mxu0 0.0
      %4189 = vmatprep.subr.mxu0 0.0
      %4190 = vmatpush1.msra.mxu0 0.0
      %4191 = vmatprep.subr.mxu0 0.0
      %4192 = vmatpush1.msra.mxu0 0.0
      %4193 = vmatprep.subr.mxu0 0.0
      %4194 = vmatpush1.msra.mxu0 0.0
      %4195 = vmatprep.subr.mxu0 0.0
      %4196 = vmatpush1.msra.mxu0 0.0
      %4197 = vmatprep.subr.mxu0 0.0
      %4198 = vmatpush1.msra.mxu0 0.0
      %4199 = vmatprep.subr.mxu0 0.0
      %4200 = vmatpush1.msra.mxu0 0.0
      %4201 = vmatprep.subr.mxu0 0.0
      %4202 = vmatpush1.msra.mxu0 0.0
      %4203 = vmatprep.subr.mxu0 0.0
      %4204 = vmatpush1.msra.mxu0 0.0
      %4205 = vmatprep.subr.mxu0 0.0
      %4206 = vmatpush1.msra.mxu0 0.0
      %4207 = vmatprep.subr.mxu0 0.0
      %4208 = vmatpush1.msra.mxu0 0.0
      %4209 = vmatprep.subr.mxu0 0.0
      %4210 = vmatpush1.msra.mxu0 0.0
      %4211 = vmatprep.subr.mxu0 0.0
      %4212 = vmatpush1.msra.mxu0 0.0
      %4213 = vmatprep.subr.mxu0 0.0
      %4214 = vmatpush1.msra.mxu0 0.0
      %4215 = vmatprep.subr.mxu0 0.0
      %4216 = vmatpush1.msra.mxu0 0.0
      %4217 = vmatprep.subr.mxu0 0.0
      %4218 = vmatpush1.msra.mxu0 0.0
      %4219 = vmatprep.mubr.f32.mxu0 0.0
      %4220 = vmatmul.mubr.f32.gmra.mrb[0].mxu0 %v4153
      %v4221 = vpop.f32.mrb[0].mxu0
      %v4222 = vadd.f32 %v4150, %v4221
      %v4223 = vpop.f32.mrb[0].mxu0
      %4224 = vdwg.mxu0
      %v4225 = vmax.f32 %v4222, 0.0
      %v4227 = vlaneseq
      %v4228 = vshrl.u32 %v4227, 7
      %v4229 = vsub.s32 0, %v4228
      %v4230 = vrot.slane %v4145, %v4229
      %vm4232 = vcmask 523264
      %v4234 = vsel %vm4232, %v4225, 0
      %4236 = vmatprep.subr.mxu0 0.0
      %4237 = vmatpush1.msra.mxu0 %v4137
      %4238 = vmatprep.subr.mxu0 0.0
      %4239 = vmatpush1.msra.mxu0 %v4138
      %4240 = vmatprep.subr.mxu0 0.0
      %4241 = vmatpush1.msra.mxu0 %v4139
      %4242 = vmatprep.subr.mxu0 0.0
      %4243 = vmatpush1.msra.mxu0 %v4140
      %4244 = vmatprep.subr.mxu0 0.0
      %4245 = vmatpush1.msra.mxu0 %v4141
      %4246 = vmatprep.subr.mxu0 0.0
      %4247 = vmatpush1.msra.mxu0 %v4142
      %4248 = vmatprep.subr.mxu0 0.0
      %4249 = vmatpush1.msra.mxu0 %v4143
      %4250 = vmatprep.subr.mxu0 0.0
      %4251 = vmatpush1.msra.mxu0 %v4144
      %4252 = vmatprep.subr.mxu0 0.0
      %4253 = vmatpush1.msra.mxu0 0.0
      %4254 = vmatprep.subr.mxu0 0.0
      %4255 = vmatpush1.msra.mxu0 0.0
      %4256 = vmatprep.subr.mxu0 0.0
      %4257 = vmatpush1.msra.mxu0 0.0
      %4258 = vmatprep.subr.mxu0 0.0
      %4259 = vmatpush1.msra.mxu0 0.0
      %4260 = vmatprep.subr.mxu0 0.0
      %4261 = vmatpush1.msra.mxu0 0.0
      %4262 = vmatprep.subr.mxu0 0.0
      %4263 = vmatpush1.msra.mxu0 0.0
      %4264 = vmatprep.subr.mxu0 0.0
      %4265 = vmatpush1.msra.mxu0 0.0
      %4266 = vmatprep.subr.mxu0 0.0
      %4267 = vmatpush1.msra.mxu0 0.0
      %4268 = vmatprep.subr.mxu0 0.0
      %4269 = vmatpush1.msra.mxu0 0.0
      %4270 = vmatprep.subr.mxu0 0.0
      %4271 = vmatpush1.msra.mxu0 0.0
      %4272 = vmatprep.subr.mxu0 0.0
      %4273 = vmatpush1.msra.mxu0 0.0
      %4274 = vmatprep.subr.mxu0 0.0
      %4275 = vmatpush1.msra.mxu0 0.0
      %4276 = vmatprep.subr.mxu0 0.0
      %4277 = vmatpush1.msra.mxu0 0.0
      %4278 = vmatprep.subr.mxu0 0.0
      %4279 = vmatpush1.msra.mxu0 0.0
      %4280 = vmatprep.subr.mxu0 0.0
      %4281 = vmatpush1.msra.mxu0 0.0
      %4282 = vmatprep.subr.mxu0 0.0
      %4283 = vmatpush1.msra.mxu0 0.0
      %4284 = vmatprep.subr.mxu0 0.0
      %4285 = vmatpush1.msra.mxu0 0.0
      %4286 = vmatprep.subr.mxu0 0.0
      %4287 = vmatpush1.msra.mxu0 0.0
      %4288 = vmatprep.subr.mxu0 0.0
      %4289 = vmatpush1.msra.mxu0 0.0
      %4290 = vmatprep.subr.mxu0 0.0
      %4291 = vmatpush1.msra.mxu0 0.0
      %4292 = vmatprep.subr.mxu0 0.0
      %4293 = vmatpush1.msra.mxu0 0.0
      %4294 = vmatprep.subr.mxu0 0.0
      %4295 = vmatpush1.msra.mxu0 0.0
      %4296 = vmatprep.subr.mxu0 0.0
      %4297 = vmatpush1.msra.mxu0 0.0
      %4298 = vmatprep.subr.mxu0 0.0
      %4299 = vmatpush1.msra.mxu0 0.0
      %4300 = vmatprep.mubr.f32.mxu0 0.0
      %4301 = vmatmul.mubr.f32.gmra.mrb[0].mxu0 %v4234
      %v4302 = vpop.f32.mrb[0].mxu0
      %v4303 = vadd.f32 %v4230, %v4302
      %v4304 = vpop.f32.mrb[0].mxu0
      %4305 = vdwg.mxu0
      %v4306 = vadd.f32 %v4111, %v4303
      %4307 = vst.msk [vmem:[#allocation3] sm:$0xff] %vm2284, %v4306
      %p4308 = scmp.eq.s32.totalorder %s44, 1
      // Predicated region
      $region137: #{gridformer_forward.1} parent=131 // pred_check
        %p4309 = pneg %p4308
      $region138: #{gridformer_forward.1} parent=131 // pred_check_branch
        %4311 = sbr.rel (%p4309) target = $region140
      $region139: #{gridformer_forward.1} parent=131 // pred_region
        %v4312 = vld [vmem:[#allocation3] sm:$0xff]
        %v4313 = vsel %vm2284, %v4312, 0.0
        %4314 = vadd.xlane.f32.xlu0 %v4313
        %v4315 = vpop.xlane.xlu0 %4314
        %v4316 = vmul.f32 %v4315, %v2288
        %v4317 = vsub.f32 %v4312, %v4316
        %v4318 = vmul.f32 %v4317, %v4317
        %v4319 = vsel %vm2284, %v4318, 0.0
        %4320 = vadd.xlane.f32.xlu0 %v4319
        %v4321 = vpop.xlane.xlu0 %4320
        %v4322 = vmul.f32 %v4321, %v2295
        %v4323 = vrsqrt.pop %v4322
        %v4324 = vmul.f32 %v4322, %v4323
        %vm4325 = vcmp.eq.f32.partialorder %v4322, inf
        %v4326 = vsel %vm4325, %v4322, %v4324
        %vm4327 = vcmp.eq.f32.partialorder %v4322, 0.0
        %v4328 = vand.u32 %v4322, 2147483648
        %v4329 = vsel %vm4327, %v4328, %v4326
        %v4330 = vadd.f32 %v4329, 1e-06
        %v4331 = vrcp.pop %v4330
        %v4332 = vmul.f32 %v4317, %v4331
        %v4333 = vld [vmem:[%s26] sm:$0xff]
        %v4334 = vld [vmem:[%s26 + $0x8] sm:$0xff]
        %v4335 = vld [vmem:[%s26 + $0x10] sm:$0xff]
        %v4336 = vld [vmem:[%s26 + $0x18] sm:$0xff]
        %v4337 = vld [vmem:[%s27] sm:$0x1]
        %v4339 = vlaneseq
        %v4340 = vshrl.u32 %v4339, 7
        %v4341 = vsub.s32 0, %v4340
        %v4342 = vrot.slane %v4337, %v4341
        %v4345 = vsel %vm2284, %v4332, 0
        %4347 = vmatprep.subr.mxu0 0.0
        %4348 = vmatpush1.msra.mxu0 %v4333
        %4349 = vmatprep.subr.mxu0 0.0
        %4350 = vmatpush1.msra.mxu0 %v4334
        %4351 = vmatprep.subr.mxu0 0.0
        %4352 = vmatpush1.msra.mxu0 %v4335
        %4353 = vmatprep.subr.mxu0 0.0
        %4354 = vmatpush1.msra.mxu0 %v4336
        %4355 = vmatprep.subr.mxu0 0.0
        %4356 = vmatpush1.msra.mxu0 0.0
        %4357 = vmatprep.subr.mxu0 0.0
        %4358 = vmatpush1.msra.mxu0 0.0
        %4359 = vmatprep.subr.mxu0 0.0
        %4360 = vmatpush1.msra.mxu0 0.0
        %4361 = vmatprep.subr.mxu0 0.0
        %4362 = vmatpush1.msra.mxu0 0.0
        %4363 = vmatprep.subr.mxu0 0.0
        %4364 = vmatpush1.msra.mxu0 0.0
        %4365 = vmatprep.subr.mxu0 0.0
        %4366 = vmatpush1.msra.mxu0 0.0
        %4367 = vmatprep.subr.mxu0 0.0
        %4368 = vmatpush1.msra.mxu0 0.0
        %4369 = vmatprep.subr.mxu0 0.0
        %4370 = vmatpush1.msra.mxu0 0.0
        %4371 = vmatprep.subr.mxu0 0.0
        %4372 = vmatpush1.msra.mxu0 0.0
        %4373 = vmatprep.subr.mxu0 0.0
        %4374 = vmatpush1.msra.mxu0 0.0
        %4375 = vmatprep.subr.mxu0 0.0
        %4376 = vmatpush1.msra.mxu0 0.0
        %4377 = vmatprep.subr.mxu0 0.0
        %4378 = vmatpush1.msra.mxu0 0.0
        %4379 = vmatprep.subr.mxu0 0.0
        %4380 = vmatpush1.msra.mxu0 0.0
        %4381 = vmatprep.subr.mxu0 0.0
        %4382 = vmatpush1.msra.mxu0 0.0
        %4383 = vmatprep.subr.mxu0 0.0
        %4384 = vmatpush1.msra.mxu0 0.0
        %4385 = vmatprep.subr.mxu0 0.0
        %4386 = vmatpush1.msra.mxu0 0.0
        %4387 = vmatprep.subr.mxu0 0.0
        %4388 = vmatpush1.msra.mxu0 0.0
        %4389 = vmatprep.subr.mxu0 0.0
        %4390 = vmatpush1.msra.mxu0 0.0
        %4391 = vmatprep.subr.mxu0 0.0
        %4392 = vmatpush1.msra.mxu0 0.0
        %4393 = vmatprep.subr.mxu0 0.0
        %4394 = vmatpush1.msra.mxu0 0.0
        %4395 = vmatprep.subr.mxu0 0.0
        %4396 = vmatpush1.msra.mxu0 0.0
        %4397 = vmatprep.subr.mxu0 0.0
        %4398 = vmatpush1.msra.mxu0 0.0
        %4399 = vmatprep.subr.mxu0 0.0
        %4400 = vmatpush1.msra.mxu0 0.0
        %4401 = vmatprep.subr.mxu0 0.0
        %4402 = vmatpush1.msra.mxu0 0.0
        %4403 = vmatprep.subr.mxu0 0.0
        %4404 = vmatpush1.msra.mxu0 0.0
        %4405 = vmatprep.subr.mxu0 0.0
        %4406 = vmatpush1.msra.mxu0 0.0
        %4407 = vmatprep.subr.mxu0 0.0
        %4408 = vmatpush1.msra.mxu0 0.0
        %4409 = vmatprep.subr.mxu0 0.0
        %4410 = vmatpush1.msra.mxu0 0.0
        %4411 = vmatprep.mubr.f32.mxu0 0.0
        %4412 = vmatmul.mubr.f32.gmra.mrb[0].mxu0 %v4345
        %v4413 = vpop.f32.mrb[0].mxu0
        %v4414 = vadd.f32 %v4342, %v4413
        %v4415 = vpop.f32.mrb[0].mxu0
        %4416 = vdwg.mxu0
        %4417 = vst [vmem:[%s1090] sm:$0xff] %v4414
      $region140: #{gridformer_forward.1} parent=131 // pred_fallthru
        _
      %p4418 = scmp.lt.s32.totalorder %s43, 1
      %s4419 = scalar_select %p4418, %s43, 1
      %s4420 = smul.addr %s4419, 8
      %s4421 = scalar_lea.vmem %s28, %s4420
      // Predicated region
      $region141: #{gridformer_forward.1} parent=131 // pred_check
        %p4422 = pneg %p732
      $region142: #{gridformer_forward.1} parent=131 // pred_check_branch
        %4424 = sbr.rel (%p4422) target = $region144
      $region143: #{gridformer_forward.1} parent=131 // pred_region
        _
      $region144: #{gridformer_forward.1} parent=131 // pred_fallthru
        _
    $region132: #{gridformer_forward.1} parent=5 // pred_fallthru
      _
    %p4425 = scmp.le.s32.totalorder 2, %s34
    // Predicated region
    $region145: #{gridformer_forward.1} parent=5 // pred_check
      %p4426 = pneg %p4425
    $region146: #{gridformer_forward.1} parent=5 // pred_check_branch
      %4428 = sbr.rel (%p4426) target = $region148
    $region147: #{gridformer_forward.1} parent=5 // pred_region
      %s4429 = ssub.s32 %s34, 2
      // Predicated region
      $region149: #{gridformer_forward.1} parent=147 // pred_check
        %p4430 = pneg %p738
      $region150: #{gridformer_forward.1} parent=147 // pred_check_branch
        %4432 = sbr.rel (%p4430) target = $region152
      $region151: #{gridformer_forward.1} parent=147 // pred_region
        %p4433 = scmp.lt.s32.totalorder %s45, 1
        %s4434 = scalar_select %p4433, %s45, 1
        %s4435 = smul.addr %s4434, 8
        %s4436 = scalar_lea.vmem %s28, %s4435
      $region152: #{gridformer_forward.1} parent=147 // pred_fallthru
        _
    $region148: #{gridformer_forward.1} parent=5 // pred_fallthru
      _
  $region6: #{gridformer_forward.1} parent=0 // loop_footer
    %s38 = sadd.s32 1, %s34
  $region7: #{gridformer_forward.1} parent=0 // loop_footer_branch
    %33 = sbr.rel target = $region3
  $region8: #{gridformer_forward.1} parent=0 // loop_exit
    _

</llo_original>
